<compile_context>
chip_gen: v5e
topology: v5e:2x2
jax: 0.10.0
libtpu: 0.0.40
codegen_flags: <defaults>
</compile_context>

<pallas_src>
import functools

import jax
import jax.numpy as jnp
from jax.experimental import pallas as pl
from jax.experimental.pallas import tpu as pltpu


def _round_up(x, m):
    return -(-x // m) * m


# ----------------------------------------------------------------------------
# Fused kernel: all GRU layers + packed-seq masking + padding + linear head.
# ----------------------------------------------------------------------------
def _supervisor_kernel(x_ref, m_ref, wi_ref, wh_ref, bgi_ref, bhn_ref,
                       wl_ref, bl_ref, o_ref, gi_scr, *,
                       n_gru_layers, padding_value, unroll):
    # x_ref:   (S, Bt, GP)   time-major input (lanes E..GP zero-padded)
    # m_ref:   (S, Bt, 1)    1.0 where t < T[b], else 0.0
    # wi_ref:  (L, GP, 3GP)  input weights, gate blocks r|z|n at 0/GP/2GP
    # wh_ref:  (L, GP, 3GP)  hidden weights, same layout
    # bgi_ref: (L, 1, 3GP)   b_ih (+ b_hh for r,z) folded into input proj
    # bhn_ref: (L, 1, GP)    b_hh for the n gate (stays inside r * (...))
    # wl_ref:  (GP, GP)      linear weight^T, zero-padded
    # bl_ref:  (1, GP)       linear bias, zero-padded
    # o_ref:   (S, Bt, GP)   output; also used as the inter-layer slab
    # gi_scr:  (S, Bt, 3GP)  VMEM scratch: hoisted input projections
    S, Bt, GP = x_ref.shape
    pad = jnp.float32(padding_value)

    for layer in range(n_gru_layers):
        wi = wi_ref[layer]                       # (GP, 3GP)
        wh = wh_ref[layer]                       # (GP, 3GP)
        bgi = bgi_ref[layer]                     # (1, 3GP)
        bhn = bhn_ref[layer]                     # (1, GP)
        last = layer == n_gru_layers - 1
        src_ref = x_ref if layer == 0 else o_ref  # o_ref doubles as the slab

        # --- Hoisted time-parallel input projection: ONE big MXU matmul ----
        src = src_ref[...].reshape(S * Bt, GP)
        gi_all = jnp.dot(src, wi, preferred_element_type=jnp.float32) + bgi
        gi_scr[...] = gi_all.reshape(S, Bt, 3 * GP)

        # --- Serial recurrence: per step only h @ wh + gate math ------------
        def step(t, h):
            gi_t = gi_scr[t]                                         # (Bt,3GP)
            gh = jnp.dot(h, wh, preferred_element_type=jnp.float32)  # (Bt,3GP)
            # Gate slices are vreg-aligned (128-lane pitch).
            r = jax.nn.sigmoid(gi_t[:, 0:GP] + gh[:, 0:GP])
            z = jax.nn.sigmoid(gi_t[:, GP:2 * GP] + gh[:, GP:2 * GP])
            n = jnp.tanh(gi_t[:, 2 * GP:] + r * (gh[:, 2 * GP:] + bhn))
            h_new = n + z * (h - n)                   # == (1-z)*n + z*h
            valid = m_ref[t] != 0.0                   # (Bt, 1) bool
            h_next = jnp.where(valid, h_new, h)       # freeze past T[b]
            if last:
                # pad_packed_sequence(padding_value): padding goes into the
                # slab fed to the head, NOT into the carried hidden state.
                o_ref[t] = jnp.where(valid, h_new, pad)
            else:
                o_ref[t] = h_next
            return h_next

        h0 = jnp.zeros((Bt, GP), jnp.float32)
        jax.lax.fori_loop(0, S, step, h0, unroll=unroll)

    # --- Fused pad + Linear + Sigmoid head: ONE matmul over the whole slab --
    acts = o_ref[...].reshape(S * Bt, GP)
    logits = jnp.dot(acts, wl_ref[...],
                     preferred_element_type=jnp.float32) + bl_ref[...]
    o_ref[...] = jax.nn.sigmoid(logits).reshape(S, Bt, GP).astype(o_ref.dtype)


# ----------------------------------------------------------------------------
# Wrapper
# ----------------------------------------------------------------------------
def supervisor_forward(H, T, packed, padding_value, *, batch_tile=None):
    """H: (B, S, E), T: (B,) -> H_hat: (B, S, E)."""
    wi, wh, bgi, bhn, wl, bl = (packed["wi"], packed["wh"], packed["bgi"],
                                packed["bhn"], packed["wl"], packed["bl"])
    GP = packed["gp"]
    B, S, E = H.shape
    L = wi.shape[0]

    # Pad batch to a sublane multiple and E to the 128-lane gate pitch so all
    # tiles are (8,128)-aligned; padded rows get T=0 and are dropped after.
    Bp = _round_up(B, 8)
    x = jnp.transpose(H, (1, 0, 2)).astype(jnp.float32)          # (S, B, E)
    x = jnp.pad(x, ((0, 0), (0, Bp - B), (0, GP - E)))           # (S, Bp, GP)
    t_pad = jnp.pad(T.astype(jnp.int32), (0, Bp - B))
    mask = (jnp.arange(S)[:, None, None]
            < t_pad[None, :, None]).astype(jnp.float32)          # (S, Bp, 1)

    # Batch tile: independent recurrences -> "parallel" grid axis (v7x 2-TC).
    if batch_tile is None:
        batch_tile = Bp
        for cand in range(min(Bp, 64), 7, -8):
            if Bp % cand == 0:
                batch_tile = cand
                break
    bt = batch_tile
    assert Bp % bt == 0 and bt % 8 == 0
    nb = Bp // bt

    # VMEM budget (per-tile buffers + weights + scratch), with headroom for
    # the pipeline's double-buffering.
    vmem_bytes = 4 * (2 * S * bt * GP          # x tile + out/slab tile
                      + S * bt                 # mask tile
                      + S * bt * 3 * GP        # gi scratch
                      + 2 * L * GP * 3 * GP    # wi + wh
                      + L * 4 * GP             # biases
                      + GP * GP + GP)          # head weight + bias
    vmem_limit = int(min(max(3 * vmem_bytes, 8 << 20), 100 << 20))

    kern = functools.partial(
        _supervisor_kernel,
        n_gru_layers=L,
        padding_value=float(padding_value),
        unroll=(S if S <= 16 else 8))          # don't fully unroll long seqs

    out = pl.pallas_call(
        kern,
        grid=(nb,),
        in_specs=[
            pl.BlockSpec((S, bt, GP), lambda i: (0, i, 0)),        # x
            pl.BlockSpec((S, bt, 1), lambda i: (0, i, 0)),         # mask
            pl.BlockSpec((L, GP, 3 * GP), lambda i: (0, 0, 0)),    # wi
            pl.BlockSpec((L, GP, 3 * GP), lambda i: (0, 0, 0)),    # wh
            pl.BlockSpec((L, 1, 3 * GP), lambda i: (0, 0, 0)),     # bgi
            pl.BlockSpec((L, 1, GP), lambda i: (0, 0, 0)),         # bhn
            pl.BlockSpec((GP, GP), lambda i: (0, 0)),              # wl
            pl.BlockSpec((1, GP), lambda i: (0, 0)),               # bl
        ],
        out_specs=pl.BlockSpec((S, bt, GP), lambda i: (0, i, 0)),
        out_shape=jax.ShapeDtypeStruct((S, Bp, GP), jnp.float32),
        scratch_shapes=[pltpu.VMEM((S, bt, 3 * GP), jnp.float32)],
        compiler_params=pltpu.CompilerParams(
            dimension_semantics=("parallel",),
            vmem_limit_bytes=vmem_limit),
    )(x, mask, wi, wh, bgi, bhn, wl, bl)

    out = out[:, :B, :E]                       # drop batch / lane padding
    return jnp.transpose(out, (1, 0, 2))       # (B, S, E)


# ----------------------------------------------------------------------------
# Parameter construction (deterministic, mirrors the module's __init__).
# ----------------------------------------------------------------------------
def init_params(key, hidden_dim, num_layers):
    """Torch-layout parameters (weight_ih/weight_hh (3E,E), biases (3E,))."""
    E = hidden_dim
    L = num_layers - 1

    def xavier(k, shape_torch):
        fan_out, fan_in = shape_torch                 # torch (out, in) layout
        bound = (6.0 / (fan_in + fan_out)) ** 0.5
        return jax.random.uniform(k, shape_torch, jnp.float32, -bound, bound)

    layers = []
    for _ in range(L):
        key, k1, k2 = jax.random.split(key, 3)
        layers.append(dict(
            w_ih=xavier(k1, (3 * E, E)),              # gates r|z|n
            w_hh=xavier(k2, (3 * E, E)),
            b_ih=jnp.ones((3 * E,), jnp.float32),     # fill_(1)
            b_hh=jnp.zeros((3 * E,), jnp.float32)))   # fill_(0)
    key, kw = jax.random.split(key)
    lin_w = xavier(kw, (E, E))
    lin_b = jnp.zeros((E,), jnp.float32)
    return layers, lin_w, lin_b


def pack_params(layers, lin_w, lin_b, hidden_dim):
    """Re-pack torch-layout params into the lane-aligned kernel layout."""
    E = hidden_dim
    GP = _round_up(E, 128)                            # 128-lane gate pitch
    L = len(layers)

    wi = jnp.zeros((L, GP, 3 * GP), jnp.float32)
    wh = jnp.zeros((L, GP, 3 * GP), jnp.float32)
    bgi = jnp.zeros((L, 1, 3 * GP), jnp.float32)
    bhn = jnp.zeros((L, 1, GP), jnp.float32)
    for l, p in enumerate(layers):
        w_ih_t = p["w_ih"].T                          # (E, 3E)
        w_hh_t = p["w_hh"].T
        for g in range(3):
            wi = wi.at[l, :E, g * GP:g * GP + E].set(w_ih_t[:, g * E:(g + 1) * E])
            wh = wh.at[l, :E, g * GP:g * GP + E].set(w_hh_t[:, g * E:(g + 1) * E])
            # Fold b_ih (+ b_hh for r,z) into the hoisted input projection;
            # b_hh for n stays separate (it sits inside r * (...)).
            b = p["b_ih"][g * E:(g + 1) * E]
            if g < 2:
                b = b + p["b_hh"][g * E:(g + 1) * E]
            bgi = bgi.at[l, 0, g * GP:g * GP + E].set(b)
        bhn = bhn.at[l, 0, :E].set(p["b_hh"][2 * E:3 * E])

    wl = jnp.zeros((GP, GP), jnp.float32).at[:E, :E].set(lin_w.T)
    bl = jnp.zeros((1, GP), jnp.float32).at[0, :E].set(lin_b)
    return dict(wi=wi, wh=wh, bgi=bgi, bhn=bhn, wl=wl, bl=bl, gp=GP)


# ----------------------------------------------------------------------------
# Pure-JAX reference (independent of the kernel packing) for correctness.
# ----------------------------------------------------------------------------
def supervisor_forward_ref(H, T, layers, lin_w, lin_b, padding_value):
    B, S, E = H.shape
    hi = jax.lax.Precision.HIGHEST
    x = jnp.transpose(H, (1, 0, 2)).astype(jnp.float32)
    for p in layers:
        w_ih, w_hh, b_ih, b_hh = p["w_ih"], p["w_hh"], p["b_ih"], p["b_hh"]
        h = jnp.zeros((B, E), jnp.float32)
        ys = []
        for t in range(S):
            gi = jnp.dot(x[t], w_ih.T, precision=hi) + b_ih
            gh = jnp.dot(h, w_hh.T, precision=hi) + b_hh
            r = jax.nn.sigmoid(gi[:, :E] + gh[:, :E])
            z = jax.nn.sigmoid(gi[:, E:2 * E] + gh[:, E:2 * E])
            n = jnp.tanh(gi[:, 2 * E:] + r * gh[:, 2 * E:])
            h_new = (1.0 - z) * n + z * h
            valid = (t < T).reshape(B, 1)
            h = jnp.where(valid, h_new, h)
            ys.append(h)
        x = jnp.stack(ys)
    valid = jnp.arange(S)[:, None, None] < T.reshape(1, B, 1)
    x = jnp.where(valid, x, jnp.float32(padding_value))
    out = jax.nn.sigmoid(jnp.dot(x, lin_w.T, precision=hi) + lin_b)
    return jnp.transpose(out, (1, 0, 2))


if __name__ == "__main__":
    # hidden_dim=32, num_layers=3 (=> 2 GRU layers), max_seq_len=8,
    # padding_value=-1.0; batch B=4.
    hidden_dim = 32
    num_layers = 3
    max_seq_len = 8
    padding_value = -1.0
    B = 4

    key = jax.random.PRNGKey(0)
    key, kp, kh = jax.random.split(key, 3)
    layers, lin_w, lin_b = init_params(kp, hidden_dim, num_layers)
    packed = pack_params(layers, lin_w, lin_b, hidden_dim)

    H = jax.random.normal(kh, (B, max_seq_len, hidden_dim), jnp.float32)
    T = jnp.array([8, 5, 3, 8], jnp.int32)        # per-sequence valid lengths

    H_hat = supervisor_forward(H, T, packed, padding_value)
    H_hat = jax.block_until_ready(H_hat)

    H_ref = supervisor_forward_ref(H, T, layers, lin_w, lin_b, padding_value)
    assert H_hat.shape == (B, max_seq_len, hidden_dim)
    err = float(jnp.max(jnp.abs(H_hat - H_ref)))
    assert err < 1e-4, err

    print("KERNEL_OK")
</pallas_src>

<mosaic_0001>
module attributes {stable_mosaic.version = 11 : i64} {
  func.func @_supervisor_kernel(%arg0: i32, %arg1: memref<8x8x128xf32, #tpu.memory_space<vmem>>, %arg2: memref<8x8x1xf32, #tpu.memory_space<vmem>>, %arg3: memref<2x128x384xf32, #tpu.memory_space<vmem>>, %arg4: memref<2x128x384xf32, #tpu.memory_space<vmem>>, %arg5: memref<2x1x384xf32, #tpu.memory_space<vmem>>, %arg6: memref<2x1x128xf32, #tpu.memory_space<vmem>>, %arg7: memref<128x128xf32, #tpu.memory_space<vmem>>, %arg8: memref<1x128xf32, #tpu.memory_space<vmem>>, %arg9: memref<8x8x128xf32, #tpu.memory_space<vmem>>, %arg10: memref<8x8x384xf32, #tpu.memory_space<vmem>>) attributes {dimension_semantics = [#tpu.dimension_semantics<parallel>], iteration_bounds = array<i64: 1>, scalar_prefetch = 0 : i64, scratch_operands = 1 : i64, tpu.core_type = #tpu.core_type<tc>, window_params = [{transform_indices = @transform_0, window_bounds = array<i64: 8, 8, 128>}, {transform_indices = @transform_1, window_bounds = array<i64: 8, 8, 1>}, {pipeline_mode = #tpu.pipeline_mode<synchronous>, transform_indices = @transform_2, window_bounds = array<i64: 2, 128, 384>}, {pipeline_mode = #tpu.pipeline_mode<synchronous>, transform_indices = @transform_3, window_bounds = array<i64: 2, 128, 384>}, {pipeline_mode = #tpu.pipeline_mode<synchronous>, transform_indices = @transform_4, window_bounds = array<i64: 2, 1, 384>}, {pipeline_mode = #tpu.pipeline_mode<synchronous>, transform_indices = @transform_5, window_bounds = array<i64: 2, 1, 128>}, {pipeline_mode = #tpu.pipeline_mode<synchronous>, transform_indices = @transform_6, window_bounds = array<i64: 128, 128>}, {pipeline_mode = #tpu.pipeline_mode<synchronous>, transform_indices = @transform_7, window_bounds = array<i64: 1, 128>}, {transform_indices = @transform_8, window_bounds = array<i64: 8, 8, 128>}]} {
    %c0 = arith.constant 0 : index
    %c0_0 = arith.constant 0 : index
    %c0_1 = arith.constant 0 : index
    %0 = vector.load %arg3[%c0, %c0_0, %c0_1] : memref<2x128x384xf32, #tpu.memory_space<vmem>>, vector<1x128x384xf32>
    %1 = vector.shape_cast %0 : vector<1x128x384xf32> to vector<128x384xf32>
    %c0_2 = arith.constant 0 : index
    %c0_3 = arith.constant 0 : index
    %c0_4 = arith.constant 0 : index
    %2 = vector.load %arg4[%c0_2, %c0_3, %c0_4] : memref<2x128x384xf32, #tpu.memory_space<vmem>>, vector<1x128x384xf32>
    %3 = vector.shape_cast %2 : vector<1x128x384xf32> to vector<128x384xf32>
    %c0_5 = arith.constant 0 : index
    %c0_6 = arith.constant 0 : index
    %c0_7 = arith.constant 0 : index
    %4 = vector.load %arg5[%c0_5, %c0_6, %c0_7] : memref<2x1x384xf32, #tpu.memory_space<vmem>>, vector<1x1x384xf32>
    %5 = vector.shape_cast %4 : vector<1x1x384xf32> to vector<1x384xf32>
    %c0_8 = arith.constant 0 : index
    %c0_9 = arith.constant 0 : index
    %c0_10 = arith.constant 0 : index
    %6 = vector.load %arg6[%c0_8, %c0_9, %c0_10] : memref<2x1x128xf32, #tpu.memory_space<vmem>>, vector<1x1x128xf32>
    %7 = vector.shape_cast %6 : vector<1x1x128xf32> to vector<1x128xf32>
    %c0_11 = arith.constant 0 : index
    %c0_12 = arith.constant 0 : index
    %c0_13 = arith.constant 0 : index
    %8 = vector.load %arg1[%c0_11, %c0_12, %c0_13] : memref<8x8x128xf32, #tpu.memory_space<vmem>>, vector<8x8x128xf32>
    %9 = vector.shape_cast %8 : vector<8x8x128xf32> to vector<64x128xf32>
    %cst = arith.constant dense<0.000000e+00> : vector<64x384xf32>
    %10 = tpu.matmul %9, %1, %cst {dimension_numbers = #tpu.dot_dimension_numbers<[1], [0], [0], [1], [0, 0, 1, 1], [], []>} : vector<64x128xf32>, vector<128x384xf32>, vector<64x384xf32> -> vector<64x384xf32>
    %11 = vector.broadcast %5 : vector<1x384xf32> to vector<64x384xf32>
    %12 = arith.addf %10, %11 : vector<64x384xf32>
    %13 = vector.shape_cast %12 : vector<64x384xf32> to vector<8x8x384xf32>
    %c0_14 = arith.constant 0 : index
    %c0_15 = arith.constant 0 : index
    %c0_16 = arith.constant 0 : index
    %14 = vector.load %arg10[%c0_14, %c0_15, %c0_16] : memref<8x8x384xf32, #tpu.memory_space<vmem>>, vector<8x8x384xf32>
    tpu.vector_store %arg10[%c0_14, %c0_15, %c0_16], %13 {strides = array<i32>} : memref<8x8x384xf32, #tpu.memory_space<vmem>>, vector<8x8x384xf32>,
    %cst_17 = arith.constant 0.000000e+00 : f32
    %15 = vector.broadcast %cst_17 : f32 to vector<8x128xf32>
    %c0_i32 = arith.constant 0 : i32
    %16 = arith.index_cast %c0_i32 : i32 to index
    %c0_18 = arith.constant 0 : index
    %c0_19 = arith.constant 0 : index
    %17 = vector.load %arg10[%16, %c0_18, %c0_19] : memref<8x8x384xf32, #tpu.memory_space<vmem>>, vector<1x8x384xf32>
    %18 = vector.shape_cast %17 : vector<1x8x384xf32> to vector<8x384xf32>
    %cst_20 = arith.constant dense<0.000000e+00> : vector<8x384xf32>
    %19 = tpu.matmul %15, %3, %cst_20 {dimension_numbers = #tpu.dot_dimension_numbers<[1], [0], [0], [1], [0, 0, 1, 1], [], []>} : vector<8x128xf32>, vector<128x384xf32>, vector<8x384xf32> -> vector<8x384xf32>
    %20 = vector.extract_strided_slice %18 {offsets = [0, 0], sizes = [8, 128], strides = [1, 1]} : vector<8x384xf32> to vector<8x128xf32>
    %21 = vector.extract_strided_slice %19 {offsets = [0, 0], sizes = [8, 128], strides = [1, 1]} : vector<8x384xf32> to vector<8x128xf32>
    %22 = arith.addf %20, %21 : vector<8x128xf32>
    %23 = arith.negf %22 : vector<8x128xf32>
    %24 = math.exp %23 : vector<8x128xf32>
    %cst_21 = arith.constant 1.000000e+00 : f32
    %25 = vector.broadcast %cst_21 : f32 to vector<8x128xf32>
    %26 = arith.addf %25, %24 : vector<8x128xf32>
    %27 = arith.divf %25, %26 : vector<8x128xf32>
    %28 = vector.extract_strided_slice %18 {offsets = [0, 128], sizes = [8, 128], strides = [1, 1]} : vector<8x384xf32> to vector<8x128xf32>
    %29 = vector.extract_strided_slice %19 {offsets = [0, 128], sizes = [8, 128], strides = [1, 1]} : vector<8x384xf32> to vector<8x128xf32>
    %30 = arith.addf %28, %29 : vector<8x128xf32>
    %31 = arith.negf %30 : vector<8x128xf32>
    %32 = math.exp %31 : vector<8x128xf32>
    %cst_22 = arith.constant 1.000000e+00 : f32
    %33 = vector.broadcast %cst_22 : f32 to vector<8x128xf32>
    %34 = arith.addf %33, %32 : vector<8x128xf32>
    %35 = arith.divf %33, %34 : vector<8x128xf32>
    %36 = vector.extract_strided_slice %18 {offsets = [0, 256], sizes = [8, 128], strides = [1, 1]} : vector<8x384xf32> to vector<8x128xf32>
    %37 = vector.extract_strided_slice %19 {offsets = [0, 256], sizes = [8, 128], strides = [1, 1]} : vector<8x384xf32> to vector<8x128xf32>
    %38 = vector.broadcast %7 : vector<1x128xf32> to vector<8x128xf32>
    %39 = arith.addf %37, %38 : vector<8x128xf32>
    %40 = arith.mulf %27, %39 : vector<8x128xf32>
    %41 = arith.addf %36, %40 : vector<8x128xf32>
    %42 = math.tanh %41 : vector<8x128xf32>
    %43 = arith.subf %15, %42 : vector<8x128xf32>
    %44 = arith.mulf %35, %43 : vector<8x128xf32>
    %45 = arith.addf %42, %44 : vector<8x128xf32>
    %46 = arith.index_cast %c0_i32 : i32 to index
    %c0_23 = arith.constant 0 : index
    %c0_24 = arith.constant 0 : index
    %47 = vector.load %arg2[%46, %c0_23, %c0_24] : memref<8x8x1xf32, #tpu.memory_space<vmem>>, vector<1x8x1xf32>
    %48 = vector.shape_cast %47 : vector<1x8x1xf32> to vector<8x1xf32>
    %cst_25 = arith.constant 0.000000e+00 : f32
    %49 = vector.broadcast %cst_25 : f32 to vector<8x1xf32>
    %50 = arith.cmpf one, %48, %49 : vector<8x1xf32>
    %51 = vector.shape_cast %50 : vector<8x1xi1> to vector<8x1xi1>
    %52 = vector.broadcast %51 : vector<8x1xi1> to vector<8x128xi1>
    %53 = arith.select %52, %45, %15 : vector<8x128xi1>, vector<8x128xf32>
    %54 = arith.index_cast %c0_i32 : i32 to index
    %c0_26 = arith.constant 0 : index
    %c0_27 = arith.constant 0 : index
    %55 = vector.load %arg9[%54, %c0_26, %c0_27] : memref<8x8x128xf32, #tpu.memory_space<vmem>>, vector<1x8x128xf32>
    %56 = vector.shape_cast %55 : vector<1x8x128xf32> to vector<8x128xf32>
    %57 = vector.shape_cast %53 : vector<8x128xf32> to vector<1x8x128xf32>
    tpu.vector_store %arg9[%54, %c0_26, %c0_27], %57 {strides = array<i32>} : memref<8x8x128xf32, #tpu.memory_space<vmem>>, vector<1x8x128xf32>,
    %c1_i32 = arith.constant 1 : i32
    %58 = arith.index_cast %c1_i32 : i32 to index
    %c0_28 = arith.constant 0 : index
    %c0_29 = arith.constant 0 : index
    %59 = vector.load %arg10[%58, %c0_28, %c0_29] : memref<8x8x384xf32, #tpu.memory_space<vmem>>, vector<1x8x384xf32>
    %60 = vector.shape_cast %59 : vector<1x8x384xf32> to vector<8x384xf32>
    %cst_30 = arith.constant dense<0.000000e+00> : vector<8x384xf32>
    %61 = tpu.matmul %53, %3, %cst_30 {dimension_numbers = #tpu.dot_dimension_numbers<[1], [0], [0], [1], [0, 0, 1, 1], [], []>} : vector<8x128xf32>, vector<128x384xf32>, vector<8x384xf32> -> vector<8x384xf32>
    %62 = vector.extract_strided_slice %60 {offsets = [0, 0], sizes = [8, 128], strides = [1, 1]} : vector<8x384xf32> to vector<8x128xf32>
    %63 = vector.extract_strided_slice %61 {offsets = [0, 0], sizes = [8, 128], strides = [1, 1]} : vector<8x384xf32> to vector<8x128xf32>
    %64 = arith.addf %62, %63 : vector<8x128xf32>
    %65 = arith.negf %64 : vector<8x128xf32>
    %66 = math.exp %65 : vector<8x128xf32>
    %cst_31 = arith.constant 1.000000e+00 : f32
    %67 = vector.broadcast %cst_31 : f32 to vector<8x128xf32>
    %68 = arith.addf %67, %66 : vector<8x128xf32>
    %69 = arith.divf %67, %68 : vector<8x128xf32>
    %70 = vector.extract_strided_slice %60 {offsets = [0, 128], sizes = [8, 128], strides = [1, 1]} : vector<8x384xf32> to vector<8x128xf32>
    %71 = vector.extract_strided_slice %61 {offsets = [0, 128], sizes = [8, 128], strides = [1, 1]} : vector<8x384xf32> to vector<8x128xf32>
    %72 = arith.addf %70, %71 : vector<8x128xf32>
    %73 = arith.negf %72 : vector<8x128xf32>
    %74 = math.exp %73 : vector<8x128xf32>
    %cst_32 = arith.constant 1.000000e+00 : f32
    %75 = vector.broadcast %cst_32 : f32 to vector<8x128xf32>
    %76 = arith.addf %75, %74 : vector<8x128xf32>
    %77 = arith.divf %75, %76 : vector<8x128xf32>
    %78 = vector.extract_strided_slice %60 {offsets = [0, 256], sizes = [8, 128], strides = [1, 1]} : vector<8x384xf32> to vector<8x128xf32>
    %79 = vector.extract_strided_slice %61 {offsets = [0, 256], sizes = [8, 128], strides = [1, 1]} : vector<8x384xf32> to vector<8x128xf32>
    %80 = vector.broadcast %7 : vector<1x128xf32> to vector<8x128xf32>
    %81 = arith.addf %79, %80 : vector<8x128xf32>
    %82 = arith.mulf %69, %81 : vector<8x128xf32>
    %83 = arith.addf %78, %82 : vector<8x128xf32>
    %84 = math.tanh %83 : vector<8x128xf32>
    %85 = arith.subf %53, %84 : vector<8x128xf32>
    %86 = arith.mulf %77, %85 : vector<8x128xf32>
    %87 = arith.addf %84, %86 : vector<8x128xf32>
    %88 = arith.index_cast %c1_i32 : i32 to index
    %c0_33 = arith.constant 0 : index
    %c0_34 = arith.constant 0 : index
    %89 = vector.load %arg2[%88, %c0_33, %c0_34] : memref<8x8x1xf32, #tpu.memory_space<vmem>>, vector<1x8x1xf32>
    %90 = vector.shape_cast %89 : vector<1x8x1xf32> to vector<8x1xf32>
    %cst_35 = arith.constant 0.000000e+00 : f32
    %91 = vector.broadcast %cst_35 : f32 to vector<8x1xf32>
    %92 = arith.cmpf one, %90, %91 : vector<8x1xf32>
    %93 = vector.shape_cast %92 : vector<8x1xi1> to vector<8x1xi1>
    %94 = vector.broadcast %93 : vector<8x1xi1> to vector<8x128xi1>
    %95 = arith.select %94, %87, %53 : vector<8x128xi1>, vector<8x128xf32>
    %96 = arith.index_cast %c1_i32 : i32 to index
    %c0_36 = arith.constant 0 : index
    %c0_37 = arith.constant 0 : index
    %97 = vector.load %arg9[%96, %c0_36, %c0_37] : memref<8x8x128xf32, #tpu.memory_space<vmem>>, vector<1x8x128xf32>
    %98 = vector.shape_cast %97 : vector<1x8x128xf32> to vector<8x128xf32>
    %99 = vector.shape_cast %95 : vector<8x128xf32> to vector<1x8x128xf32>
    tpu.vector_store %arg9[%96, %c0_36, %c0_37], %99 {strides = array<i32>} : memref<8x8x128xf32, #tpu.memory_space<vmem>>, vector<1x8x128xf32>,
    %c2_i32 = arith.constant 2 : i32
    %100 = arith.index_cast %c2_i32 : i32 to index
    %c0_38 = arith.constant 0 : index
    %c0_39 = arith.constant 0 : index
    %101 = vector.load %arg10[%100, %c0_38, %c0_39] : memref<8x8x384xf32, #tpu.memory_space<vmem>>, vector<1x8x384xf32>
    %102 = vector.shape_cast %101 : vector<1x8x384xf32> to vector<8x384xf32>
    %cst_40 = arith.constant dense<0.000000e+00> : vector<8x384xf32>
    %103 = tpu.matmul %95, %3, %cst_40 {dimension_numbers = #tpu.dot_dimension_numbers<[1], [0], [0], [1], [0, 0, 1, 1], [], []>} : vector<8x128xf32>, vector<128x384xf32>, vector<8x384xf32> -> vector<8x384xf32>
    %104 = vector.extract_strided_slice %102 {offsets = [0, 0], sizes = [8, 128], strides = [1, 1]} : vector<8x384xf32> to vector<8x128xf32>
    %105 = vector.extract_strided_slice %103 {offsets = [0, 0], sizes = [8, 128], strides = [1, 1]} : vector<8x384xf32> to vector<8x128xf32>
    %106 = arith.addf %104, %105 : vector<8x128xf32>
    %107 = arith.negf %106 : vector<8x128xf32>
    %108 = math.exp %107 : vector<8x128xf32>
    %cst_41 = arith.constant 1.000000e+00 : f32
    %109 = vector.broadcast %cst_41 : f32 to vector<8x128xf32>
    %110 = arith.addf %109, %108 : vector<8x128xf32>
    %111 = arith.divf %109, %110 : vector<8x128xf32>
    %112 = vector.extract_strided_slice %102 {offsets = [0, 128], sizes = [8, 128], strides = [1, 1]} : vector<8x384xf32> to vector<8x128xf32>
    %113 = vector.extract_strided_slice %103 {offsets = [0, 128], sizes = [8, 128], strides = [1, 1]} : vector<8x384xf32> to vector<8x128xf32>
    %114 = arith.addf %112, %113 : vector<8x128xf32>
    %115 = arith.negf %114 : vector<8x128xf32>
    %116 = math.exp %115 : vector<8x128xf32>
    %cst_42 = arith.constant 1.000000e+00 : f32
    %117 = vector.broadcast %cst_42 : f32 to vector<8x128xf32>
    %118 = arith.addf %117, %116 : vector<8x128xf32>
    %119 = arith.divf %117, %118 : vector<8x128xf32>
    %120 = vector.extract_strided_slice %102 {offsets = [0, 256], sizes = [8, 128], strides = [1, 1]} : vector<8x384xf32> to vector<8x128xf32>
    %121 = vector.extract_strided_slice %103 {offsets = [0, 256], sizes = [8, 128], strides = [1, 1]} : vector<8x384xf32> to vector<8x128xf32>
    %122 = vector.broadcast %7 : vector<1x128xf32> to vector<8x128xf32>
    %123 = arith.addf %121, %122 : vector<8x128xf32>
    %124 = arith.mulf %111, %123 : vector<8x128xf32>
    %125 = arith.addf %120, %124 : vector<8x128xf32>
    %126 = math.tanh %125 : vector<8x128xf32>
    %127 = arith.subf %95, %126 : vector<8x128xf32>
    %128 = arith.mulf %119, %127 : vector<8x128xf32>
    %129 = arith.addf %126, %128 : vector<8x128xf32>
    %130 = arith.index_cast %c2_i32 : i32 to index
    %c0_43 = arith.constant 0 : index
    %c0_44 = arith.constant 0 : index
    %131 = vector.load %arg2[%130, %c0_43, %c0_44] : memref<8x8x1xf32, #tpu.memory_space<vmem>>, vector<1x8x1xf32>
    %132 = vector.shape_cast %131 : vector<1x8x1xf32> to vector<8x1xf32>
    %cst_45 = arith.constant 0.000000e+00 : f32
    %133 = vector.broadcast %cst_45 : f32 to vector<8x1xf32>
    %134 = arith.cmpf one, %132, %133 : vector<8x1xf32>
    %135 = vector.shape_cast %134 : vector<8x1xi1> to vector<8x1xi1>
    %136 = vector.broadcast %135 : vector<8x1xi1> to vector<8x128xi1>
    %137 = arith.select %136, %129, %95 : vector<8x128xi1>, vector<8x128xf32>
    %138 = arith.index_cast %c2_i32 : i32 to index
    %c0_46 = arith.constant 0 : index
    %c0_47 = arith.constant 0 : index
    %139 = vector.load %arg9[%138, %c0_46, %c0_47] : memref<8x8x128xf32, #tpu.memory_space<vmem>>, vector<1x8x128xf32>
    %140 = vector.shape_cast %139 : vector<1x8x128xf32> to vector<8x128xf32>
    %141 = vector.shape_cast %137 : vector<8x128xf32> to vector<1x8x128xf32>
    tpu.vector_store %arg9[%138, %c0_46, %c0_47], %141 {strides = array<i32>} : memref<8x8x128xf32, #tpu.memory_space<vmem>>, vector<1x8x128xf32>,
    %c3_i32 = arith.constant 3 : i32
    %142 = arith.index_cast %c3_i32 : i32 to index
    %c0_48 = arith.constant 0 : index
    %c0_49 = arith.constant 0 : index
    %143 = vector.load %arg10[%142, %c0_48, %c0_49] : memref<8x8x384xf32, #tpu.memory_space<vmem>>, vector<1x8x384xf32>
    %144 = vector.shape_cast %143 : vector<1x8x384xf32> to vector<8x384xf32>
    %cst_50 = arith.constant dense<0.000000e+00> : vector<8x384xf32>
    %145 = tpu.matmul %137, %3, %cst_50 {dimension_numbers = #tpu.dot_dimension_numbers<[1], [0], [0], [1], [0, 0, 1, 1], [], []>} : vector<8x128xf32>, vector<128x384xf32>, vector<8x384xf32> -> vector<8x384xf32>
    %146 = vector.extract_strided_slice %144 {offsets = [0, 0], sizes = [8, 128], strides = [1, 1]} : vector<8x384xf32> to vector<8x128xf32>
    %147 = vector.extract_strided_slice %145 {offsets = [0, 0], sizes = [8, 128], strides = [1, 1]} : vector<8x384xf32> to vector<8x128xf32>
    %148 = arith.addf %146, %147 : vector<8x128xf32>
    %149 = arith.negf %148 : vector<8x128xf32>
    %150 = math.exp %149 : vector<8x128xf32>
    %cst_51 = arith.constant 1.000000e+00 : f32
    %151 = vector.broadcast %cst_51 : f32 to vector<8x128xf32>
    %152 = arith.addf %151, %150 : vector<8x128xf32>
    %153 = arith.divf %151, %152 : vector<8x128xf32>
    %154 = vector.extract_strided_slice %144 {offsets = [0, 128], sizes = [8, 128], strides = [1, 1]} : vector<8x384xf32> to vector<8x128xf32>
    %155 = vector.extract_strided_slice %145 {offsets = [0, 128], sizes = [8, 128], strides = [1, 1]} : vector<8x384xf32> to vector<8x128xf32>
    %156 = arith.addf %154, %155 : vector<8x128xf32>
    %157 = arith.negf %156 : vector<8x128xf32>
    %158 = math.exp %157 : vector<8x128xf32>
    %cst_52 = arith.constant 1.000000e+00 : f32
    %159 = vector.broadcast %cst_52 : f32 to vector<8x128xf32>
    %160 = arith.addf %159, %158 : vector<8x128xf32>
    %161 = arith.divf %159, %160 : vector<8x128xf32>
    %162 = vector.extract_strided_slice %144 {offsets = [0, 256], sizes = [8, 128], strides = [1, 1]} : vector<8x384xf32> to vector<8x128xf32>
    %163 = vector.extract_strided_slice %145 {offsets = [0, 256], sizes = [8, 128], strides = [1, 1]} : vector<8x384xf32> to vector<8x128xf32>
    %164 = vector.broadcast %7 : vector<1x128xf32> to vector<8x128xf32>
    %165 = arith.addf %163, %164 : vector<8x128xf32>
    %166 = arith.mulf %153, %165 : vector<8x128xf32>
    %167 = arith.addf %162, %166 : vector<8x128xf32>
    %168 = math.tanh %167 : vector<8x128xf32>
    %169 = arith.subf %137, %168 : vector<8x128xf32>
    %170 = arith.mulf %161, %169 : vector<8x128xf32>
    %171 = arith.addf %168, %170 : vector<8x128xf32>
    %172 = arith.index_cast %c3_i32 : i32 to index
    %c0_53 = arith.constant 0 : index
    %c0_54 = arith.constant 0 : index
    %173 = vector.load %arg2[%172, %c0_53, %c0_54] : memref<8x8x1xf32, #tpu.memory_space<vmem>>, vector<1x8x1xf32>
    %174 = vector.shape_cast %173 : vector<1x8x1xf32> to vector<8x1xf32>
    %cst_55 = arith.constant 0.000000e+00 : f32
    %175 = vector.broadcast %cst_55 : f32 to vector<8x1xf32>
    %176 = arith.cmpf one, %174, %175 : vector<8x1xf32>
    %177 = vector.shape_cast %176 : vector<8x1xi1> to vector<8x1xi1>
    %178 = vector.broadcast %177 : vector<8x1xi1> to vector<8x128xi1>
    %179 = arith.select %178, %171, %137 : vector<8x128xi1>, vector<8x128xf32>
    %180 = arith.index_cast %c3_i32 : i32 to index
    %c0_56 = arith.constant 0 : index
    %c0_57 = arith.constant 0 : index
    %181 = vector.load %arg9[%180, %c0_56, %c0_57] : memref<8x8x128xf32, #tpu.memory_space<vmem>>, vector<1x8x128xf32>
    %182 = vector.shape_cast %181 : vector<1x8x128xf32> to vector<8x128xf32>
    %183 = vector.shape_cast %179 : vector<8x128xf32> to vector<1x8x128xf32>
    tpu.vector_store %arg9[%180, %c0_56, %c0_57], %183 {strides = array<i32>} : memref<8x8x128xf32, #tpu.memory_space<vmem>>, vector<1x8x128xf32>,
    %c4_i32 = arith.constant 4 : i32
    %184 = arith.index_cast %c4_i32 : i32 to index
    %c0_58 = arith.constant 0 : index
    %c0_59 = arith.constant 0 : index
    %185 = vector.load %arg10[%184, %c0_58, %c0_59] : memref<8x8x384xf32, #tpu.memory_space<vmem>>, vector<1x8x384xf32>
    %186 = vector.shape_cast %185 : vector<1x8x384xf32> to vector<8x384xf32>
    %cst_60 = arith.constant dense<0.000000e+00> : vector<8x384xf32>
    %187 = tpu.matmul %179, %3, %cst_60 {dimension_numbers = #tpu.dot_dimension_numbers<[1], [0], [0], [1], [0, 0, 1, 1], [], []>} : vector<8x128xf32>, vector<128x384xf32>, vector<8x384xf32> -> vector<8x384xf32>
    %188 = vector.extract_strided_slice %186 {offsets = [0, 0], sizes = [8, 128], strides = [1, 1]} : vector<8x384xf32> to vector<8x128xf32>
    %189 = vector.extract_strided_slice %187 {offsets = [0, 0], sizes = [8, 128], strides = [1, 1]} : vector<8x384xf32> to vector<8x128xf32>
    %190 = arith.addf %188, %189 : vector<8x128xf32>
    %191 = arith.negf %190 : vector<8x128xf32>
    %192 = math.exp %191 : vector<8x128xf32>
    %cst_61 = arith.constant 1.000000e+00 : f32
    %193 = vector.broadcast %cst_61 : f32 to vector<8x128xf32>
    %194 = arith.addf %193, %192 : vector<8x128xf32>
    %195 = arith.divf %193, %194 : vector<8x128xf32>
    %196 = vector.extract_strided_slice %186 {offsets = [0, 128], sizes = [8, 128], strides = [1, 1]} : vector<8x384xf32> to vector<8x128xf32>
    %197 = vector.extract_strided_slice %187 {offsets = [0, 128], sizes = [8, 128], strides = [1, 1]} : vector<8x384xf32> to vector<8x128xf32>
    %198 = arith.addf %196, %197 : vector<8x128xf32>
    %199 = arith.negf %198 : vector<8x128xf32>
    %200 = math.exp %199 : vector<8x128xf32>
    %cst_62 = arith.constant 1.000000e+00 : f32
    %201 = vector.broadcast %cst_62 : f32 to vector<8x128xf32>
    %202 = arith.addf %201, %200 : vector<8x128xf32>
    %203 = arith.divf %201, %202 : vector<8x128xf32>
    %204 = vector.extract_strided_slice %186 {offsets = [0, 256], sizes = [8, 128], strides = [1, 1]} : vector<8x384xf32> to vector<8x128xf32>
    %205 = vector.extract_strided_slice %187 {offsets = [0, 256], sizes = [8, 128], strides = [1, 1]} : vector<8x384xf32> to vector<8x128xf32>
    %206 = vector.broadcast %7 : vector<1x128xf32> to vector<8x128xf32>
    %207 = arith.addf %205, %206 : vector<8x128xf32>
    %208 = arith.mulf %195, %207 : vector<8x128xf32>
    %209 = arith.addf %204, %208 : vector<8x128xf32>
    %210 = math.tanh %209 : vector<8x128xf32>
    %211 = arith.subf %179, %210 : vector<8x128xf32>
    %212 = arith.mulf %203, %211 : vector<8x128xf32>
    %213 = arith.addf %210, %212 : vector<8x128xf32>
    %214 = arith.index_cast %c4_i32 : i32 to index
    %c0_63 = arith.constant 0 : index
    %c0_64 = arith.constant 0 : index
    %215 = vector.load %arg2[%214, %c0_63, %c0_64] : memref<8x8x1xf32, #tpu.memory_space<vmem>>, vector<1x8x1xf32>
    %216 = vector.shape_cast %215 : vector<1x8x1xf32> to vector<8x1xf32>
    %cst_65 = arith.constant 0.000000e+00 : f32
    %217 = vector.broadcast %cst_65 : f32 to vector<8x1xf32>
    %218 = arith.cmpf one, %216, %217 : vector<8x1xf32>
    %219 = vector.shape_cast %218 : vector<8x1xi1> to vector<8x1xi1>
    %220 = vector.broadcast %219 : vector<8x1xi1> to vector<8x128xi1>
    %221 = arith.select %220, %213, %179 : vector<8x128xi1>, vector<8x128xf32>
    %222 = arith.index_cast %c4_i32 : i32 to index
    %c0_66 = arith.constant 0 : index
    %c0_67 = arith.constant 0 : index
    %223 = vector.load %arg9[%222, %c0_66, %c0_67] : memref<8x8x128xf32, #tpu.memory_space<vmem>>, vector<1x8x128xf32>
    %224 = vector.shape_cast %223 : vector<1x8x128xf32> to vector<8x128xf32>
    %225 = vector.shape_cast %221 : vector<8x128xf32> to vector<1x8x128xf32>
    tpu.vector_store %arg9[%222, %c0_66, %c0_67], %225 {strides = array<i32>} : memref<8x8x128xf32, #tpu.memory_space<vmem>>, vector<1x8x128xf32>,
    %c5_i32 = arith.constant 5 : i32
    %226 = arith.index_cast %c5_i32 : i32 to index
    %c0_68 = arith.constant 0 : index
    %c0_69 = arith.constant 0 : index
    %227 = vector.load %arg10[%226, %c0_68, %c0_69] : memref<8x8x384xf32, #tpu.memory_space<vmem>>, vector<1x8x384xf32>
    %228 = vector.shape_cast %227 : vector<1x8x384xf32> to vector<8x384xf32>
    %cst_70 = arith.constant dense<0.000000e+00> : vector<8x384xf32>
    %229 = tpu.matmul %221, %3, %cst_70 {dimension_numbers = #tpu.dot_dimension_numbers<[1], [0], [0], [1], [0, 0, 1, 1], [], []>} : vector<8x128xf32>, vector<128x384xf32>, vector<8x384xf32> -> vector<8x384xf32>
    %230 = vector.extract_strided_slice %228 {offsets = [0, 0], sizes = [8, 128], strides = [1, 1]} : vector<8x384xf32> to vector<8x128xf32>
    %231 = vector.extract_strided_slice %229 {offsets = [0, 0], sizes = [8, 128], strides = [1, 1]} : vector<8x384xf32> to vector<8x128xf32>
    %232 = arith.addf %230, %231 : vector<8x128xf32>
    %233 = arith.negf %232 : vector<8x128xf32>
    %234 = math.exp %233 : vector<8x128xf32>
    %cst_71 = arith.constant 1.000000e+00 : f32
    %235 = vector.broadcast %cst_71 : f32 to vector<8x128xf32>
    %236 = arith.addf %235, %234 : vector<8x128xf32>
    %237 = arith.divf %235, %236 : vector<8x128xf32>
    %238 = vector.extract_strided_slice %228 {offsets = [0, 128], sizes = [8, 128], strides = [1, 1]} : vector<8x384xf32> to vector<8x128xf32>
    %239 = vector.extract_strided_slice %229 {offsets = [0, 128], sizes = [8, 128], strides = [1, 1]} : vector<8x384xf32> to vector<8x128xf32>
    %240 = arith.addf %238, %239 : vector<8x128xf32>
    %241 = arith.negf %240 : vector<8x128xf32>
    %242 = math.exp %241 : vector<8x128xf32>
    %cst_72 = arith.constant 1.000000e+00 : f32
    %243 = vector.broadcast %cst_72 : f32 to vector<8x128xf32>
    %244 = arith.addf %243, %242 : vector<8x128xf32>
    %245 = arith.divf %243, %244 : vector<8x128xf32>
    %246 = vector.extract_strided_slice %228 {offsets = [0, 256], sizes = [8, 128], strides = [1, 1]} : vector<8x384xf32> to vector<8x128xf32>
    %247 = vector.extract_strided_slice %229 {offsets = [0, 256], sizes = [8, 128], strides = [1, 1]} : vector<8x384xf32> to vector<8x128xf32>
    %248 = vector.broadcast %7 : vector<1x128xf32> to vector<8x128xf32>
    %249 = arith.addf %247, %248 : vector<8x128xf32>
    %250 = arith.mulf %237, %249 : vector<8x128xf32>
    %251 = arith.addf %246, %250 : vector<8x128xf32>
    %252 = math.tanh %251 : vector<8x128xf32>
    %253 = arith.subf %221, %252 : vector<8x128xf32>
    %254 = arith.mulf %245, %253 : vector<8x128xf32>
    %255 = arith.addf %252, %254 : vector<8x128xf32>
    %256 = arith.index_cast %c5_i32 : i32 to index
    %c0_73 = arith.constant 0 : index
    %c0_74 = arith.constant 0 : index
    %257 = vector.load %arg2[%256, %c0_73, %c0_74] : memref<8x8x1xf32, #tpu.memory_space<vmem>>, vector<1x8x1xf32>
    %258 = vector.shape_cast %257 : vector<1x8x1xf32> to vector<8x1xf32>
    %cst_75 = arith.constant 0.000000e+00 : f32
    %259 = vector.broadcast %cst_75 : f32 to vector<8x1xf32>
    %260 = arith.cmpf one, %258, %259 : vector<8x1xf32>
    %261 = vector.shape_cast %260 : vector<8x1xi1> to vector<8x1xi1>
    %262 = vector.broadcast %261 : vector<8x1xi1> to vector<8x128xi1>
    %263 = arith.select %262, %255, %221 : vector<8x128xi1>, vector<8x128xf32>
    %264 = arith.index_cast %c5_i32 : i32 to index
    %c0_76 = arith.constant 0 : index
    %c0_77 = arith.constant 0 : index
    %265 = vector.load %arg9[%264, %c0_76, %c0_77] : memref<8x8x128xf32, #tpu.memory_space<vmem>>, vector<1x8x128xf32>
    %266 = vector.shape_cast %265 : vector<1x8x128xf32> to vector<8x128xf32>
    %267 = vector.shape_cast %263 : vector<8x128xf32> to vector<1x8x128xf32>
    tpu.vector_store %arg9[%264, %c0_76, %c0_77], %267 {strides = array<i32>} : memref<8x8x128xf32, #tpu.memory_space<vmem>>, vector<1x8x128xf32>,
    %c6_i32 = arith.constant 6 : i32
    %268 = arith.index_cast %c6_i32 : i32 to index
    %c0_78 = arith.constant 0 : index
    %c0_79 = arith.constant 0 : index
    %269 = vector.load %arg10[%268, %c0_78, %c0_79] : memref<8x8x384xf32, #tpu.memory_space<vmem>>, vector<1x8x384xf32>
    %270 = vector.shape_cast %269 : vector<1x8x384xf32> to vector<8x384xf32>
    %cst_80 = arith.constant dense<0.000000e+00> : vector<8x384xf32>
    %271 = tpu.matmul %263, %3, %cst_80 {dimension_numbers = #tpu.dot_dimension_numbers<[1], [0], [0], [1], [0, 0, 1, 1], [], []>} : vector<8x128xf32>, vector<128x384xf32>, vector<8x384xf32> -> vector<8x384xf32>
    %272 = vector.extract_strided_slice %270 {offsets = [0, 0], sizes = [8, 128], strides = [1, 1]} : vector<8x384xf32> to vector<8x128xf32>
    %273 = vector.extract_strided_slice %271 {offsets = [0, 0], sizes = [8, 128], strides = [1, 1]} : vector<8x384xf32> to vector<8x128xf32>
    %274 = arith.addf %272, %273 : vector<8x128xf32>
    %275 = arith.negf %274 : vector<8x128xf32>
    %276 = math.exp %275 : vector<8x128xf32>
    %cst_81 = arith.constant 1.000000e+00 : f32
    %277 = vector.broadcast %cst_81 : f32 to vector<8x128xf32>
    %278 = arith.addf %277, %276 : vector<8x128xf32>
    %279 = arith.divf %277, %278 : vector<8x128xf32>
    %280 = vector.extract_strided_slice %270 {offsets = [0, 128], sizes = [8, 128], strides = [1, 1]} : vector<8x384xf32> to vector<8x128xf32>
    %281 = vector.extract_strided_slice %271 {offsets = [0, 128], sizes = [8, 128], strides = [1, 1]} : vector<8x384xf32> to vector<8x128xf32>
    %282 = arith.addf %280, %281 : vector<8x128xf32>
    %283 = arith.negf %282 : vector<8x128xf32>
    %284 = math.exp %283 : vector<8x128xf32>
    %cst_82 = arith.constant 1.000000e+00 : f32
    %285 = vector.broadcast %cst_82 : f32 to vector<8x128xf32>
    %286 = arith.addf %285, %284 : vector<8x128xf32>
    %287 = arith.divf %285, %286 : vector<8x128xf32>
    %288 = vector.extract_strided_slice %270 {offsets = [0, 256], sizes = [8, 128], strides = [1, 1]} : vector<8x384xf32> to vector<8x128xf32>
    %289 = vector.extract_strided_slice %271 {offsets = [0, 256], sizes = [8, 128], strides = [1, 1]} : vector<8x384xf32> to vector<8x128xf32>
    %290 = vector.broadcast %7 : vector<1x128xf32> to vector<8x128xf32>
    %291 = arith.addf %289, %290 : vector<8x128xf32>
    %292 = arith.mulf %279, %291 : vector<8x128xf32>
    %293 = arith.addf %288, %292 : vector<8x128xf32>
    %294 = math.tanh %293 : vector<8x128xf32>
    %295 = arith.subf %263, %294 : vector<8x128xf32>
    %296 = arith.mulf %287, %295 : vector<8x128xf32>
    %297 = arith.addf %294, %296 : vector<8x128xf32>
    %298 = arith.index_cast %c6_i32 : i32 to index
    %c0_83 = arith.constant 0 : index
    %c0_84 = arith.constant 0 : index
    %299 = vector.load %arg2[%298, %c0_83, %c0_84] : memref<8x8x1xf32, #tpu.memory_space<vmem>>, vector<1x8x1xf32>
    %300 = vector.shape_cast %299 : vector<1x8x1xf32> to vector<8x1xf32>
    %cst_85 = arith.constant 0.000000e+00 : f32
    %301 = vector.broadcast %cst_85 : f32 to vector<8x1xf32>
    %302 = arith.cmpf one, %300, %301 : vector<8x1xf32>
    %303 = vector.shape_cast %302 : vector<8x1xi1> to vector<8x1xi1>
    %304 = vector.broadcast %303 : vector<8x1xi1> to vector<8x128xi1>
    %305 = arith.select %304, %297, %263 : vector<8x128xi1>, vector<8x128xf32>
    %306 = arith.index_cast %c6_i32 : i32 to index
    %c0_86 = arith.constant 0 : index
    %c0_87 = arith.constant 0 : index
    %307 = vector.load %arg9[%306, %c0_86, %c0_87] : memref<8x8x128xf32, #tpu.memory_space<vmem>>, vector<1x8x128xf32>
    %308 = vector.shape_cast %307 : vector<1x8x128xf32> to vector<8x128xf32>
    %309 = vector.shape_cast %305 : vector<8x128xf32> to vector<1x8x128xf32>
    tpu.vector_store %arg9[%306, %c0_86, %c0_87], %309 {strides = array<i32>} : memref<8x8x128xf32, #tpu.memory_space<vmem>>, vector<1x8x128xf32>,
    %c7_i32 = arith.constant 7 : i32
    %310 = arith.index_cast %c7_i32 : i32 to index
    %c0_88 = arith.constant 0 : index
    %c0_89 = arith.constant 0 : index
    %311 = vector.load %arg10[%310, %c0_88, %c0_89] : memref<8x8x384xf32, #tpu.memory_space<vmem>>, vector<1x8x384xf32>
    %312 = vector.shape_cast %311 : vector<1x8x384xf32> to vector<8x384xf32>
    %cst_90 = arith.constant dense<0.000000e+00> : vector<8x384xf32>
    %313 = tpu.matmul %305, %3, %cst_90 {dimension_numbers = #tpu.dot_dimension_numbers<[1], [0], [0], [1], [0, 0, 1, 1], [], []>} : vector<8x128xf32>, vector<128x384xf32>, vector<8x384xf32> -> vector<8x384xf32>
    %314 = vector.extract_strided_slice %312 {offsets = [0, 0], sizes = [8, 128], strides = [1, 1]} : vector<8x384xf32> to vector<8x128xf32>
    %315 = vector.extract_strided_slice %313 {offsets = [0, 0], sizes = [8, 128], strides = [1, 1]} : vector<8x384xf32> to vector<8x128xf32>
    %316 = arith.addf %314, %315 : vector<8x128xf32>
    %317 = arith.negf %316 : vector<8x128xf32>
    %318 = math.exp %317 : vector<8x128xf32>
    %cst_91 = arith.constant 1.000000e+00 : f32
    %319 = vector.broadcast %cst_91 : f32 to vector<8x128xf32>
    %320 = arith.addf %319, %318 : vector<8x128xf32>
    %321 = arith.divf %319, %320 : vector<8x128xf32>
    %322 = vector.extract_strided_slice %312 {offsets = [0, 128], sizes = [8, 128], strides = [1, 1]} : vector<8x384xf32> to vector<8x128xf32>
    %323 = vector.extract_strided_slice %313 {offsets = [0, 128], sizes = [8, 128], strides = [1, 1]} : vector<8x384xf32> to vector<8x128xf32>
    %324 = arith.addf %322, %323 : vector<8x128xf32>
    %325 = arith.negf %324 : vector<8x128xf32>
    %326 = math.exp %325 : vector<8x128xf32>
    %cst_92 = arith.constant 1.000000e+00 : f32
    %327 = vector.broadcast %cst_92 : f32 to vector<8x128xf32>
    %328 = arith.addf %327, %326 : vector<8x128xf32>
    %329 = arith.divf %327, %328 : vector<8x128xf32>
    %330 = vector.extract_strided_slice %312 {offsets = [0, 256], sizes = [8, 128], strides = [1, 1]} : vector<8x384xf32> to vector<8x128xf32>
    %331 = vector.extract_strided_slice %313 {offsets = [0, 256], sizes = [8, 128], strides = [1, 1]} : vector<8x384xf32> to vector<8x128xf32>
    %332 = vector.broadcast %7 : vector<1x128xf32> to vector<8x128xf32>
    %333 = arith.addf %331, %332 : vector<8x128xf32>
    %334 = arith.mulf %321, %333 : vector<8x128xf32>
    %335 = arith.addf %330, %334 : vector<8x128xf32>
    %336 = math.tanh %335 : vector<8x128xf32>
    %337 = arith.subf %305, %336 : vector<8x128xf32>
    %338 = arith.mulf %329, %337 : vector<8x128xf32>
    %339 = arith.addf %336, %338 : vector<8x128xf32>
    %340 = arith.index_cast %c7_i32 : i32 to index
    %c0_93 = arith.constant 0 : index
    %c0_94 = arith.constant 0 : index
    %341 = vector.load %arg2[%340, %c0_93, %c0_94] : memref<8x8x1xf32, #tpu.memory_space<vmem>>, vector<1x8x1xf32>
    %342 = vector.shape_cast %341 : vector<1x8x1xf32> to vector<8x1xf32>
    %cst_95 = arith.constant 0.000000e+00 : f32
    %343 = vector.broadcast %cst_95 : f32 to vector<8x1xf32>
    %344 = arith.cmpf one, %342, %343 : vector<8x1xf32>
    %345 = vector.shape_cast %344 : vector<8x1xi1> to vector<8x1xi1>
    %346 = vector.broadcast %345 : vector<8x1xi1> to vector<8x128xi1>
    %347 = arith.select %346, %339, %305 : vector<8x128xi1>, vector<8x128xf32>
    %348 = arith.index_cast %c7_i32 : i32 to index
    %c0_96 = arith.constant 0 : index
    %c0_97 = arith.constant 0 : index
    %349 = vector.load %arg9[%348, %c0_96, %c0_97] : memref<8x8x128xf32, #tpu.memory_space<vmem>>, vector<1x8x128xf32>
    %350 = vector.shape_cast %349 : vector<1x8x128xf32> to vector<8x128xf32>
    %351 = vector.shape_cast %347 : vector<8x128xf32> to vector<1x8x128xf32>
    tpu.vector_store %arg9[%348, %c0_96, %c0_97], %351 {strides = array<i32>} : memref<8x8x128xf32, #tpu.memory_space<vmem>>, vector<1x8x128xf32>,
    %c8_i32 = arith.constant 8 : i32
    %c1 = arith.constant 1 : index
    %c0_98 = arith.constant 0 : index
    %c0_99 = arith.constant 0 : index
    %352 = vector.load %arg3[%c1, %c0_98, %c0_99] : memref<2x128x384xf32, #tpu.memory_space<vmem>>, vector<1x128x384xf32>
    %353 = vector.shape_cast %352 : vector<1x128x384xf32> to vector<128x384xf32>
    %c1_100 = arith.constant 1 : index
    %c0_101 = arith.constant 0 : index
    %c0_102 = arith.constant 0 : index
    %354 = vector.load %arg4[%c1_100, %c0_101, %c0_102] : memref<2x128x384xf32, #tpu.memory_space<vmem>>, vector<1x128x384xf32>
    %355 = vector.shape_cast %354 : vector<1x128x384xf32> to vector<128x384xf32>
    %c1_103 = arith.constant 1 : index
    %c0_104 = arith.constant 0 : index
    %c0_105 = arith.constant 0 : index
    %356 = vector.load %arg5[%c1_103, %c0_104, %c0_105] : memref<2x1x384xf32, #tpu.memory_space<vmem>>, vector<1x1x384xf32>
    %357 = vector.shape_cast %356 : vector<1x1x384xf32> to vector<1x384xf32>
    %c1_106 = arith.constant 1 : index
    %c0_107 = arith.constant 0 : index
    %c0_108 = arith.constant 0 : index
    %358 = vector.load %arg6[%c1_106, %c0_107, %c0_108] : memref<2x1x128xf32, #tpu.memory_space<vmem>>, vector<1x1x128xf32>
    %359 = vector.shape_cast %358 : vector<1x1x128xf32> to vector<1x128xf32>
    %c0_109 = arith.constant 0 : index
    %c0_110 = arith.constant 0 : index
    %c0_111 = arith.constant 0 : index
    %360 = vector.load %arg9[%c0_109, %c0_110, %c0_111] : memref<8x8x128xf32, #tpu.memory_space<vmem>>, vector<8x8x128xf32>
    %361 = vector.shape_cast %360 : vector<8x8x128xf32> to vector<64x128xf32>
    %cst_112 = arith.constant dense<0.000000e+00> : vector<64x384xf32>
    %362 = tpu.matmul %361, %353, %cst_112 {dimension_numbers = #tpu.dot_dimension_numbers<[1], [0], [0], [1], [0, 0, 1, 1], [], []>} : vector<64x128xf32>, vector<128x384xf32>, vector<64x384xf32> -> vector<64x384xf32>
    %363 = vector.broadcast %357 : vector<1x384xf32> to vector<64x384xf32>
    %364 = arith.addf %362, %363 : vector<64x384xf32>
    %365 = vector.shape_cast %364 : vector<64x384xf32> to vector<8x8x384xf32>
    %c0_113 = arith.constant 0 : index
    %c0_114 = arith.constant 0 : index
    %c0_115 = arith.constant 0 : index
    %366 = vector.load %arg10[%c0_113, %c0_114, %c0_115] : memref<8x8x384xf32, #tpu.memory_space<vmem>>, vector<8x8x384xf32>
    tpu.vector_store %arg10[%c0_113, %c0_114, %c0_115], %365 {strides = array<i32>} : memref<8x8x384xf32, #tpu.memory_space<vmem>>, vector<8x8x384xf32>,
    %cst_116 = arith.constant 0.000000e+00 : f32
    %367 = vector.broadcast %cst_116 : f32 to vector<8x128xf32>
    %cst_117 = arith.constant -1.000000e+00 : f32
    %c0_i32_118 = arith.constant 0 : i32
    %368 = arith.index_cast %c0_i32_118 : i32 to index
    %c0_119 = arith.constant 0 : index
    %c0_120 = arith.constant 0 : index
    %369 = vector.load %arg10[%368, %c0_119, %c0_120] : memref<8x8x384xf32, #tpu.memory_space<vmem>>, vector<1x8x384xf32>
    %370 = vector.shape_cast %369 : vector<1x8x384xf32> to vector<8x384xf32>
    %cst_121 = arith.constant dense<0.000000e+00> : vector<8x384xf32>
    %371 = tpu.matmul %367, %355, %cst_121 {dimension_numbers = #tpu.dot_dimension_numbers<[1], [0], [0], [1], [0, 0, 1, 1], [], []>} : vector<8x128xf32>, vector<128x384xf32>, vector<8x384xf32> -> vector<8x384xf32>
    %372 = vector.extract_strided_slice %370 {offsets = [0, 0], sizes = [8, 128], strides = [1, 1]} : vector<8x384xf32> to vector<8x128xf32>
    %373 = vector.extract_strided_slice %371 {offsets = [0, 0], sizes = [8, 128], strides = [1, 1]} : vector<8x384xf32> to vector<8x128xf32>
    %374 = arith.addf %372, %373 : vector<8x128xf32>
    %375 = arith.negf %374 : vector<8x128xf32>
    %376 = math.exp %375 : vector<8x128xf32>
    %cst_122 = arith.constant 1.000000e+00 : f32
    %377 = vector.broadcast %cst_122 : f32 to vector<8x128xf32>
    %378 = arith.addf %377, %376 : vector<8x128xf32>
    %379 = arith.divf %377, %378 : vector<8x128xf32>
    %380 = vector.extract_strided_slice %370 {offsets = [0, 128], sizes = [8, 128], strides = [1, 1]} : vector<8x384xf32> to vector<8x128xf32>
    %381 = vector.extract_strided_slice %371 {offsets = [0, 128], sizes = [8, 128], strides = [1, 1]} : vector<8x384xf32> to vector<8x128xf32>
    %382 = arith.addf %380, %381 : vector<8x128xf32>
    %383 = arith.negf %382 : vector<8x128xf32>
    %384 = math.exp %383 : vector<8x128xf32>
    %cst_123 = arith.constant 1.000000e+00 : f32
    %385 = vector.broadcast %cst_123 : f32 to vector<8x128xf32>
    %386 = arith.addf %385, %384 : vector<8x128xf32>
    %387 = arith.divf %385, %386 : vector<8x128xf32>
    %388 = vector.extract_strided_slice %370 {offsets = [0, 256], sizes = [8, 128], strides = [1, 1]} : vector<8x384xf32> to vector<8x128xf32>
    %389 = vector.extract_strided_slice %371 {offsets = [0, 256], sizes = [8, 128], strides = [1, 1]} : vector<8x384xf32> to vector<8x128xf32>
    %390 = vector.broadcast %359 : vector<1x128xf32> to vector<8x128xf32>
    %391 = arith.addf %389, %390 : vector<8x128xf32>
    %392 = arith.mulf %379, %391 : vector<8x128xf32>
    %393 = arith.addf %388, %392 : vector<8x128xf32>
    %394 = math.tanh %393 : vector<8x128xf32>
    %395 = arith.subf %367, %394 : vector<8x128xf32>
    %396 = arith.mulf %387, %395 : vector<8x128xf32>
    %397 = arith.addf %394, %396 : vector<8x128xf32>
    %398 = arith.index_cast %c0_i32_118 : i32 to index
    %c0_124 = arith.constant 0 : index
    %c0_125 = arith.constant 0 : index
    %399 = vector.load %arg2[%398, %c0_124, %c0_125] : memref<8x8x1xf32, #tpu.memory_space<vmem>>, vector<1x8x1xf32>
    %400 = vector.shape_cast %399 : vector<1x8x1xf32> to vector<8x1xf32>
    %cst_126 = arith.constant 0.000000e+00 : f32
    %401 = vector.broadcast %cst_126 : f32 to vector<8x1xf32>
    %402 = arith.cmpf one, %400, %401 : vector<8x1xf32>
    %403 = vector.shape_cast %402 : vector<8x1xi1> to vector<8x1xi1>
    %404 = vector.broadcast %403 : vector<8x1xi1> to vector<8x128xi1>
    %405 = arith.select %404, %397, %367 : vector<8x128xi1>, vector<8x128xf32>
    %406 = vector.shape_cast %402 : vector<8x1xi1> to vector<8x1xi1>
    %407 = vector.broadcast %406 : vector<8x1xi1> to vector<8x128xi1>
    %408 = vector.broadcast %cst_117 : f32 to vector<8x128xf32>
    %409 = arith.select %407, %397, %408 : vector<8x128xi1>, vector<8x128xf32>
    %410 = arith.index_cast %c0_i32_118 : i32 to index
    %c0_127 = arith.constant 0 : index
    %c0_128 = arith.constant 0 : index
    %411 = vector.load %arg9[%410, %c0_127, %c0_128] : memref<8x8x128xf32, #tpu.memory_space<vmem>>, vector<1x8x128xf32>
    %412 = vector.shape_cast %411 : vector<1x8x128xf32> to vector<8x128xf32>
    %413 = vector.shape_cast %409 : vector<8x128xf32> to vector<1x8x128xf32>
    tpu.vector_store %arg9[%410, %c0_127, %c0_128], %413 {strides = array<i32>} : memref<8x8x128xf32, #tpu.memory_space<vmem>>, vector<1x8x128xf32>,
    %c1_i32_129 = arith.constant 1 : i32
    %414 = arith.index_cast %c1_i32_129 : i32 to index
    %c0_130 = arith.constant 0 : index
    %c0_131 = arith.constant 0 : index
    %415 = vector.load %arg10[%414, %c0_130, %c0_131] : memref<8x8x384xf32, #tpu.memory_space<vmem>>, vector<1x8x384xf32>
    %416 = vector.shape_cast %415 : vector<1x8x384xf32> to vector<8x384xf32>
    %cst_132 = arith.constant dense<0.000000e+00> : vector<8x384xf32>
    %417 = tpu.matmul %405, %355, %cst_132 {dimension_numbers = #tpu.dot_dimension_numbers<[1], [0], [0], [1], [0, 0, 1, 1], [], []>} : vector<8x128xf32>, vector<128x384xf32>, vector<8x384xf32> -> vector<8x384xf32>
    %418 = vector.extract_strided_slice %416 {offsets = [0, 0], sizes = [8, 128], strides = [1, 1]} : vector<8x384xf32> to vector<8x128xf32>
    %419 = vector.extract_strided_slice %417 {offsets = [0, 0], sizes = [8, 128], strides = [1, 1]} : vector<8x384xf32> to vector<8x128xf32>
    %420 = arith.addf %418, %419 : vector<8x128xf32>
    %421 = arith.negf %420 : vector<8x128xf32>
    %422 = math.exp %421 : vector<8x128xf32>
    %cst_133 = arith.constant 1.000000e+00 : f32
    %423 = vector.broadcast %cst_133 : f32 to vector<8x128xf32>
    %424 = arith.addf %423, %422 : vector<8x128xf32>
    %425 = arith.divf %423, %424 : vector<8x128xf32>
    %426 = vector.extract_strided_slice %416 {offsets = [0, 128], sizes = [8, 128], strides = [1, 1]} : vector<8x384xf32> to vector<8x128xf32>
    %427 = vector.extract_strided_slice %417 {offsets = [0, 128], sizes = [8, 128], strides = [1, 1]} : vector<8x384xf32> to vector<8x128xf32>
    %428 = arith.addf %426, %427 : vector<8x128xf32>
    %429 = arith.negf %428 : vector<8x128xf32>
    %430 = math.exp %429 : vector<8x128xf32>
    %cst_134 = arith.constant 1.000000e+00 : f32
    %431 = vector.broadcast %cst_134 : f32 to vector<8x128xf32>
    %432 = arith.addf %431, %430 : vector<8x128xf32>
    %433 = arith.divf %431, %432 : vector<8x128xf32>
    %434 = vector.extract_strided_slice %416 {offsets = [0, 256], sizes = [8, 128], strides = [1, 1]} : vector<8x384xf32> to vector<8x128xf32>
    %435 = vector.extract_strided_slice %417 {offsets = [0, 256], sizes = [8, 128], strides = [1, 1]} : vector<8x384xf32> to vector<8x128xf32>
    %436 = vector.broadcast %359 : vector<1x128xf32> to vector<8x128xf32>
    %437 = arith.addf %435, %436 : vector<8x128xf32>
    %438 = arith.mulf %425, %437 : vector<8x128xf32>
    %439 = arith.addf %434, %438 : vector<8x128xf32>
    %440 = math.tanh %439 : vector<8x128xf32>
    %441 = arith.subf %405, %440 : vector<8x128xf32>
    %442 = arith.mulf %433, %441 : vector<8x128xf32>
    %443 = arith.addf %440, %442 : vector<8x128xf32>
    %444 = arith.index_cast %c1_i32_129 : i32 to index
    %c0_135 = arith.constant 0 : index
    %c0_136 = arith.constant 0 : index
    %445 = vector.load %arg2[%444, %c0_135, %c0_136] : memref<8x8x1xf32, #tpu.memory_space<vmem>>, vector<1x8x1xf32>
    %446 = vector.shape_cast %445 : vector<1x8x1xf32> to vector<8x1xf32>
    %cst_137 = arith.constant 0.000000e+00 : f32
    %447 = vector.broadcast %cst_137 : f32 to vector<8x1xf32>
    %448 = arith.cmpf one, %446, %447 : vector<8x1xf32>
    %449 = vector.shape_cast %448 : vector<8x1xi1> to vector<8x1xi1>
    %450 = vector.broadcast %449 : vector<8x1xi1> to vector<8x128xi1>
    %451 = arith.select %450, %443, %405 : vector<8x128xi1>, vector<8x128xf32>
    %452 = vector.shape_cast %448 : vector<8x1xi1> to vector<8x1xi1>
    %453 = vector.broadcast %452 : vector<8x1xi1> to vector<8x128xi1>
    %454 = vector.broadcast %cst_117 : f32 to vector<8x128xf32>
    %455 = arith.select %453, %443, %454 : vector<8x128xi1>, vector<8x128xf32>
    %456 = arith.index_cast %c1_i32_129 : i32 to index
    %c0_138 = arith.constant 0 : index
    %c0_139 = arith.constant 0 : index
    %457 = vector.load %arg9[%456, %c0_138, %c0_139] : memref<8x8x128xf32, #tpu.memory_space<vmem>>, vector<1x8x128xf32>
    %458 = vector.shape_cast %457 : vector<1x8x128xf32> to vector<8x128xf32>
    %459 = vector.shape_cast %455 : vector<8x128xf32> to vector<1x8x128xf32>
    tpu.vector_store %arg9[%456, %c0_138, %c0_139], %459 {strides = array<i32>} : memref<8x8x128xf32, #tpu.memory_space<vmem>>, vector<1x8x128xf32>,
    %c2_i32_140 = arith.constant 2 : i32
    %460 = arith.index_cast %c2_i32_140 : i32 to index
    %c0_141 = arith.constant 0 : index
    %c0_142 = arith.constant 0 : index
    %461 = vector.load %arg10[%460, %c0_141, %c0_142] : memref<8x8x384xf32, #tpu.memory_space<vmem>>, vector<1x8x384xf32>
    %462 = vector.shape_cast %461 : vector<1x8x384xf32> to vector<8x384xf32>
    %cst_143 = arith.constant dense<0.000000e+00> : vector<8x384xf32>
    %463 = tpu.matmul %451, %355, %cst_143 {dimension_numbers = #tpu.dot_dimension_numbers<[1], [0], [0], [1], [0, 0, 1, 1], [], []>} : vector<8x128xf32>, vector<128x384xf32>, vector<8x384xf32> -> vector<8x384xf32>
    %464 = vector.extract_strided_slice %462 {offsets = [0, 0], sizes = [8, 128], strides = [1, 1]} : vector<8x384xf32> to vector<8x128xf32>
    %465 = vector.extract_strided_slice %463 {offsets = [0, 0], sizes = [8, 128], strides = [1, 1]} : vector<8x384xf32> to vector<8x128xf32>
    %466 = arith.addf %464, %465 : vector<8x128xf32>
    %467 = arith.negf %466 : vector<8x128xf32>
    %468 = math.exp %467 : vector<8x128xf32>
    %cst_144 = arith.constant 1.000000e+00 : f32
    %469 = vector.broadcast %cst_144 : f32 to vector<8x128xf32>
    %470 = arith.addf %469, %468 : vector<8x128xf32>
    %471 = arith.divf %469, %470 : vector<8x128xf32>
    %472 = vector.extract_strided_slice %462 {offsets = [0, 128], sizes = [8, 128], strides = [1, 1]} : vector<8x384xf32> to vector<8x128xf32>
    %473 = vector.extract_strided_slice %463 {offsets = [0, 128], sizes = [8, 128], strides = [1, 1]} : vector<8x384xf32> to vector<8x128xf32>
    %474 = arith.addf %472, %473 : vector<8x128xf32>
    %475 = arith.negf %474 : vector<8x128xf32>
    %476 = math.exp %475 : vector<8x128xf32>
    %cst_145 = arith.constant 1.000000e+00 : f32
    %477 = vector.broadcast %cst_145 : f32 to vector<8x128xf32>
    %478 = arith.addf %477, %476 : vector<8x128xf32>
    %479 = arith.divf %477, %478 : vector<8x128xf32>
    %480 = vector.extract_strided_slice %462 {offsets = [0, 256], sizes = [8, 128], strides = [1, 1]} : vector<8x384xf32> to vector<8x128xf32>
    %481 = vector.extract_strided_slice %463 {offsets = [0, 256], sizes = [8, 128], strides = [1, 1]} : vector<8x384xf32> to vector<8x128xf32>
    %482 = vector.broadcast %359 : vector<1x128xf32> to vector<8x128xf32>
    %483 = arith.addf %481, %482 : vector<8x128xf32>
    %484 = arith.mulf %471, %483 : vector<8x128xf32>
    %485 = arith.addf %480, %484 : vector<8x128xf32>
    %486 = math.tanh %485 : vector<8x128xf32>
    %487 = arith.subf %451, %486 : vector<8x128xf32>
    %488 = arith.mulf %479, %487 : vector<8x128xf32>
    %489 = arith.addf %486, %488 : vector<8x128xf32>
    %490 = arith.index_cast %c2_i32_140 : i32 to index
    %c0_146 = arith.constant 0 : index
    %c0_147 = arith.constant 0 : index
    %491 = vector.load %arg2[%490, %c0_146, %c0_147] : memref<8x8x1xf32, #tpu.memory_space<vmem>>, vector<1x8x1xf32>
    %492 = vector.shape_cast %491 : vector<1x8x1xf32> to vector<8x1xf32>
    %cst_148 = arith.constant 0.000000e+00 : f32
    %493 = vector.broadcast %cst_148 : f32 to vector<8x1xf32>
    %494 = arith.cmpf one, %492, %493 : vector<8x1xf32>
    %495 = vector.shape_cast %494 : vector<8x1xi1> to vector<8x1xi1>
    %496 = vector.broadcast %495 : vector<8x1xi1> to vector<8x128xi1>
    %497 = arith.select %496, %489, %451 : vector<8x128xi1>, vector<8x128xf32>
    %498 = vector.shape_cast %494 : vector<8x1xi1> to vector<8x1xi1>
    %499 = vector.broadcast %498 : vector<8x1xi1> to vector<8x128xi1>
    %500 = vector.broadcast %cst_117 : f32 to vector<8x128xf32>
    %501 = arith.select %499, %489, %500 : vector<8x128xi1>, vector<8x128xf32>
    %502 = arith.index_cast %c2_i32_140 : i32 to index
    %c0_149 = arith.constant 0 : index
    %c0_150 = arith.constant 0 : index
    %503 = vector.load %arg9[%502, %c0_149, %c0_150] : memref<8x8x128xf32, #tpu.memory_space<vmem>>, vector<1x8x128xf32>
    %504 = vector.shape_cast %503 : vector<1x8x128xf32> to vector<8x128xf32>
    %505 = vector.shape_cast %501 : vector<8x128xf32> to vector<1x8x128xf32>
    tpu.vector_store %arg9[%502, %c0_149, %c0_150], %505 {strides = array<i32>} : memref<8x8x128xf32, #tpu.memory_space<vmem>>, vector<1x8x128xf32>,
    %c3_i32_151 = arith.constant 3 : i32
    %506 = arith.index_cast %c3_i32_151 : i32 to index
    %c0_152 = arith.constant 0 : index
    %c0_153 = arith.constant 0 : index
    %507 = vector.load %arg10[%506, %c0_152, %c0_153] : memref<8x8x384xf32, #tpu.memory_space<vmem>>, vector<1x8x384xf32>
    %508 = vector.shape_cast %507 : vector<1x8x384xf32> to vector<8x384xf32>
    %cst_154 = arith.constant dense<0.000000e+00> : vector<8x384xf32>
    %509 = tpu.matmul %497, %355, %cst_154 {dimension_numbers = #tpu.dot_dimension_numbers<[1], [0], [0], [1], [0, 0, 1, 1], [], []>} : vector<8x128xf32>, vector<128x384xf32>, vector<8x384xf32> -> vector<8x384xf32>
    %510 = vector.extract_strided_slice %508 {offsets = [0, 0], sizes = [8, 128], strides = [1, 1]} : vector<8x384xf32> to vector<8x128xf32>
    %511 = vector.extract_strided_slice %509 {offsets = [0, 0], sizes = [8, 128], strides = [1, 1]} : vector<8x384xf32> to vector<8x128xf32>
    %512 = arith.addf %510, %511 : vector<8x128xf32>
    %513 = arith.negf %512 : vector<8x128xf32>
    %514 = math.exp %513 : vector<8x128xf32>
    %cst_155 = arith.constant 1.000000e+00 : f32
    %515 = vector.broadcast %cst_155 : f32 to vector<8x128xf32>
    %516 = arith.addf %515, %514 : vector<8x128xf32>
    %517 = arith.divf %515, %516 : vector<8x128xf32>
    %518 = vector.extract_strided_slice %508 {offsets = [0, 128], sizes = [8, 128], strides = [1, 1]} : vector<8x384xf32> to vector<8x128xf32>
    %519 = vector.extract_strided_slice %509 {offsets = [0, 128], sizes = [8, 128], strides = [1, 1]} : vector<8x384xf32> to vector<8x128xf32>
    %520 = arith.addf %518, %519 : vector<8x128xf32>
    %521 = arith.negf %520 : vector<8x128xf32>
    %522 = math.exp %521 : vector<8x128xf32>
    %cst_156 = arith.constant 1.000000e+00 : f32
    %523 = vector.broadcast %cst_156 : f32 to vector<8x128xf32>
    %524 = arith.addf %523, %522 : vector<8x128xf32>
    %525 = arith.divf %523, %524 : vector<8x128xf32>
    %526 = vector.extract_strided_slice %508 {offsets = [0, 256], sizes = [8, 128], strides = [1, 1]} : vector<8x384xf32> to vector<8x128xf32>
    %527 = vector.extract_strided_slice %509 {offsets = [0, 256], sizes = [8, 128], strides = [1, 1]} : vector<8x384xf32> to vector<8x128xf32>
    %528 = vector.broadcast %359 : vector<1x128xf32> to vector<8x128xf32>
    %529 = arith.addf %527, %528 : vector<8x128xf32>
    %530 = arith.mulf %517, %529 : vector<8x128xf32>
    %531 = arith.addf %526, %530 : vector<8x128xf32>
    %532 = math.tanh %531 : vector<8x128xf32>
    %533 = arith.subf %497, %532 : vector<8x128xf32>
    %534 = arith.mulf %525, %533 : vector<8x128xf32>
    %535 = arith.addf %532, %534 : vector<8x128xf32>
    %536 = arith.index_cast %c3_i32_151 : i32 to index
    %c0_157 = arith.constant 0 : index
    %c0_158 = arith.constant 0 : index
    %537 = vector.load %arg2[%536, %c0_157, %c0_158] : memref<8x8x1xf32, #tpu.memory_space<vmem>>, vector<1x8x1xf32>
    %538 = vector.shape_cast %537 : vector<1x8x1xf32> to vector<8x1xf32>
    %cst_159 = arith.constant 0.000000e+00 : f32
    %539 = vector.broadcast %cst_159 : f32 to vector<8x1xf32>
    %540 = arith.cmpf one, %538, %539 : vector<8x1xf32>
    %541 = vector.shape_cast %540 : vector<8x1xi1> to vector<8x1xi1>
    %542 = vector.broadcast %541 : vector<8x1xi1> to vector<8x128xi1>
    %543 = arith.select %542, %535, %497 : vector<8x128xi1>, vector<8x128xf32>
    %544 = vector.shape_cast %540 : vector<8x1xi1> to vector<8x1xi1>
    %545 = vector.broadcast %544 : vector<8x1xi1> to vector<8x128xi1>
    %546 = vector.broadcast %cst_117 : f32 to vector<8x128xf32>
    %547 = arith.select %545, %535, %546 : vector<8x128xi1>, vector<8x128xf32>
    %548 = arith.index_cast %c3_i32_151 : i32 to index
    %c0_160 = arith.constant 0 : index
    %c0_161 = arith.constant 0 : index
    %549 = vector.load %arg9[%548, %c0_160, %c0_161] : memref<8x8x128xf32, #tpu.memory_space<vmem>>, vector<1x8x128xf32>
    %550 = vector.shape_cast %549 : vector<1x8x128xf32> to vector<8x128xf32>
    %551 = vector.shape_cast %547 : vector<8x128xf32> to vector<1x8x128xf32>
    tpu.vector_store %arg9[%548, %c0_160, %c0_161], %551 {strides = array<i32>} : memref<8x8x128xf32, #tpu.memory_space<vmem>>, vector<1x8x128xf32>,
    %c4_i32_162 = arith.constant 4 : i32
    %552 = arith.index_cast %c4_i32_162 : i32 to index
    %c0_163 = arith.constant 0 : index
    %c0_164 = arith.constant 0 : index
    %553 = vector.load %arg10[%552, %c0_163, %c0_164] : memref<8x8x384xf32, #tpu.memory_space<vmem>>, vector<1x8x384xf32>
    %554 = vector.shape_cast %553 : vector<1x8x384xf32> to vector<8x384xf32>
    %cst_165 = arith.constant dense<0.000000e+00> : vector<8x384xf32>
    %555 = tpu.matmul %543, %355, %cst_165 {dimension_numbers = #tpu.dot_dimension_numbers<[1], [0], [0], [1], [0, 0, 1, 1], [], []>} : vector<8x128xf32>, vector<128x384xf32>, vector<8x384xf32> -> vector<8x384xf32>
    %556 = vector.extract_strided_slice %554 {offsets = [0, 0], sizes = [8, 128], strides = [1, 1]} : vector<8x384xf32> to vector<8x128xf32>
    %557 = vector.extract_strided_slice %555 {offsets = [0, 0], sizes = [8, 128], strides = [1, 1]} : vector<8x384xf32> to vector<8x128xf32>
    %558 = arith.addf %556, %557 : vector<8x128xf32>
    %559 = arith.negf %558 : vector<8x128xf32>
    %560 = math.exp %559 : vector<8x128xf32>
    %cst_166 = arith.constant 1.000000e+00 : f32
    %561 = vector.broadcast %cst_166 : f32 to vector<8x128xf32>
    %562 = arith.addf %561, %560 : vector<8x128xf32>
    %563 = arith.divf %561, %562 : vector<8x128xf32>
    %564 = vector.extract_strided_slice %554 {offsets = [0, 128], sizes = [8, 128], strides = [1, 1]} : vector<8x384xf32> to vector<8x128xf32>
    %565 = vector.extract_strided_slice %555 {offsets = [0, 128], sizes = [8, 128], strides = [1, 1]} : vector<8x384xf32> to vector<8x128xf32>
    %566 = arith.addf %564, %565 : vector<8x128xf32>
    %567 = arith.negf %566 : vector<8x128xf32>
    %568 = math.exp %567 : vector<8x128xf32>
    %cst_167 = arith.constant 1.000000e+00 : f32
    %569 = vector.broadcast %cst_167 : f32 to vector<8x128xf32>
    %570 = arith.addf %569, %568 : vector<8x128xf32>
    %571 = arith.divf %569, %570 : vector<8x128xf32>
    %572 = vector.extract_strided_slice %554 {offsets = [0, 256], sizes = [8, 128], strides = [1, 1]} : vector<8x384xf32> to vector<8x128xf32>
    %573 = vector.extract_strided_slice %555 {offsets = [0, 256], sizes = [8, 128], strides = [1, 1]} : vector<8x384xf32> to vector<8x128xf32>
    %574 = vector.broadcast %359 : vector<1x128xf32> to vector<8x128xf32>
    %575 = arith.addf %573, %574 : vector<8x128xf32>
    %576 = arith.mulf %563, %575 : vector<8x128xf32>
    %577 = arith.addf %572, %576 : vector<8x128xf32>
    %578 = math.tanh %577 : vector<8x128xf32>
    %579 = arith.subf %543, %578 : vector<8x128xf32>
    %580 = arith.mulf %571, %579 : vector<8x128xf32>
    %581 = arith.addf %578, %580 : vector<8x128xf32>
    %582 = arith.index_cast %c4_i32_162 : i32 to index
    %c0_168 = arith.constant 0 : index
    %c0_169 = arith.constant 0 : index
    %583 = vector.load %arg2[%582, %c0_168, %c0_169] : memref<8x8x1xf32, #tpu.memory_space<vmem>>, vector<1x8x1xf32>
    %584 = vector.shape_cast %583 : vector<1x8x1xf32> to vector<8x1xf32>
    %cst_170 = arith.constant 0.000000e+00 : f32
    %585 = vector.broadcast %cst_170 : f32 to vector<8x1xf32>
    %586 = arith.cmpf one, %584, %585 : vector<8x1xf32>
    %587 = vector.shape_cast %586 : vector<8x1xi1> to vector<8x1xi1>
    %588 = vector.broadcast %587 : vector<8x1xi1> to vector<8x128xi1>
    %589 = arith.select %588, %581, %543 : vector<8x128xi1>, vector<8x128xf32>
    %590 = vector.shape_cast %586 : vector<8x1xi1> to vector<8x1xi1>
    %591 = vector.broadcast %590 : vector<8x1xi1> to vector<8x128xi1>
    %592 = vector.broadcast %cst_117 : f32 to vector<8x128xf32>
    %593 = arith.select %591, %581, %592 : vector<8x128xi1>, vector<8x128xf32>
    %594 = arith.index_cast %c4_i32_162 : i32 to index
    %c0_171 = arith.constant 0 : index
    %c0_172 = arith.constant 0 : index
    %595 = vector.load %arg9[%594, %c0_171, %c0_172] : memref<8x8x128xf32, #tpu.memory_space<vmem>>, vector<1x8x128xf32>
    %596 = vector.shape_cast %595 : vector<1x8x128xf32> to vector<8x128xf32>
    %597 = vector.shape_cast %593 : vector<8x128xf32> to vector<1x8x128xf32>
    tpu.vector_store %arg9[%594, %c0_171, %c0_172], %597 {strides = array<i32>} : memref<8x8x128xf32, #tpu.memory_space<vmem>>, vector<1x8x128xf32>,
    %c5_i32_173 = arith.constant 5 : i32
    %598 = arith.index_cast %c5_i32_173 : i32 to index
    %c0_174 = arith.constant 0 : index
    %c0_175 = arith.constant 0 : index
    %599 = vector.load %arg10[%598, %c0_174, %c0_175] : memref<8x8x384xf32, #tpu.memory_space<vmem>>, vector<1x8x384xf32>
    %600 = vector.shape_cast %599 : vector<1x8x384xf32> to vector<8x384xf32>
    %cst_176 = arith.constant dense<0.000000e+00> : vector<8x384xf32>
    %601 = tpu.matmul %589, %355, %cst_176 {dimension_numbers = #tpu.dot_dimension_numbers<[1], [0], [0], [1], [0, 0, 1, 1], [], []>} : vector<8x128xf32>, vector<128x384xf32>, vector<8x384xf32> -> vector<8x384xf32>
    %602 = vector.extract_strided_slice %600 {offsets = [0, 0], sizes = [8, 128], strides = [1, 1]} : vector<8x384xf32> to vector<8x128xf32>
    %603 = vector.extract_strided_slice %601 {offsets = [0, 0], sizes = [8, 128], strides = [1, 1]} : vector<8x384xf32> to vector<8x128xf32>
    %604 = arith.addf %602, %603 : vector<8x128xf32>
    %605 = arith.negf %604 : vector<8x128xf32>
    %606 = math.exp %605 : vector<8x128xf32>
    %cst_177 = arith.constant 1.000000e+00 : f32
    %607 = vector.broadcast %cst_177 : f32 to vector<8x128xf32>
    %608 = arith.addf %607, %606 : vector<8x128xf32>
    %609 = arith.divf %607, %608 : vector<8x128xf32>
    %610 = vector.extract_strided_slice %600 {offsets = [0, 128], sizes = [8, 128], strides = [1, 1]} : vector<8x384xf32> to vector<8x128xf32>
    %611 = vector.extract_strided_slice %601 {offsets = [0, 128], sizes = [8, 128], strides = [1, 1]} : vector<8x384xf32> to vector<8x128xf32>
    %612 = arith.addf %610, %611 : vector<8x128xf32>
    %613 = arith.negf %612 : vector<8x128xf32>
    %614 = math.exp %613 : vector<8x128xf32>
    %cst_178 = arith.constant 1.000000e+00 : f32
    %615 = vector.broadcast %cst_178 : f32 to vector<8x128xf32>
    %616 = arith.addf %615, %614 : vector<8x128xf32>
    %617 = arith.divf %615, %616 : vector<8x128xf32>
    %618 = vector.extract_strided_slice %600 {offsets = [0, 256], sizes = [8, 128], strides = [1, 1]} : vector<8x384xf32> to vector<8x128xf32>
    %619 = vector.extract_strided_slice %601 {offsets = [0, 256], sizes = [8, 128], strides = [1, 1]} : vector<8x384xf32> to vector<8x128xf32>
    %620 = vector.broadcast %359 : vector<1x128xf32> to vector<8x128xf32>
    %621 = arith.addf %619, %620 : vector<8x128xf32>
    %622 = arith.mulf %609, %621 : vector<8x128xf32>
    %623 = arith.addf %618, %622 : vector<8x128xf32>
    %624 = math.tanh %623 : vector<8x128xf32>
    %625 = arith.subf %589, %624 : vector<8x128xf32>
    %626 = arith.mulf %617, %625 : vector<8x128xf32>
    %627 = arith.addf %624, %626 : vector<8x128xf32>
    %628 = arith.index_cast %c5_i32_173 : i32 to index
    %c0_179 = arith.constant 0 : index
    %c0_180 = arith.constant 0 : index
    %629 = vector.load %arg2[%628, %c0_179, %c0_180] : memref<8x8x1xf32, #tpu.memory_space<vmem>>, vector<1x8x1xf32>
    %630 = vector.shape_cast %629 : vector<1x8x1xf32> to vector<8x1xf32>
    %cst_181 = arith.constant 0.000000e+00 : f32
    %631 = vector.broadcast %cst_181 : f32 to vector<8x1xf32>
    %632 = arith.cmpf one, %630, %631 : vector<8x1xf32>
    %633 = vector.shape_cast %632 : vector<8x1xi1> to vector<8x1xi1>
    %634 = vector.broadcast %633 : vector<8x1xi1> to vector<8x128xi1>
    %635 = arith.select %634, %627, %589 : vector<8x128xi1>, vector<8x128xf32>
    %636 = vector.shape_cast %632 : vector<8x1xi1> to vector<8x1xi1>
    %637 = vector.broadcast %636 : vector<8x1xi1> to vector<8x128xi1>
    %638 = vector.broadcast %cst_117 : f32 to vector<8x128xf32>
    %639 = arith.select %637, %627, %638 : vector<8x128xi1>, vector<8x128xf32>
    %640 = arith.index_cast %c5_i32_173 : i32 to index
    %c0_182 = arith.constant 0 : index
    %c0_183 = arith.constant 0 : index
    %641 = vector.load %arg9[%640, %c0_182, %c0_183] : memref<8x8x128xf32, #tpu.memory_space<vmem>>, vector<1x8x128xf32>
    %642 = vector.shape_cast %641 : vector<1x8x128xf32> to vector<8x128xf32>
    %643 = vector.shape_cast %639 : vector<8x128xf32> to vector<1x8x128xf32>
    tpu.vector_store %arg9[%640, %c0_182, %c0_183], %643 {strides = array<i32>} : memref<8x8x128xf32, #tpu.memory_space<vmem>>, vector<1x8x128xf32>,
    %c6_i32_184 = arith.constant 6 : i32
    %644 = arith.index_cast %c6_i32_184 : i32 to index
    %c0_185 = arith.constant 0 : index
    %c0_186 = arith.constant 0 : index
    %645 = vector.load %arg10[%644, %c0_185, %c0_186] : memref<8x8x384xf32, #tpu.memory_space<vmem>>, vector<1x8x384xf32>
    %646 = vector.shape_cast %645 : vector<1x8x384xf32> to vector<8x384xf32>
    %cst_187 = arith.constant dense<0.000000e+00> : vector<8x384xf32>
    %647 = tpu.matmul %635, %355, %cst_187 {dimension_numbers = #tpu.dot_dimension_numbers<[1], [0], [0], [1], [0, 0, 1, 1], [], []>} : vector<8x128xf32>, vector<128x384xf32>, vector<8x384xf32> -> vector<8x384xf32>
    %648 = vector.extract_strided_slice %646 {offsets = [0, 0], sizes = [8, 128], strides = [1, 1]} : vector<8x384xf32> to vector<8x128xf32>
    %649 = vector.extract_strided_slice %647 {offsets = [0, 0], sizes = [8, 128], strides = [1, 1]} : vector<8x384xf32> to vector<8x128xf32>
    %650 = arith.addf %648, %649 : vector<8x128xf32>
    %651 = arith.negf %650 : vector<8x128xf32>
    %652 = math.exp %651 : vector<8x128xf32>
    %cst_188 = arith.constant 1.000000e+00 : f32
    %653 = vector.broadcast %cst_188 : f32 to vector<8x128xf32>
    %654 = arith.addf %653, %652 : vector<8x128xf32>
    %655 = arith.divf %653, %654 : vector<8x128xf32>
    %656 = vector.extract_strided_slice %646 {offsets = [0, 128], sizes = [8, 128], strides = [1, 1]} : vector<8x384xf32> to vector<8x128xf32>
    %657 = vector.extract_strided_slice %647 {offsets = [0, 128], sizes = [8, 128], strides = [1, 1]} : vector<8x384xf32> to vector<8x128xf32>
    %658 = arith.addf %656, %657 : vector<8x128xf32>
    %659 = arith.negf %658 : vector<8x128xf32>
    %660 = math.exp %659 : vector<8x128xf32>
    %cst_189 = arith.constant 1.000000e+00 : f32
    %661 = vector.broadcast %cst_189 : f32 to vector<8x128xf32>
    %662 = arith.addf %661, %660 : vector<8x128xf32>
    %663 = arith.divf %661, %662 : vector<8x128xf32>
    %664 = vector.extract_strided_slice %646 {offsets = [0, 256], sizes = [8, 128], strides = [1, 1]} : vector<8x384xf32> to vector<8x128xf32>
    %665 = vector.extract_strided_slice %647 {offsets = [0, 256], sizes = [8, 128], strides = [1, 1]} : vector<8x384xf32> to vector<8x128xf32>
    %666 = vector.broadcast %359 : vector<1x128xf32> to vector<8x128xf32>
    %667 = arith.addf %665, %666 : vector<8x128xf32>
    %668 = arith.mulf %655, %667 : vector<8x128xf32>
    %669 = arith.addf %664, %668 : vector<8x128xf32>
    %670 = math.tanh %669 : vector<8x128xf32>
    %671 = arith.subf %635, %670 : vector<8x128xf32>
    %672 = arith.mulf %663, %671 : vector<8x128xf32>
    %673 = arith.addf %670, %672 : vector<8x128xf32>
    %674 = arith.index_cast %c6_i32_184 : i32 to index
    %c0_190 = arith.constant 0 : index
    %c0_191 = arith.constant 0 : index
    %675 = vector.load %arg2[%674, %c0_190, %c0_191] : memref<8x8x1xf32, #tpu.memory_space<vmem>>, vector<1x8x1xf32>
    %676 = vector.shape_cast %675 : vector<1x8x1xf32> to vector<8x1xf32>
    %cst_192 = arith.constant 0.000000e+00 : f32
    %677 = vector.broadcast %cst_192 : f32 to vector<8x1xf32>
    %678 = arith.cmpf one, %676, %677 : vector<8x1xf32>
    %679 = vector.shape_cast %678 : vector<8x1xi1> to vector<8x1xi1>
    %680 = vector.broadcast %679 : vector<8x1xi1> to vector<8x128xi1>
    %681 = arith.select %680, %673, %635 : vector<8x128xi1>, vector<8x128xf32>
    %682 = vector.shape_cast %678 : vector<8x1xi1> to vector<8x1xi1>
    %683 = vector.broadcast %682 : vector<8x1xi1> to vector<8x128xi1>
    %684 = vector.broadcast %cst_117 : f32 to vector<8x128xf32>
    %685 = arith.select %683, %673, %684 : vector<8x128xi1>, vector<8x128xf32>
    %686 = arith.index_cast %c6_i32_184 : i32 to index
    %c0_193 = arith.constant 0 : index
    %c0_194 = arith.constant 0 : index
    %687 = vector.load %arg9[%686, %c0_193, %c0_194] : memref<8x8x128xf32, #tpu.memory_space<vmem>>, vector<1x8x128xf32>
    %688 = vector.shape_cast %687 : vector<1x8x128xf32> to vector<8x128xf32>
    %689 = vector.shape_cast %685 : vector<8x128xf32> to vector<1x8x128xf32>
    tpu.vector_store %arg9[%686, %c0_193, %c0_194], %689 {strides = array<i32>} : memref<8x8x128xf32, #tpu.memory_space<vmem>>, vector<1x8x128xf32>,
    %c7_i32_195 = arith.constant 7 : i32
    %690 = arith.index_cast %c7_i32_195 : i32 to index
    %c0_196 = arith.constant 0 : index
    %c0_197 = arith.constant 0 : index
    %691 = vector.load %arg10[%690, %c0_196, %c0_197] : memref<8x8x384xf32, #tpu.memory_space<vmem>>, vector<1x8x384xf32>
    %692 = vector.shape_cast %691 : vector<1x8x384xf32> to vector<8x384xf32>
    %cst_198 = arith.constant dense<0.000000e+00> : vector<8x384xf32>
    %693 = tpu.matmul %681, %355, %cst_198 {dimension_numbers = #tpu.dot_dimension_numbers<[1], [0], [0], [1], [0, 0, 1, 1], [], []>} : vector<8x128xf32>, vector<128x384xf32>, vector<8x384xf32> -> vector<8x384xf32>
    %694 = vector.extract_strided_slice %692 {offsets = [0, 0], sizes = [8, 128], strides = [1, 1]} : vector<8x384xf32> to vector<8x128xf32>
    %695 = vector.extract_strided_slice %693 {offsets = [0, 0], sizes = [8, 128], strides = [1, 1]} : vector<8x384xf32> to vector<8x128xf32>
    %696 = arith.addf %694, %695 : vector<8x128xf32>
    %697 = arith.negf %696 : vector<8x128xf32>
    %698 = math.exp %697 : vector<8x128xf32>
    %cst_199 = arith.constant 1.000000e+00 : f32
    %699 = vector.broadcast %cst_199 : f32 to vector<8x128xf32>
    %700 = arith.addf %699, %698 : vector<8x128xf32>
    %701 = arith.divf %699, %700 : vector<8x128xf32>
    %702 = vector.extract_strided_slice %692 {offsets = [0, 128], sizes = [8, 128], strides = [1, 1]} : vector<8x384xf32> to vector<8x128xf32>
    %703 = vector.extract_strided_slice %693 {offsets = [0, 128], sizes = [8, 128], strides = [1, 1]} : vector<8x384xf32> to vector<8x128xf32>
    %704 = arith.addf %702, %703 : vector<8x128xf32>
    %705 = arith.negf %704 : vector<8x128xf32>
    %706 = math.exp %705 : vector<8x128xf32>
    %cst_200 = arith.constant 1.000000e+00 : f32
    %707 = vector.broadcast %cst_200 : f32 to vector<8x128xf32>
    %708 = arith.addf %707, %706 : vector<8x128xf32>
    %709 = arith.divf %707, %708 : vector<8x128xf32>
    %710 = vector.extract_strided_slice %692 {offsets = [0, 256], sizes = [8, 128], strides = [1, 1]} : vector<8x384xf32> to vector<8x128xf32>
    %711 = vector.extract_strided_slice %693 {offsets = [0, 256], sizes = [8, 128], strides = [1, 1]} : vector<8x384xf32> to vector<8x128xf32>
    %712 = vector.broadcast %359 : vector<1x128xf32> to vector<8x128xf32>
    %713 = arith.addf %711, %712 : vector<8x128xf32>
    %714 = arith.mulf %701, %713 : vector<8x128xf32>
    %715 = arith.addf %710, %714 : vector<8x128xf32>
    %716 = math.tanh %715 : vector<8x128xf32>
    %717 = arith.subf %681, %716 : vector<8x128xf32>
    %718 = arith.mulf %709, %717 : vector<8x128xf32>
    %719 = arith.addf %716, %718 : vector<8x128xf32>
    %720 = arith.index_cast %c7_i32_195 : i32 to index
    %c0_201 = arith.constant 0 : index
    %c0_202 = arith.constant 0 : index
    %721 = vector.load %arg2[%720, %c0_201, %c0_202] : memref<8x8x1xf32, #tpu.memory_space<vmem>>, vector<1x8x1xf32>
    %722 = vector.shape_cast %721 : vector<1x8x1xf32> to vector<8x1xf32>
    %cst_203 = arith.constant 0.000000e+00 : f32
    %723 = vector.broadcast %cst_203 : f32 to vector<8x1xf32>
    %724 = arith.cmpf one, %722, %723 : vector<8x1xf32>
    %725 = vector.shape_cast %724 : vector<8x1xi1> to vector<8x1xi1>
    %726 = vector.broadcast %725 : vector<8x1xi1> to vector<8x128xi1>
    %727 = arith.select %726, %719, %681 : vector<8x128xi1>, vector<8x128xf32>
    %728 = vector.shape_cast %724 : vector<8x1xi1> to vector<8x1xi1>
    %729 = vector.broadcast %728 : vector<8x1xi1> to vector<8x128xi1>
    %730 = vector.broadcast %cst_117 : f32 to vector<8x128xf32>
    %731 = arith.select %729, %719, %730 : vector<8x128xi1>, vector<8x128xf32>
    %732 = arith.index_cast %c7_i32_195 : i32 to index
    %c0_204 = arith.constant 0 : index
    %c0_205 = arith.constant 0 : index
    %733 = vector.load %arg9[%732, %c0_204, %c0_205] : memref<8x8x128xf32, #tpu.memory_space<vmem>>, vector<1x8x128xf32>
    %734 = vector.shape_cast %733 : vector<1x8x128xf32> to vector<8x128xf32>
    %735 = vector.shape_cast %731 : vector<8x128xf32> to vector<1x8x128xf32>
    tpu.vector_store %arg9[%732, %c0_204, %c0_205], %735 {strides = array<i32>} : memref<8x8x128xf32, #tpu.memory_space<vmem>>, vector<1x8x128xf32>,
    %c8_i32_206 = arith.constant 8 : i32
    %c0_207 = arith.constant 0 : index
    %c0_208 = arith.constant 0 : index
    %c0_209 = arith.constant 0 : index
    %736 = vector.load %arg9[%c0_207, %c0_208, %c0_209] : memref<8x8x128xf32, #tpu.memory_space<vmem>>, vector<8x8x128xf32>
    %737 = vector.shape_cast %736 : vector<8x8x128xf32> to vector<64x128xf32>
    %c0_210 = arith.constant 0 : index
    %c0_211 = arith.constant 0 : index
    %738 = vector.load %arg7[%c0_210, %c0_211] : memref<128x128xf32, #tpu.memory_space<vmem>>, vector<128x128xf32>
    %cst_212 = arith.constant dense<0.000000e+00> : vector<64x128xf32>
    %739 = tpu.matmul %737, %738, %cst_212 {dimension_numbers = #tpu.dot_dimension_numbers<[1], [0], [0], [1], [0, 0, 1, 1], [], []>} : vector<64x128xf32>, vector<128x128xf32>, vector<64x128xf32> -> vector<64x128xf32>
    %c0_213 = arith.constant 0 : index
    %c0_214 = arith.constant 0 : index
    %740 = vector.load %arg8[%c0_213, %c0_214] : memref<1x128xf32, #tpu.memory_space<vmem>>, vector<1x128xf32>
    %741 = vector.broadcast %740 : vector<1x128xf32> to vector<64x128xf32>
    %742 = arith.addf %739, %741 : vector<64x128xf32>
    %743 = arith.negf %742 : vector<64x128xf32>
    %744 = math.exp %743 : vector<64x128xf32>
    %cst_215 = arith.constant 1.000000e+00 : f32
    %745 = vector.broadcast %cst_215 : f32 to vector<64x128xf32>
    %746 = arith.addf %745, %744 : vector<64x128xf32>
    %747 = arith.divf %745, %746 : vector<64x128xf32>
    %748 = vector.shape_cast %747 : vector<64x128xf32> to vector<8x8x128xf32>
    %c0_216 = arith.constant 0 : index
    %c0_217 = arith.constant 0 : index
    %c0_218 = arith.constant 0 : index
    %749 = vector.load %arg9[%c0_216, %c0_217, %c0_218] : memref<8x8x128xf32, #tpu.memory_space<vmem>>, vector<8x8x128xf32>
    tpu.vector_store %arg9[%c0_216, %c0_217, %c0_218], %748 {strides = array<i32>} : memref<8x8x128xf32, #tpu.memory_space<vmem>>, vector<8x8x128xf32>,
    return
  }
  func.func @transform_0(%arg0: i32) -> (i32, i32, i32) {
    %c0_i32 = arith.constant 0 : i32
    %c0_i32_0 = arith.constant 0 : i32
    %c0_i32_1 = arith.constant 0 : i32
    return %c0_i32, %arg0, %c0_i32_0 : i32, i32, i32
  }
  func.func @transform_1(%arg0: i32) -> (i32, i32, i32) {
    %c0_i32 = arith.constant 0 : i32
    %c0_i32_0 = arith.constant 0 : i32
    %c0_i32_1 = arith.constant 0 : i32
    return %c0_i32, %arg0, %c0_i32_0 : i32, i32, i32
  }
  func.func @transform_2(%arg0: i32) -> (i32, i32, i32) {
    %c0_i32 = arith.constant 0 : i32
    %c0_i32_0 = arith.constant 0 : i32
    %c0_i32_1 = arith.constant 0 : i32
    %c0_i32_2 = arith.constant 0 : i32
    return %c0_i32, %c0_i32_0, %c0_i32_1 : i32, i32, i32
  }
  func.func @transform_3(%arg0: i32) -> (i32, i32, i32) {
    %c0_i32 = arith.constant 0 : i32
    %c0_i32_0 = arith.constant 0 : i32
    %c0_i32_1 = arith.constant 0 : i32
    %c0_i32_2 = arith.constant 0 : i32
    return %c0_i32, %c0_i32_0, %c0_i32_1 : i32, i32, i32
  }
  func.func @transform_4(%arg0: i32) -> (i32, i32, i32) {
    %c0_i32 = arith.constant 0 : i32
    %c0_i32_0 = arith.constant 0 : i32
    %c0_i32_1 = arith.constant 0 : i32
    %c0_i32_2 = arith.constant 0 : i32
    return %c0_i32, %c0_i32_0, %c0_i32_1 : i32, i32, i32
  }
  func.func @transform_5(%arg0: i32) -> (i32, i32, i32) {
    %c0_i32 = arith.constant 0 : i32
    %c0_i32_0 = arith.constant 0 : i32
    %c0_i32_1 = arith.constant 0 : i32
    %c0_i32_2 = arith.constant 0 : i32
    return %c0_i32, %c0_i32_0, %c0_i32_1 : i32, i32, i32
  }
  func.func @transform_6(%arg0: i32) -> (i32, i32) {
    %c0_i32 = arith.constant 0 : i32
    %c0_i32_0 = arith.constant 0 : i32
    %c0_i32_1 = arith.constant 0 : i32
    return %c0_i32, %c0_i32_0 : i32, i32
  }
  func.func @transform_7(%arg0: i32) -> (i32, i32) {
    %c0_i32 = arith.constant 0 : i32
    %c0_i32_0 = arith.constant 0 : i32
    %c0_i32_1 = arith.constant 0 : i32
    return %c0_i32, %c0_i32_0 : i32, i32
  }
  func.func @transform_8(%arg0: i32) -> (i32, i32, i32) {
    %c0_i32 = arith.constant 0 : i32
    %c0_i32_0 = arith.constant 0 : i32
    %c0_i32_1 = arith.constant 0 : i32
    return %c0_i32, %arg0, %c0_i32_0 : i32, i32, i32
  }
}

</mosaic_0001>

<llo_original>
// kernel: tpu_custom_call.1
$region0: #{tpu_custom_call.1}
  #allocation0 [shape = 'u32[]', space=smem, size = 0x4, offset = 0x4, fixed_abs, tag = 'smem constant byte address 0x4 - core index']
  #allocation1 [shape = 'u32[72,128]{1,0:T(1,128)}', space=vmem, size = 0x9000, scoped, tag = 'internal scratch']
  #allocation2 [shape = 'f32[8,8,384]{2,1,0:T(8,128)}', space=vmem, size = 0x18000, scoped, tag = 'scratch operand']
  %s0 = inlined_call_operand.vmem [shape: f32[8,8,128], index: 0, kind: input, shape index: {}]
  %s1 = inlined_call_operand.vmem [shape: f32[8,8,1], index: 1, kind: input, shape index: {}]
  %s2 = inlined_call_operand.hbm [shape: f32[2,128,384], index: 2, kind: input, shape index: {}]
  %s3 = inlined_call_operand.hbm [shape: f32[2,128,384], index: 3, kind: input, shape index: {}]
  %s4 = inlined_call_operand.vmem [shape: f32[2,1,384], index: 4, kind: input, shape index: {}]
  %s5 = inlined_call_operand.vmem [shape: f32[2,1,128], index: 5, kind: input, shape index: {}]
  %s6 = inlined_call_operand.hbm [shape: f32[128,128], index: 6, kind: input, shape index: {}]
  %s7 = inlined_call_operand.vmem [shape: f32[1,128], index: 7, kind: input, shape index: {}]
  %s8 = inlined_call_operand.hbm [shape: f32[8,8,128], index: 8, kind: output, shape index: {}]
  %s9 = sld [smem:[#allocation0]]
  $region54: #{tpu_custom_call.1} parent=0
    _
  %s11 = ssub.s32 1, %s9
  %s12 = scalar_select 0, %s11, %s9
  $region1: #{tpu_custom_call.1} parent=0
    #allocation3 [shape = 'u8[393216]{0}', space=vmem, size = 0x60000, scoped, tag = 'input window, operand 2, single buffered']
    #allocation4 [shape = 's32[1]{0}', space=sflag, size = 0x4, scoped, tag = 'scoped memory for tpu_custom_call.1']
    #allocation5 [shape = 's32[1]{0}', space=sflag, size = 0x4, scoped, tag = 'scoped memory for tpu_custom_call.1']
    #allocation6 [shape = 'u8[393216]{0}', space=vmem, size = 0x60000, scoped, tag = 'input window, operand 3, single buffered']
    #allocation7 [shape = 's32[1]{0}', space=sflag, size = 0x4, scoped, tag = 'scoped memory for tpu_custom_call.1']
    #allocation8 [shape = 'u8[65536]{0}', space=vmem, size = 0x10000, scoped, tag = 'input window, operand 6, single buffered']
    #allocation9 [shape = 'u8[32768]{0}', space=vmem, size = 0x8000, scoped, tag = 'output window, operand 0, single buffered']
    %13 = vsyncpa [#allocation4], 0
    %14 = vsyncpa [#allocation7], 0
    %15 = vsyncpa [#allocation5], 0
    // Predicated region
    $region2: #{tpu_custom_call.1} parent=1 // pred_check
      _
    $region3: #{tpu_custom_call.1} parent=1 // pred_check_branch
      %17 = sbr.rel (0) target = $region5
    $region4: #{tpu_custom_call.1} parent=1 // pred_region
      _
    $region5: #{tpu_custom_call.1} parent=1 // pred_fallthru
      _
    // Predicated region
    $region6: #{tpu_custom_call.1} parent=1 // pred_check
      _
    $region7: #{tpu_custom_call.1} parent=1 // pred_check_branch
      %19 = sbr.rel (0) target = $region9
    $region8: #{tpu_custom_call.1} parent=1 // pred_region
      _
    $region9: #{tpu_custom_call.1} parent=1 // pred_fallthru
      _
    // Predicated region
    $region10: #{tpu_custom_call.1} parent=1 // pred_check
      _
    $region11: #{tpu_custom_call.1} parent=1 // pred_check_branch
      %21 = sbr.rel (0) target = $region13
    $region12: #{tpu_custom_call.1} parent=1 // pred_region
      %23 = vsyncadd [#allocation4], 0
      %s24 = sshll.u32 %s2, 4
      %s25 = int_to_ptr.hbm [resolvable:$true] %s24
      %s26 = sshll.u32 [#allocation3], 4
      %s27 = int_to_ptr.vmem [resolvable:$true] %s26
      %32 = dma.hbm_to_vmem [thread:$0]  %s25, 12288, %s27, [#allocation4], 384, 384, 24
    $region13: #{tpu_custom_call.1} parent=1 // pred_fallthru
      _
    // Predicated region
    $region14: #{tpu_custom_call.1} parent=1 // pred_check
      _
    $region15: #{tpu_custom_call.1} parent=1 // pred_check_branch
      %34 = sbr.rel (0) target = $region17
    $region16: #{tpu_custom_call.1} parent=1 // pred_region
      %36 = vsyncadd [#allocation7], 0
      %s37 = sshll.u32 %s3, 4
      %s38 = int_to_ptr.hbm [resolvable:$true] %s37
      %s39 = sshll.u32 [#allocation6], 4
      %s40 = int_to_ptr.vmem [resolvable:$true] %s39
      %45 = dma.hbm_to_vmem [thread:$0]  %s38, 12288, %s40, [#allocation7], 384, 384, 24
    $region17: #{tpu_custom_call.1} parent=1 // pred_fallthru
      _
    // Predicated region
    $region18: #{tpu_custom_call.1} parent=1 // pred_check
      _
    $region19: #{tpu_custom_call.1} parent=1 // pred_check_branch
      %47 = sbr.rel (0) target = $region21
    $region20: #{tpu_custom_call.1} parent=1 // pred_region
      _
    $region21: #{tpu_custom_call.1} parent=1 // pred_fallthru
      _
    // Predicated region
    $region22: #{tpu_custom_call.1} parent=1 // pred_check
      _
    $region23: #{tpu_custom_call.1} parent=1 // pred_check_branch
      %49 = sbr.rel (0) target = $region25
    $region24: #{tpu_custom_call.1} parent=1 // pred_region
      _
    $region25: #{tpu_custom_call.1} parent=1 // pred_fallthru
      _
    // Predicated region
    $region26: #{tpu_custom_call.1} parent=1 // pred_check
      _
    $region27: #{tpu_custom_call.1} parent=1 // pred_check_branch
      %51 = sbr.rel (0) target = $region29
    $region28: #{tpu_custom_call.1} parent=1 // pred_region
      %53 = vsyncadd [#allocation7], 0
      %s54 = sshll.u32 %s6, 4
      %s55 = int_to_ptr.hbm [resolvable:$true] %s54
      %s56 = sshll.u32 [#allocation8], 4
      %s57 = int_to_ptr.vmem [resolvable:$true] %s56
      %62 = dma.hbm_to_vmem [thread:$0]  %s55, 2048, %s57, [#allocation7], 128, 128, 8
    $region29: #{tpu_custom_call.1} parent=1 // pred_fallthru
      _
    // Predicated region
    $region30: #{tpu_custom_call.1} parent=1 // pred_check
      _
    $region31: #{tpu_custom_call.1} parent=1 // pred_check_branch
      %64 = sbr.rel (0) target = $region33
    $region32: #{tpu_custom_call.1} parent=1 // pred_region
      _
    $region33: #{tpu_custom_call.1} parent=1 // pred_fallthru
      _
    // Predicated region
    $region34: #{tpu_custom_call.1} parent=1 // pred_check
      _
    $region35: #{tpu_custom_call.1} parent=1 // pred_check_branch
      %66 = sbr.rel (0) target = $region37
    $region36: #{tpu_custom_call.1} parent=1 // pred_region
      %68 = dma.done [#allocation4], 12288
    $region37: #{tpu_custom_call.1} parent=1 // pred_fallthru
      _
    // Predicated region
    $region38: #{tpu_custom_call.1} parent=1 // pred_check
      _
    $region39: #{tpu_custom_call.1} parent=1 // pred_check_branch
      %70 = sbr.rel (0) target = $region41
    $region40: #{tpu_custom_call.1} parent=1 // pred_region
      %72 = dma.done [#allocation7], 12288
    $region41: #{tpu_custom_call.1} parent=1 // pred_fallthru
      _
    // Predicated region
    $region42: #{tpu_custom_call.1} parent=1 // pred_check
      _
    $region43: #{tpu_custom_call.1} parent=1 // pred_check_branch
      %74 = sbr.rel (0) target = $region45
    $region44: #{tpu_custom_call.1} parent=1 // pred_region
      %76 = dma.done [#allocation7], 2048
    $region45: #{tpu_custom_call.1} parent=1 // pred_fallthru
      _
    %v77 = vld [vmem:[#allocation3] sm:$0xff]
    %v78 = vld [vmem:[#allocation3 + $0x8] sm:$0xff]
    %v79 = vld [vmem:[#allocation3 + $0x10] sm:$0xff]
    %v80 = vld [vmem:[#allocation3 + $0x18] sm:$0xff]
    %v81 = vld [vmem:[#allocation3 + $0x20] sm:$0xff]
    %v82 = vld [vmem:[#allocation3 + $0x28] sm:$0xff]
    %v83 = vld [vmem:[#allocation3 + $0x30] sm:$0xff]
    %v84 = vld [vmem:[#allocation3 + $0x38] sm:$0xff]
    %v85 = vld [vmem:[#allocation3 + $0x40] sm:$0xff]
    %v86 = vld [vmem:[#allocation3 + $0x48] sm:$0xff]
    %v87 = vld [vmem:[#allocation3 + $0x50] sm:$0xff]
    %v88 = vld [vmem:[#allocation3 + $0x58] sm:$0xff]
    %v89 = vld [vmem:[#allocation3 + $0x60] sm:$0xff]
    %v90 = vld [vmem:[#allocation3 + $0x68] sm:$0xff]
    %v91 = vld [vmem:[#allocation3 + $0x70] sm:$0xff]
    %v92 = vld [vmem:[#allocation3 + $0x78] sm:$0xff]
    %v93 = vld [vmem:[#allocation3 + $0x80] sm:$0xff]
    %v94 = vld [vmem:[#allocation3 + $0x88] sm:$0xff]
    %v95 = vld [vmem:[#allocation3 + $0x90] sm:$0xff]
    %v96 = vld [vmem:[#allocation3 + $0x98] sm:$0xff]
    %v97 = vld [vmem:[#allocation3 + $0xa0] sm:$0xff]
    %v98 = vld [vmem:[#allocation3 + $0xa8] sm:$0xff]
    %v99 = vld [vmem:[#allocation3 + $0xb0] sm:$0xff]
    %v100 = vld [vmem:[#allocation3 + $0xb8] sm:$0xff]
    %v101 = vld [vmem:[#allocation3 + $0xc0] sm:$0xff]
    %v102 = vld [vmem:[#allocation3 + $0xc8] sm:$0xff]
    %v103 = vld [vmem:[#allocation3 + $0xd0] sm:$0xff]
    %v104 = vld [vmem:[#allocation3 + $0xd8] sm:$0xff]
    %v105 = vld [vmem:[#allocation3 + $0xe0] sm:$0xff]
    %v106 = vld [vmem:[#allocation3 + $0xe8] sm:$0xff]
    %v107 = vld [vmem:[#allocation3 + $0xf0] sm:$0xff]
    %v108 = vld [vmem:[#allocation3 + $0xf8] sm:$0xff]
    %v109 = vld [vmem:[#allocation3 + $0x100] sm:$0xff]
    %v110 = vld [vmem:[#allocation3 + $0x108] sm:$0xff]
    %v111 = vld [vmem:[#allocation3 + $0x110] sm:$0xff]
    %v112 = vld [vmem:[#allocation3 + $0x118] sm:$0xff]
    %v113 = vld [vmem:[#allocation3 + $0x120] sm:$0xff]
    %v114 = vld [vmem:[#allocation3 + $0x128] sm:$0xff]
    %v115 = vld [vmem:[#allocation3 + $0x130] sm:$0xff]
    %v116 = vld [vmem:[#allocation3 + $0x138] sm:$0xff]
    %v117 = vld [vmem:[#allocation3 + $0x140] sm:$0xff]
    %v118 = vld [vmem:[#allocation3 + $0x148] sm:$0xff]
    %v119 = vld [vmem:[#allocation3 + $0x150] sm:$0xff]
    %v120 = vld [vmem:[#allocation3 + $0x158] sm:$0xff]
    %v121 = vld [vmem:[#allocation3 + $0x160] sm:$0xff]
    %v122 = vld [vmem:[#allocation3 + $0x168] sm:$0xff]
    %v123 = vld [vmem:[#allocation3 + $0x170] sm:$0xff]
    %v124 = vld [vmem:[#allocation3 + $0x178] sm:$0xff]
    %v125 = vld [vmem:[#allocation6] sm:$0xff]
    %v126 = vld [vmem:[#allocation6 + $0x8] sm:$0xff]
    %v127 = vld [vmem:[#allocation6 + $0x10] sm:$0xff]
    %v128 = vld [vmem:[#allocation6 + $0x18] sm:$0xff]
    %v129 = vld [vmem:[#allocation6 + $0x20] sm:$0xff]
    %v130 = vld [vmem:[#allocation6 + $0x28] sm:$0xff]
    %v131 = vld [vmem:[#allocation6 + $0x30] sm:$0xff]
    %v132 = vld [vmem:[#allocation6 + $0x38] sm:$0xff]
    %v133 = vld [vmem:[#allocation6 + $0x40] sm:$0xff]
    %v134 = vld [vmem:[#allocation6 + $0x48] sm:$0xff]
    %v135 = vld [vmem:[#allocation6 + $0x50] sm:$0xff]
    %v136 = vld [vmem:[#allocation6 + $0x58] sm:$0xff]
    %v137 = vld [vmem:[#allocation6 + $0x60] sm:$0xff]
    %v138 = vld [vmem:[#allocation6 + $0x68] sm:$0xff]
    %v139 = vld [vmem:[#allocation6 + $0x70] sm:$0xff]
    %v140 = vld [vmem:[#allocation6 + $0x78] sm:$0xff]
    %v141 = vld [vmem:[#allocation6 + $0x80] sm:$0xff]
    %v142 = vld [vmem:[#allocation6 + $0x88] sm:$0xff]
    %v143 = vld [vmem:[#allocation6 + $0x90] sm:$0xff]
    %v144 = vld [vmem:[#allocation6 + $0x98] sm:$0xff]
    %v145 = vld [vmem:[#allocation6 + $0xa0] sm:$0xff]
    %v146 = vld [vmem:[#allocation6 + $0xa8] sm:$0xff]
    %v147 = vld [vmem:[#allocation6 + $0xb0] sm:$0xff]
    %v148 = vld [vmem:[#allocation6 + $0xb8] sm:$0xff]
    %v149 = vld [vmem:[#allocation6 + $0xc0] sm:$0xff]
    %v150 = vld [vmem:[#allocation6 + $0xc8] sm:$0xff]
    %v151 = vld [vmem:[#allocation6 + $0xd0] sm:$0xff]
    %v152 = vld [vmem:[#allocation6 + $0xd8] sm:$0xff]
    %v153 = vld [vmem:[#allocation6 + $0xe0] sm:$0xff]
    %v154 = vld [vmem:[#allocation6 + $0xe8] sm:$0xff]
    %v155 = vld [vmem:[#allocation6 + $0xf0] sm:$0xff]
    %v156 = vld [vmem:[#allocation6 + $0xf8] sm:$0xff]
    %v157 = vld [vmem:[#allocation6 + $0x100] sm:$0xff]
    %v158 = vld [vmem:[#allocation6 + $0x108] sm:$0xff]
    %v159 = vld [vmem:[#allocation6 + $0x110] sm:$0xff]
    %v160 = vld [vmem:[#allocation6 + $0x118] sm:$0xff]
    %v161 = vld [vmem:[#allocation6 + $0x120] sm:$0xff]
    %v162 = vld [vmem:[#allocation6 + $0x128] sm:$0xff]
    %v163 = vld [vmem:[#allocation6 + $0x130] sm:$0xff]
    %v164 = vld [vmem:[#allocation6 + $0x138] sm:$0xff]
    %v165 = vld [vmem:[#allocation6 + $0x140] sm:$0xff]
    %v166 = vld [vmem:[#allocation6 + $0x148] sm:$0xff]
    %v167 = vld [vmem:[#allocation6 + $0x150] sm:$0xff]
    %v168 = vld [vmem:[#allocation6 + $0x158] sm:$0xff]
    %v169 = vld [vmem:[#allocation6 + $0x160] sm:$0xff]
    %v170 = vld [vmem:[#allocation6 + $0x168] sm:$0xff]
    %v171 = vld [vmem:[#allocation6 + $0x170] sm:$0xff]
    %v172 = vld [vmem:[#allocation6 + $0x178] sm:$0xff]
    %v173 = vld [vmem:[%s4] sm:$0x7]
    %v174 = vld [vmem:[%s5] sm:$0x1]
    %v175 = vld [vmem:[%s0] sm:$0xff]
    %v176 = vld [vmem:[%s0 + $0x8] sm:$0xff]
    %v177 = vld [vmem:[%s0 + $0x10] sm:$0xff]
    %v178 = vld [vmem:[%s0 + $0x18] sm:$0xff]
    %v179 = vld [vmem:[%s0 + $0x20] sm:$0xff]
    %v180 = vld [vmem:[%s0 + $0x28] sm:$0xff]
    %v181 = vld [vmem:[%s0 + $0x30] sm:$0xff]
    %v182 = vld [vmem:[%s0 + $0x38] sm:$0xff]
    %v184 = vperm.slane %v173, 0
    %v185 = vperm.slane %v173, 1
    %v186 = vperm.slane %v173, 2
    %190 = vmatpush.msra.mxu0 %v122
    %191 = vmatpush.msra.mxu0 %v119
    %192 = vmatpush.msra.mxu0 %v116
    %193 = vmatpush.msra.mxu0 %v113
    %194 = vmatpush.msra.mxu0 %v110
    %195 = vmatpush.msra.mxu0 %v107
    %196 = vmatpush.msra.mxu0 %v104
    %197 = vmatpush.msra.mxu0 %v101
    %198 = vmatpush.msra.mxu0 %v98
    %199 = vmatpush.msra.mxu0 %v95
    %200 = vmatpush.msra.mxu0 %v92
    %201 = vmatpush.msra.mxu0 %v89
    %202 = vmatpush.msra.mxu0 %v86
    %203 = vmatpush.msra.mxu0 %v83
    %204 = vmatpush.msra.mxu0 %v80
    %205 = vmatpush.msra.mxu0 %v77
    %206 = vmatmul.f32.gmra.mxu0 %v175
    %v207 = vpop.f32.mrf.mxu0
    %v208 = vadd.f32 %v184, %v207
    %209 = vmatmul.f32.gmra.mxu0 %v176
    %v210 = vpop.f32.mrf.mxu0
    %v211 = vadd.f32 %v184, %v210
    %212 = vmatmul.f32.gmra.mxu0 %v177
    %v213 = vpop.f32.mrf.mxu0
    %v214 = vadd.f32 %v184, %v213
    %215 = vmatmul.f32.gmra.mxu0 %v178
    %v216 = vpop.f32.mrf.mxu0
    %v217 = vadd.f32 %v184, %v216
    %218 = vmatmul.f32.gmra.mxu0 %v179
    %v219 = vpop.f32.mrf.mxu0
    %v220 = vadd.f32 %v184, %v219
    %221 = vmatmul.f32.gmra.mxu0 %v180
    %v222 = vpop.f32.mrf.mxu0
    %v223 = vadd.f32 %v184, %v222
    %224 = vmatmul.f32.gmra.mxu0 %v181
    %v225 = vpop.f32.mrf.mxu0
    %v226 = vadd.f32 %v184, %v225
    %227 = vmatmul.f32.gmra.mxu0 %v182
    %v228 = vpop.f32.mrf.mxu0
    %v229 = vadd.f32 %v184, %v228
    %230 = vdwg.mxu0
    %231 = vmatpush.msra.mxu0 %v123
    %232 = vmatpush.msra.mxu0 %v120
    %233 = vmatpush.msra.mxu0 %v117
    %234 = vmatpush.msra.mxu0 %v114
    %235 = vmatpush.msra.mxu0 %v111
    %236 = vmatpush.msra.mxu0 %v108
    %237 = vmatpush.msra.mxu0 %v105
    %238 = vmatpush.msra.mxu0 %v102
    %239 = vmatpush.msra.mxu0 %v99
    %240 = vmatpush.msra.mxu0 %v96
    %241 = vmatpush.msra.mxu0 %v93
    %242 = vmatpush.msra.mxu0 %v90
    %243 = vmatpush.msra.mxu0 %v87
    %244 = vmatpush.msra.mxu0 %v84
    %245 = vmatpush.msra.mxu0 %v81
    %246 = vmatpush.msra.mxu0 %v78
    %247 = vmatmul.f32.gmra.mxu0 %v175
    %v248 = vpop.f32.mrf.mxu0
    %v249 = vadd.f32 %v185, %v248
    %250 = vmatmul.f32.gmra.mxu0 %v176
    %v251 = vpop.f32.mrf.mxu0
    %v252 = vadd.f32 %v185, %v251
    %253 = vmatmul.f32.gmra.mxu0 %v177
    %v254 = vpop.f32.mrf.mxu0
    %v255 = vadd.f32 %v185, %v254
    %256 = vmatmul.f32.gmra.mxu0 %v178
    %v257 = vpop.f32.mrf.mxu0
    %v258 = vadd.f32 %v185, %v257
    %259 = vmatmul.f32.gmra.mxu0 %v179
    %v260 = vpop.f32.mrf.mxu0
    %v261 = vadd.f32 %v185, %v260
    %262 = vmatmul.f32.gmra.mxu0 %v180
    %v263 = vpop.f32.mrf.mxu0
    %v264 = vadd.f32 %v185, %v263
    %265 = vmatmul.f32.gmra.mxu0 %v181
    %v266 = vpop.f32.mrf.mxu0
    %v267 = vadd.f32 %v185, %v266
    %268 = vmatmul.f32.gmra.mxu0 %v182
    %v269 = vpop.f32.mrf.mxu0
    %v270 = vadd.f32 %v185, %v269
    %271 = vdwg.mxu0
    %272 = vmatpush.msra.mxu0 %v124
    %273 = vmatpush.msra.mxu0 %v121
    %274 = vmatpush.msra.mxu0 %v118
    %275 = vmatpush.msra.mxu0 %v115
    %276 = vmatpush.msra.mxu0 %v112
    %277 = vmatpush.msra.mxu0 %v109
    %278 = vmatpush.msra.mxu0 %v106
    %279 = vmatpush.msra.mxu0 %v103
    %280 = vmatpush.msra.mxu0 %v100
    %281 = vmatpush.msra.mxu0 %v97
    %282 = vmatpush.msra.mxu0 %v94
    %283 = vmatpush.msra.mxu0 %v91
    %284 = vmatpush.msra.mxu0 %v88
    %285 = vmatpush.msra.mxu0 %v85
    %286 = vmatpush.msra.mxu0 %v82
    %287 = vmatpush.msra.mxu0 %v79
    %288 = vmatmul.f32.gmra.mxu0 %v175
    %v289 = vpop.f32.mrf.mxu0
    %v290 = vadd.f32 %v186, %v289
    %291 = vmatmul.f32.gmra.mxu0 %v176
    %v292 = vpop.f32.mrf.mxu0
    %v293 = vadd.f32 %v186, %v292
    %294 = vmatmul.f32.gmra.mxu0 %v177
    %v295 = vpop.f32.mrf.mxu0
    %v296 = vadd.f32 %v186, %v295
    %297 = vmatmul.f32.gmra.mxu0 %v178
    %v298 = vpop.f32.mrf.mxu0
    %v299 = vadd.f32 %v186, %v298
    %300 = vmatmul.f32.gmra.mxu0 %v179
    %v301 = vpop.f32.mrf.mxu0
    %v302 = vadd.f32 %v186, %v301
    %303 = vmatmul.f32.gmra.mxu0 %v180
    %v304 = vpop.f32.mrf.mxu0
    %v305 = vadd.f32 %v186, %v304
    %306 = vmatmul.f32.gmra.mxu0 %v181
    %v307 = vpop.f32.mrf.mxu0
    %v308 = vadd.f32 %v186, %v307
    %309 = vmatmul.f32.gmra.mxu0 %v182
    %v310 = vpop.f32.mrf.mxu0
    %v311 = vadd.f32 %v186, %v310
    %312 = vdwg.mxu0
    %313 = vst [vmem:[#allocation2] sm:$0xff] %v208
    %314 = vst [vmem:[#allocation2 + $0x8] sm:$0xff] %v249
    %315 = vst [vmem:[#allocation2 + $0x10] sm:$0xff] %v290
    %316 = vst [vmem:[#allocation2 + $0x18] sm:$0xff] %v211
    %317 = vst [vmem:[#allocation2 + $0x20] sm:$0xff] %v252
    %318 = vst [vmem:[#allocation2 + $0x28] sm:$0xff] %v293
    %319 = vst [vmem:[#allocation2 + $0x30] sm:$0xff] %v214
    %320 = vst [vmem:[#allocation2 + $0x38] sm:$0xff] %v255
    %321 = vst [vmem:[#allocation2 + $0x40] sm:$0xff] %v296
    %322 = vst [vmem:[#allocation2 + $0x48] sm:$0xff] %v217
    %323 = vst [vmem:[#allocation2 + $0x50] sm:$0xff] %v258
    %324 = vst [vmem:[#allocation2 + $0x58] sm:$0xff] %v299
    %325 = vst [vmem:[#allocation2 + $0x60] sm:$0xff] %v220
    %326 = vst [vmem:[#allocation2 + $0x68] sm:$0xff] %v261
    %327 = vst [vmem:[#allocation2 + $0x70] sm:$0xff] %v302
    %328 = vst [vmem:[#allocation2 + $0x78] sm:$0xff] %v223
    %329 = vst [vmem:[#allocation2 + $0x80] sm:$0xff] %v264
    %330 = vst [vmem:[#allocation2 + $0x88] sm:$0xff] %v305
    %331 = vst [vmem:[#allocation2 + $0x90] sm:$0xff] %v226
    %332 = vst [vmem:[#allocation2 + $0x98] sm:$0xff] %v267
    %333 = vst [vmem:[#allocation2 + $0xa0] sm:$0xff] %v308
    %334 = vst [vmem:[#allocation2 + $0xa8] sm:$0xff] %v229
    %335 = vst [vmem:[#allocation2 + $0xb0] sm:$0xff] %v270
    %336 = vst [vmem:[#allocation2 + $0xb8] sm:$0xff] %v311
    %v337 = vld [vmem:[#allocation2] sm:$0xff]
    %v338 = vld [vmem:[#allocation2 + $0x8] sm:$0xff]
    %v339 = vld [vmem:[#allocation2 + $0x10] sm:$0xff]
    %340 = vmatpush.msra.mxu0 %v170
    %341 = vmatpush.msra.mxu0 %v167
    %342 = vmatpush.msra.mxu0 %v164
    %343 = vmatpush.msra.mxu0 %v161
    %344 = vmatpush.msra.mxu0 %v158
    %345 = vmatpush.msra.mxu0 %v155
    %346 = vmatpush.msra.mxu0 %v152
    %347 = vmatpush.msra.mxu0 %v149
    %348 = vmatpush.msra.mxu0 %v146
    %349 = vmatpush.msra.mxu0 %v143
    %350 = vmatpush.msra.mxu0 %v140
    %351 = vmatpush.msra.mxu0 %v137
    %352 = vmatpush.msra.mxu0 %v134
    %353 = vmatpush.msra.mxu0 %v131
    %354 = vmatpush.msra.mxu0 %v128
    %355 = vmatpush.msra.mxu0 %v125
    %356 = vmatmul.f32.gmra.mxu0 0.0
    %v357 = vpop.f32.mrf.mxu0
    %v358 = vadd.f32 0.0, %v357
    %359 = vdwg.mxu0
    %360 = vmatpush.msra.mxu0 %v171
    %361 = vmatpush.msra.mxu0 %v168
    %362 = vmatpush.msra.mxu0 %v165
    %363 = vmatpush.msra.mxu0 %v162
    %364 = vmatpush.msra.mxu0 %v159
    %365 = vmatpush.msra.mxu0 %v156
    %366 = vmatpush.msra.mxu0 %v153
    %367 = vmatpush.msra.mxu0 %v150
    %368 = vmatpush.msra.mxu0 %v147
    %369 = vmatpush.msra.mxu0 %v144
    %370 = vmatpush.msra.mxu0 %v141
    %371 = vmatpush.msra.mxu0 %v138
    %372 = vmatpush.msra.mxu0 %v135
    %373 = vmatpush.msra.mxu0 %v132
    %374 = vmatpush.msra.mxu0 %v129
    %375 = vmatpush.msra.mxu0 %v126
    %376 = vmatmul.f32.gmra.mxu0 0.0
    %v377 = vpop.f32.mrf.mxu0
    %v378 = vadd.f32 0.0, %v377
    %379 = vdwg.mxu0
    %380 = vmatpush.msra.mxu0 %v172
    %381 = vmatpush.msra.mxu0 %v169
    %382 = vmatpush.msra.mxu0 %v166
    %383 = vmatpush.msra.mxu0 %v163
    %384 = vmatpush.msra.mxu0 %v160
    %385 = vmatpush.msra.mxu0 %v157
    %386 = vmatpush.msra.mxu0 %v154
    %387 = vmatpush.msra.mxu0 %v151
    %388 = vmatpush.msra.mxu0 %v148
    %389 = vmatpush.msra.mxu0 %v145
    %390 = vmatpush.msra.mxu0 %v142
    %391 = vmatpush.msra.mxu0 %v139
    %392 = vmatpush.msra.mxu0 %v136
    %393 = vmatpush.msra.mxu0 %v133
    %394 = vmatpush.msra.mxu0 %v130
    %395 = vmatpush.msra.mxu0 %v127
    %396 = vmatmul.f32.gmra.mxu0 0.0
    %v397 = vpop.f32.mrf.mxu0
    %v398 = vadd.f32 0.0, %v397
    %399 = vdwg.mxu0
    %v400 = vadd.f32 %v337, %v358
    %v401 = vxor.u32 %v400, 2147483648
    %v402 = vmul.f32 %v401, 1.442695
    %v403 = vpow.pop %v402
    %v404 = vadd.f32 %v403, 1.0
    %v405 = vrcp.pop %v404
    %v406 = vmul.f32 %v404, %v405
    %v407 = vsub.f32 1.0, %v406
    %v408 = vmul.f32 %v405, %v407
    %v409 = vadd.f32 %v405, %v408
    %vm410 = vweird.f32 %v404
    %vm411 = vweird.f32 %v405
    %vm412 = vmor %vm410, %vm411
    %v413 = vsel %vm412, %v405, %v409
    %v414 = vand.u32 2147483647, %v404
    %vm415 = vcmp.eq.f32.partialorder %v414, 8.507059e+37
    %v416 = vand.u32 %v404, 2147483648
    %v417 = vor.u32 1.1754944e-38, %v416
    %v418 = vsel %vm415, %v417, %v413
    %v419 = vmul.f32 1.0, %v418
    %v420 = vadd.f32 %v338, %v378
    %v421 = vxor.u32 %v420, 2147483648
    %v422 = vmul.f32 %v421, 1.442695
    %v423 = vpow.pop %v422
    %v424 = vadd.f32 %v423, 1.0
    %v425 = vrcp.pop %v424
    %v426 = vmul.f32 %v424, %v425
    %v427 = vsub.f32 1.0, %v426
    %v428 = vmul.f32 %v425, %v427
    %v429 = vadd.f32 %v425, %v428
    %vm430 = vweird.f32 %v424
    %vm431 = vweird.f32 %v425
    %vm432 = vmor %vm430, %vm431
    %v433 = vsel %vm432, %v425, %v429
    %v434 = vand.u32 2147483647, %v424
    %vm435 = vcmp.eq.f32.partialorder %v434, 8.507059e+37
    %v436 = vand.u32 %v424, 2147483648
    %v437 = vor.u32 1.1754944e-38, %v436
    %v438 = vsel %vm435, %v437, %v433
    %v439 = vmul.f32 1.0, %v438
    %v441 = vperm.slane %v174, 0
    %v443 = vadd.f32 %v398, %v441
    %v444 = vmul.f32 %v419, %v443
    %v445 = vadd.f32 %v339, %v444
    %v446 = vtanh.pop %v445
    %v447 = vsub.f32 0.0, %v446
    %v448 = vmul.f32 %v439, %v447
    %v449 = vadd.f32 %v446, %v448
    %v450 = vld [vmem:[%s1] sm:$0xff]
    %vm451 = vcmp.ne.f32.partialorder %v450, 0.0
    %v452 = vsel %vm451, 1, 0
    %453 = vset.pattern.permute.xlu0 0
    %454 = vperm.xlu0 %453, %v452
    %v455 = vpop.permute.xlu0 %454
    %vm456 = vcmp.eq.s32.totalorder %v455, 1
    %v457 = vsel %vm456, %v449, 0.0
    %458 = vst [vmem:[#allocation9] sm:$0xff] %v457
    %s459 = scalar_lea.vmem [#allocation2], 24
    %v460 = vld [vmem:[%s459] sm:$0xff]
    %v461 = vld [vmem:[%s459 + $0x8] sm:$0xff]
    %v462 = vld [vmem:[%s459 + $0x10] sm:$0xff]
    %463 = vmatpush.msra.mxu0 %v170
    %464 = vmatpush.msra.mxu0 %v167
    %465 = vmatpush.msra.mxu0 %v164
    %466 = vmatpush.msra.mxu0 %v161
    %467 = vmatpush.msra.mxu0 %v158
    %468 = vmatpush.msra.mxu0 %v155
    %469 = vmatpush.msra.mxu0 %v152
    %470 = vmatpush.msra.mxu0 %v149
    %471 = vmatpush.msra.mxu0 %v146
    %472 = vmatpush.msra.mxu0 %v143
    %473 = vmatpush.msra.mxu0 %v140
    %474 = vmatpush.msra.mxu0 %v137
    %475 = vmatpush.msra.mxu0 %v134
    %476 = vmatpush.msra.mxu0 %v131
    %477 = vmatpush.msra.mxu0 %v128
    %478 = vmatpush.msra.mxu0 %v125
    %479 = vmatmul.f32.gmra.mxu0 %v457
    %v480 = vpop.f32.mrf.mxu0
    %v481 = vadd.f32 0.0, %v480
    %482 = vdwg.mxu0
    %483 = vmatpush.msra.mxu0 %v171
    %484 = vmatpush.msra.mxu0 %v168
    %485 = vmatpush.msra.mxu0 %v165
    %486 = vmatpush.msra.mxu0 %v162
    %487 = vmatpush.msra.mxu0 %v159
    %488 = vmatpush.msra.mxu0 %v156
    %489 = vmatpush.msra.mxu0 %v153
    %490 = vmatpush.msra.mxu0 %v150
    %491 = vmatpush.msra.mxu0 %v147
    %492 = vmatpush.msra.mxu0 %v144
    %493 = vmatpush.msra.mxu0 %v141
    %494 = vmatpush.msra.mxu0 %v138
    %495 = vmatpush.msra.mxu0 %v135
    %496 = vmatpush.msra.mxu0 %v132
    %497 = vmatpush.msra.mxu0 %v129
    %498 = vmatpush.msra.mxu0 %v126
    %499 = vmatmul.f32.gmra.mxu0 %v457
    %v500 = vpop.f32.mrf.mxu0
    %v501 = vadd.f32 0.0, %v500
    %502 = vdwg.mxu0
    %503 = vmatpush.msra.mxu0 %v172
    %504 = vmatpush.msra.mxu0 %v169
    %505 = vmatpush.msra.mxu0 %v166
    %506 = vmatpush.msra.mxu0 %v163
    %507 = vmatpush.msra.mxu0 %v160
    %508 = vmatpush.msra.mxu0 %v157
    %509 = vmatpush.msra.mxu0 %v154
    %510 = vmatpush.msra.mxu0 %v151
    %511 = vmatpush.msra.mxu0 %v148
    %512 = vmatpush.msra.mxu0 %v145
    %513 = vmatpush.msra.mxu0 %v142
    %514 = vmatpush.msra.mxu0 %v139
    %515 = vmatpush.msra.mxu0 %v136
    %516 = vmatpush.msra.mxu0 %v133
    %517 = vmatpush.msra.mxu0 %v130
    %518 = vmatpush.msra.mxu0 %v127
    %519 = vmatmul.f32.gmra.mxu0 %v457
    %v520 = vpop.f32.mrf.mxu0
    %v521 = vadd.f32 0.0, %v520
    %522 = vdwg.mxu0
    %v523 = vadd.f32 %v460, %v481
    %v524 = vxor.u32 %v523, 2147483648
    %v525 = vmul.f32 %v524, 1.442695
    %v526 = vpow.pop %v525
    %v527 = vadd.f32 %v526, 1.0
    %v528 = vrcp.pop %v527
    %v529 = vmul.f32 %v527, %v528
    %v530 = vsub.f32 1.0, %v529
    %v531 = vmul.f32 %v528, %v530
    %v532 = vadd.f32 %v528, %v531
    %vm533 = vweird.f32 %v527
    %vm534 = vweird.f32 %v528
    %vm535 = vmor %vm533, %vm534
    %v536 = vsel %vm535, %v528, %v532
    %v537 = vand.u32 2147483647, %v527
    %vm538 = vcmp.eq.f32.partialorder %v537, 8.507059e+37
    %v539 = vand.u32 %v527, 2147483648
    %v540 = vor.u32 1.1754944e-38, %v539
    %v541 = vsel %vm538, %v540, %v536
    %v542 = vmul.f32 1.0, %v541
    %v543 = vadd.f32 %v461, %v501
    %v544 = vxor.u32 %v543, 2147483648
    %v545 = vmul.f32 %v544, 1.442695
    %v546 = vpow.pop %v545
    %v547 = vadd.f32 %v546, 1.0
    %v548 = vrcp.pop %v547
    %v549 = vmul.f32 %v547, %v548
    %v550 = vsub.f32 1.0, %v549
    %v551 = vmul.f32 %v548, %v550
    %v552 = vadd.f32 %v548, %v551
    %vm553 = vweird.f32 %v547
    %vm554 = vweird.f32 %v548
    %vm555 = vmor %vm553, %vm554
    %v556 = vsel %vm555, %v548, %v552
    %v557 = vand.u32 2147483647, %v547
    %vm558 = vcmp.eq.f32.partialorder %v557, 8.507059e+37
    %v559 = vand.u32 %v547, 2147483648
    %v560 = vor.u32 1.1754944e-38, %v559
    %v561 = vsel %vm558, %v560, %v556
    %v562 = vmul.f32 1.0, %v561
    %v563 = vadd.f32 %v521, %v441
    %v564 = vmul.f32 %v542, %v563
    %v565 = vadd.f32 %v462, %v564
    %v566 = vtanh.pop %v565
    %v567 = vsub.f32 %v457, %v566
    %v568 = vmul.f32 %v562, %v567
    %v569 = vadd.f32 %v566, %v568
    %s570 = scalar_lea.vmem %s1, 8
    %v571 = vld [vmem:[%s570] sm:$0xff]
    %vm572 = vcmp.ne.f32.partialorder %v571, 0.0
    %v573 = vsel %vm572, 1, 0
    %574 = vset.pattern.permute.xlu0 0
    %575 = vperm.xlu0 %574, %v573
    %v576 = vpop.permute.xlu0 %575
    %vm577 = vcmp.eq.s32.totalorder %v576, 1
    %v578 = vsel %vm577, %v569, %v457
    %s579 = scalar_lea.vmem [#allocation9], 8
    %580 = vst [vmem:[%s579] sm:$0xff] %v578
    %s581 = scalar_lea.vmem [#allocation2], 48
    %v582 = vld [vmem:[%s581] sm:$0xff]
    %v583 = vld [vmem:[%s581 + $0x8] sm:$0xff]
    %v584 = vld [vmem:[%s581 + $0x10] sm:$0xff]
    %585 = vmatpush.msra.mxu0 %v170
    %586 = vmatpush.msra.mxu0 %v167
    %587 = vmatpush.msra.mxu0 %v164
    %588 = vmatpush.msra.mxu0 %v161
    %589 = vmatpush.msra.mxu0 %v158
    %590 = vmatpush.msra.mxu0 %v155
    %591 = vmatpush.msra.mxu0 %v152
    %592 = vmatpush.msra.mxu0 %v149
    %593 = vmatpush.msra.mxu0 %v146
    %594 = vmatpush.msra.mxu0 %v143
    %595 = vmatpush.msra.mxu0 %v140
    %596 = vmatpush.msra.mxu0 %v137
    %597 = vmatpush.msra.mxu0 %v134
    %598 = vmatpush.msra.mxu0 %v131
    %599 = vmatpush.msra.mxu0 %v128
    %600 = vmatpush.msra.mxu0 %v125
    %601 = vmatmul.f32.gmra.mxu0 %v578
    %v602 = vpop.f32.mrf.mxu0
    %v603 = vadd.f32 0.0, %v602
    %604 = vdwg.mxu0
    %605 = vmatpush.msra.mxu0 %v171
    %606 = vmatpush.msra.mxu0 %v168
    %607 = vmatpush.msra.mxu0 %v165
    %608 = vmatpush.msra.mxu0 %v162
    %609 = vmatpush.msra.mxu0 %v159
    %610 = vmatpush.msra.mxu0 %v156
    %611 = vmatpush.msra.mxu0 %v153
    %612 = vmatpush.msra.mxu0 %v150
    %613 = vmatpush.msra.mxu0 %v147
    %614 = vmatpush.msra.mxu0 %v144
    %615 = vmatpush.msra.mxu0 %v141
    %616 = vmatpush.msra.mxu0 %v138
    %617 = vmatpush.msra.mxu0 %v135
    %618 = vmatpush.msra.mxu0 %v132
    %619 = vmatpush.msra.mxu0 %v129
    %620 = vmatpush.msra.mxu0 %v126
    %621 = vmatmul.f32.gmra.mxu0 %v578
    %v622 = vpop.f32.mrf.mxu0
    %v623 = vadd.f32 0.0, %v622
    %624 = vdwg.mxu0
    %625 = vmatpush.msra.mxu0 %v172
    %626 = vmatpush.msra.mxu0 %v169
    %627 = vmatpush.msra.mxu0 %v166
    %628 = vmatpush.msra.mxu0 %v163
    %629 = vmatpush.msra.mxu0 %v160
    %630 = vmatpush.msra.mxu0 %v157
    %631 = vmatpush.msra.mxu0 %v154
    %632 = vmatpush.msra.mxu0 %v151
    %633 = vmatpush.msra.mxu0 %v148
    %634 = vmatpush.msra.mxu0 %v145
    %635 = vmatpush.msra.mxu0 %v142
    %636 = vmatpush.msra.mxu0 %v139
    %637 = vmatpush.msra.mxu0 %v136
    %638 = vmatpush.msra.mxu0 %v133
    %639 = vmatpush.msra.mxu0 %v130
    %640 = vmatpush.msra.mxu0 %v127
    %641 = vmatmul.f32.gmra.mxu0 %v578
    %v642 = vpop.f32.mrf.mxu0
    %v643 = vadd.f32 0.0, %v642
    %644 = vdwg.mxu0
    %v645 = vadd.f32 %v582, %v603
    %v646 = vxor.u32 %v645, 2147483648
    %v647 = vmul.f32 %v646, 1.442695
    %v648 = vpow.pop %v647
    %v649 = vadd.f32 %v648, 1.0
    %v650 = vrcp.pop %v649
    %v651 = vmul.f32 %v649, %v650
    %v652 = vsub.f32 1.0, %v651
    %v653 = vmul.f32 %v650, %v652
    %v654 = vadd.f32 %v650, %v653
    %vm655 = vweird.f32 %v649
    %vm656 = vweird.f32 %v650
    %vm657 = vmor %vm655, %vm656
    %v658 = vsel %vm657, %v650, %v654
    %v659 = vand.u32 2147483647, %v649
    %vm660 = vcmp.eq.f32.partialorder %v659, 8.507059e+37
    %v661 = vand.u32 %v649, 2147483648
    %v662 = vor.u32 1.1754944e-38, %v661
    %v663 = vsel %vm660, %v662, %v658
    %v664 = vmul.f32 1.0, %v663
    %v665 = vadd.f32 %v583, %v623
    %v666 = vxor.u32 %v665, 2147483648
    %v667 = vmul.f32 %v666, 1.442695
    %v668 = vpow.pop %v667
    %v669 = vadd.f32 %v668, 1.0
    %v670 = vrcp.pop %v669
    %v671 = vmul.f32 %v669, %v670
    %v672 = vsub.f32 1.0, %v671
    %v673 = vmul.f32 %v670, %v672
    %v674 = vadd.f32 %v670, %v673
    %vm675 = vweird.f32 %v669
    %vm676 = vweird.f32 %v670
    %vm677 = vmor %vm675, %vm676
    %v678 = vsel %vm677, %v670, %v674
    %v679 = vand.u32 2147483647, %v669
    %vm680 = vcmp.eq.f32.partialorder %v679, 8.507059e+37
    %v681 = vand.u32 %v669, 2147483648
    %v682 = vor.u32 1.1754944e-38, %v681
    %v683 = vsel %vm680, %v682, %v678
    %v684 = vmul.f32 1.0, %v683
    %v685 = vadd.f32 %v643, %v441
    %v686 = vmul.f32 %v664, %v685
    %v687 = vadd.f32 %v584, %v686
    %v688 = vtanh.pop %v687
    %v689 = vsub.f32 %v578, %v688
    %v690 = vmul.f32 %v684, %v689
    %v691 = vadd.f32 %v688, %v690
    %s692 = scalar_lea.vmem %s1, 16
    %v693 = vld [vmem:[%s692] sm:$0xff]
    %vm694 = vcmp.ne.f32.partialorder %v693, 0.0
    %v695 = vsel %vm694, 1, 0
    %696 = vset.pattern.permute.xlu0 0
    %697 = vperm.xlu0 %696, %v695
    %v698 = vpop.permute.xlu0 %697
    %vm699 = vcmp.eq.s32.totalorder %v698, 1
    %v700 = vsel %vm699, %v691, %v578
    %s701 = scalar_lea.vmem [#allocation9], 16
    %702 = vst [vmem:[%s701] sm:$0xff] %v700
    %s703 = scalar_lea.vmem [#allocation2], 72
    %v704 = vld [vmem:[%s703] sm:$0xff]
    %v705 = vld [vmem:[%s703 + $0x8] sm:$0xff]
    %v706 = vld [vmem:[%s703 + $0x10] sm:$0xff]
    %707 = vmatpush.msra.mxu0 %v170
    %708 = vmatpush.msra.mxu0 %v167
    %709 = vmatpush.msra.mxu0 %v164
    %710 = vmatpush.msra.mxu0 %v161
    %711 = vmatpush.msra.mxu0 %v158
    %712 = vmatpush.msra.mxu0 %v155
    %713 = vmatpush.msra.mxu0 %v152
    %714 = vmatpush.msra.mxu0 %v149
    %715 = vmatpush.msra.mxu0 %v146
    %716 = vmatpush.msra.mxu0 %v143
    %717 = vmatpush.msra.mxu0 %v140
    %718 = vmatpush.msra.mxu0 %v137
    %719 = vmatpush.msra.mxu0 %v134
    %720 = vmatpush.msra.mxu0 %v131
    %721 = vmatpush.msra.mxu0 %v128
    %722 = vmatpush.msra.mxu0 %v125
    %723 = vmatmul.f32.gmra.mxu0 %v700
    %v724 = vpop.f32.mrf.mxu0
    %v725 = vadd.f32 0.0, %v724
    %726 = vdwg.mxu0
    %727 = vmatpush.msra.mxu0 %v171
    %728 = vmatpush.msra.mxu0 %v168
    %729 = vmatpush.msra.mxu0 %v165
    %730 = vmatpush.msra.mxu0 %v162
    %731 = vmatpush.msra.mxu0 %v159
    %732 = vmatpush.msra.mxu0 %v156
    %733 = vmatpush.msra.mxu0 %v153
    %734 = vmatpush.msra.mxu0 %v150
    %735 = vmatpush.msra.mxu0 %v147
    %736 = vmatpush.msra.mxu0 %v144
    %737 = vmatpush.msra.mxu0 %v141
    %738 = vmatpush.msra.mxu0 %v138
    %739 = vmatpush.msra.mxu0 %v135
    %740 = vmatpush.msra.mxu0 %v132
    %741 = vmatpush.msra.mxu0 %v129
    %742 = vmatpush.msra.mxu0 %v126
    %743 = vmatmul.f32.gmra.mxu0 %v700
    %v744 = vpop.f32.mrf.mxu0
    %v745 = vadd.f32 0.0, %v744
    %746 = vdwg.mxu0
    %747 = vmatpush.msra.mxu0 %v172
    %748 = vmatpush.msra.mxu0 %v169
    %749 = vmatpush.msra.mxu0 %v166
    %750 = vmatpush.msra.mxu0 %v163
    %751 = vmatpush.msra.mxu0 %v160
    %752 = vmatpush.msra.mxu0 %v157
    %753 = vmatpush.msra.mxu0 %v154
    %754 = vmatpush.msra.mxu0 %v151
    %755 = vmatpush.msra.mxu0 %v148
    %756 = vmatpush.msra.mxu0 %v145
    %757 = vmatpush.msra.mxu0 %v142
    %758 = vmatpush.msra.mxu0 %v139
    %759 = vmatpush.msra.mxu0 %v136
    %760 = vmatpush.msra.mxu0 %v133
    %761 = vmatpush.msra.mxu0 %v130
    %762 = vmatpush.msra.mxu0 %v127
    %763 = vmatmul.f32.gmra.mxu0 %v700
    %v764 = vpop.f32.mrf.mxu0
    %v765 = vadd.f32 0.0, %v764
    %766 = vdwg.mxu0
    %v767 = vadd.f32 %v704, %v725
    %v768 = vxor.u32 %v767, 2147483648
    %v769 = vmul.f32 %v768, 1.442695
    %v770 = vpow.pop %v769
    %v771 = vadd.f32 %v770, 1.0
    %v772 = vrcp.pop %v771
    %v773 = vmul.f32 %v771, %v772
    %v774 = vsub.f32 1.0, %v773
    %v775 = vmul.f32 %v772, %v774
    %v776 = vadd.f32 %v772, %v775
    %vm777 = vweird.f32 %v771
    %vm778 = vweird.f32 %v772
    %vm779 = vmor %vm777, %vm778
    %v780 = vsel %vm779, %v772, %v776
    %v781 = vand.u32 2147483647, %v771
    %vm782 = vcmp.eq.f32.partialorder %v781, 8.507059e+37
    %v783 = vand.u32 %v771, 2147483648
    %v784 = vor.u32 1.1754944e-38, %v783
    %v785 = vsel %vm782, %v784, %v780
    %v786 = vmul.f32 1.0, %v785
    %v787 = vadd.f32 %v705, %v745
    %v788 = vxor.u32 %v787, 2147483648
    %v789 = vmul.f32 %v788, 1.442695
    %v790 = vpow.pop %v789
    %v791 = vadd.f32 %v790, 1.0
    %v792 = vrcp.pop %v791
    %v793 = vmul.f32 %v791, %v792
    %v794 = vsub.f32 1.0, %v793
    %v795 = vmul.f32 %v792, %v794
    %v796 = vadd.f32 %v792, %v795
    %vm797 = vweird.f32 %v791
    %vm798 = vweird.f32 %v792
    %vm799 = vmor %vm797, %vm798
    %v800 = vsel %vm799, %v792, %v796
    %v801 = vand.u32 2147483647, %v791
    %vm802 = vcmp.eq.f32.partialorder %v801, 8.507059e+37
    %v803 = vand.u32 %v791, 2147483648
    %v804 = vor.u32 1.1754944e-38, %v803
    %v805 = vsel %vm802, %v804, %v800
    %v806 = vmul.f32 1.0, %v805
    %v807 = vadd.f32 %v765, %v441
    %v808 = vmul.f32 %v786, %v807
    %v809 = vadd.f32 %v706, %v808
    %v810 = vtanh.pop %v809
    %v811 = vsub.f32 %v700, %v810
    %v812 = vmul.f32 %v806, %v811
    %v813 = vadd.f32 %v810, %v812
    %s814 = scalar_lea.vmem %s1, 24
    %v815 = vld [vmem:[%s814] sm:$0xff]
    %vm816 = vcmp.ne.f32.partialorder %v815, 0.0
    %v817 = vsel %vm816, 1, 0
    %818 = vset.pattern.permute.xlu0 0
    %819 = vperm.xlu0 %818, %v817
    %v820 = vpop.permute.xlu0 %819
    %vm821 = vcmp.eq.s32.totalorder %v820, 1
    %v822 = vsel %vm821, %v813, %v700
    %s823 = scalar_lea.vmem [#allocation9], 24
    %824 = vst [vmem:[%s823] sm:$0xff] %v822
    %s825 = scalar_lea.vmem [#allocation2], 96
    %v826 = vld [vmem:[%s825] sm:$0xff]
    %v827 = vld [vmem:[%s825 + $0x8] sm:$0xff]
    %v828 = vld [vmem:[%s825 + $0x10] sm:$0xff]
    %829 = vmatpush.msra.mxu0 %v170
    %830 = vmatpush.msra.mxu0 %v167
    %831 = vmatpush.msra.mxu0 %v164
    %832 = vmatpush.msra.mxu0 %v161
    %833 = vmatpush.msra.mxu0 %v158
    %834 = vmatpush.msra.mxu0 %v155
    %835 = vmatpush.msra.mxu0 %v152
    %836 = vmatpush.msra.mxu0 %v149
    %837 = vmatpush.msra.mxu0 %v146
    %838 = vmatpush.msra.mxu0 %v143
    %839 = vmatpush.msra.mxu0 %v140
    %840 = vmatpush.msra.mxu0 %v137
    %841 = vmatpush.msra.mxu0 %v134
    %842 = vmatpush.msra.mxu0 %v131
    %843 = vmatpush.msra.mxu0 %v128
    %844 = vmatpush.msra.mxu0 %v125
    %845 = vmatmul.f32.gmra.mxu0 %v822
    %v846 = vpop.f32.mrf.mxu0
    %v847 = vadd.f32 0.0, %v846
    %848 = vdwg.mxu0
    %849 = vmatpush.msra.mxu0 %v171
    %850 = vmatpush.msra.mxu0 %v168
    %851 = vmatpush.msra.mxu0 %v165
    %852 = vmatpush.msra.mxu0 %v162
    %853 = vmatpush.msra.mxu0 %v159
    %854 = vmatpush.msra.mxu0 %v156
    %855 = vmatpush.msra.mxu0 %v153
    %856 = vmatpush.msra.mxu0 %v150
    %857 = vmatpush.msra.mxu0 %v147
    %858 = vmatpush.msra.mxu0 %v144
    %859 = vmatpush.msra.mxu0 %v141
    %860 = vmatpush.msra.mxu0 %v138
    %861 = vmatpush.msra.mxu0 %v135
    %862 = vmatpush.msra.mxu0 %v132
    %863 = vmatpush.msra.mxu0 %v129
    %864 = vmatpush.msra.mxu0 %v126
    %865 = vmatmul.f32.gmra.mxu0 %v822
    %v866 = vpop.f32.mrf.mxu0
    %v867 = vadd.f32 0.0, %v866
    %868 = vdwg.mxu0
    %869 = vmatpush.msra.mxu0 %v172
    %870 = vmatpush.msra.mxu0 %v169
    %871 = vmatpush.msra.mxu0 %v166
    %872 = vmatpush.msra.mxu0 %v163
    %873 = vmatpush.msra.mxu0 %v160
    %874 = vmatpush.msra.mxu0 %v157
    %875 = vmatpush.msra.mxu0 %v154
    %876 = vmatpush.msra.mxu0 %v151
    %877 = vmatpush.msra.mxu0 %v148
    %878 = vmatpush.msra.mxu0 %v145
    %879 = vmatpush.msra.mxu0 %v142
    %880 = vmatpush.msra.mxu0 %v139
    %881 = vmatpush.msra.mxu0 %v136
    %882 = vmatpush.msra.mxu0 %v133
    %883 = vmatpush.msra.mxu0 %v130
    %884 = vmatpush.msra.mxu0 %v127
    %885 = vmatmul.f32.gmra.mxu0 %v822
    %v886 = vpop.f32.mrf.mxu0
    %v887 = vadd.f32 0.0, %v886
    %888 = vdwg.mxu0
    %v889 = vadd.f32 %v826, %v847
    %v890 = vxor.u32 %v889, 2147483648
    %v891 = vmul.f32 %v890, 1.442695
    %v892 = vpow.pop %v891
    %v893 = vadd.f32 %v892, 1.0
    %v894 = vrcp.pop %v893
    %v895 = vmul.f32 %v893, %v894
    %v896 = vsub.f32 1.0, %v895
    %v897 = vmul.f32 %v894, %v896
    %v898 = vadd.f32 %v894, %v897
    %vm899 = vweird.f32 %v893
    %vm900 = vweird.f32 %v894
    %vm901 = vmor %vm899, %vm900
    %v902 = vsel %vm901, %v894, %v898
    %v903 = vand.u32 2147483647, %v893
    %vm904 = vcmp.eq.f32.partialorder %v903, 8.507059e+37
    %v905 = vand.u32 %v893, 2147483648
    %v906 = vor.u32 1.1754944e-38, %v905
    %v907 = vsel %vm904, %v906, %v902
    %v908 = vmul.f32 1.0, %v907
    %v909 = vadd.f32 %v827, %v867
    %v910 = vxor.u32 %v909, 2147483648
    %v911 = vmul.f32 %v910, 1.442695
    %v912 = vpow.pop %v911
    %v913 = vadd.f32 %v912, 1.0
    %v914 = vrcp.pop %v913
    %v915 = vmul.f32 %v913, %v914
    %v916 = vsub.f32 1.0, %v915
    %v917 = vmul.f32 %v914, %v916
    %v918 = vadd.f32 %v914, %v917
    %vm919 = vweird.f32 %v913
    %vm920 = vweird.f32 %v914
    %vm921 = vmor %vm919, %vm920
    %v922 = vsel %vm921, %v914, %v918
    %v923 = vand.u32 2147483647, %v913
    %vm924 = vcmp.eq.f32.partialorder %v923, 8.507059e+37
    %v925 = vand.u32 %v913, 2147483648
    %v926 = vor.u32 1.1754944e-38, %v925
    %v927 = vsel %vm924, %v926, %v922
    %v928 = vmul.f32 1.0, %v927
    %v929 = vadd.f32 %v887, %v441
    %v930 = vmul.f32 %v908, %v929
    %v931 = vadd.f32 %v828, %v930
    %v932 = vtanh.pop %v931
    %v933 = vsub.f32 %v822, %v932
    %v934 = vmul.f32 %v928, %v933
    %v935 = vadd.f32 %v932, %v934
    %s936 = scalar_lea.vmem %s1, 32
    %v937 = vld [vmem:[%s936] sm:$0xff]
    %vm938 = vcmp.ne.f32.partialorder %v937, 0.0
    %v939 = vsel %vm938, 1, 0
    %940 = vset.pattern.permute.xlu0 0
    %941 = vperm.xlu0 %940, %v939
    %v942 = vpop.permute.xlu0 %941
    %vm943 = vcmp.eq.s32.totalorder %v942, 1
    %v944 = vsel %vm943, %v935, %v822
    %s945 = scalar_lea.vmem [#allocation9], 32
    %946 = vst [vmem:[%s945] sm:$0xff] %v944
    %s947 = scalar_lea.vmem [#allocation2], 120
    %v948 = vld [vmem:[%s947] sm:$0xff]
    %v949 = vld [vmem:[%s947 + $0x8] sm:$0xff]
    %v950 = vld [vmem:[%s947 + $0x10] sm:$0xff]
    %951 = vmatpush.msra.mxu0 %v170
    %952 = vmatpush.msra.mxu0 %v167
    %953 = vmatpush.msra.mxu0 %v164
    %954 = vmatpush.msra.mxu0 %v161
    %955 = vmatpush.msra.mxu0 %v158
    %956 = vmatpush.msra.mxu0 %v155
    %957 = vmatpush.msra.mxu0 %v152
    %958 = vmatpush.msra.mxu0 %v149
    %959 = vmatpush.msra.mxu0 %v146
    %960 = vmatpush.msra.mxu0 %v143
    %961 = vmatpush.msra.mxu0 %v140
    %962 = vmatpush.msra.mxu0 %v137
    %963 = vmatpush.msra.mxu0 %v134
    %964 = vmatpush.msra.mxu0 %v131
    %965 = vmatpush.msra.mxu0 %v128
    %966 = vmatpush.msra.mxu0 %v125
    %967 = vmatmul.f32.gmra.mxu0 %v944
    %v968 = vpop.f32.mrf.mxu0
    %v969 = vadd.f32 0.0, %v968
    %970 = vdwg.mxu0
    %971 = vmatpush.msra.mxu0 %v171
    %972 = vmatpush.msra.mxu0 %v168
    %973 = vmatpush.msra.mxu0 %v165
    %974 = vmatpush.msra.mxu0 %v162
    %975 = vmatpush.msra.mxu0 %v159
    %976 = vmatpush.msra.mxu0 %v156
    %977 = vmatpush.msra.mxu0 %v153
    %978 = vmatpush.msra.mxu0 %v150
    %979 = vmatpush.msra.mxu0 %v147
    %980 = vmatpush.msra.mxu0 %v144
    %981 = vmatpush.msra.mxu0 %v141
    %982 = vmatpush.msra.mxu0 %v138
    %983 = vmatpush.msra.mxu0 %v135
    %984 = vmatpush.msra.mxu0 %v132
    %985 = vmatpush.msra.mxu0 %v129
    %986 = vmatpush.msra.mxu0 %v126
    %987 = vmatmul.f32.gmra.mxu0 %v944
    %v988 = vpop.f32.mrf.mxu0
    %v989 = vadd.f32 0.0, %v988
    %990 = vdwg.mxu0
    %991 = vmatpush.msra.mxu0 %v172
    %992 = vmatpush.msra.mxu0 %v169
    %993 = vmatpush.msra.mxu0 %v166
    %994 = vmatpush.msra.mxu0 %v163
    %995 = vmatpush.msra.mxu0 %v160
    %996 = vmatpush.msra.mxu0 %v157
    %997 = vmatpush.msra.mxu0 %v154
    %998 = vmatpush.msra.mxu0 %v151
    %999 = vmatpush.msra.mxu0 %v148
    %1000 = vmatpush.msra.mxu0 %v145
    %1001 = vmatpush.msra.mxu0 %v142
    %1002 = vmatpush.msra.mxu0 %v139
    %1003 = vmatpush.msra.mxu0 %v136
    %1004 = vmatpush.msra.mxu0 %v133
    %1005 = vmatpush.msra.mxu0 %v130
    %1006 = vmatpush.msra.mxu0 %v127
    %1007 = vmatmul.f32.gmra.mxu0 %v944
    %v1008 = vpop.f32.mrf.mxu0
    %v1009 = vadd.f32 0.0, %v1008
    %1010 = vdwg.mxu0
    %v1011 = vadd.f32 %v948, %v969
    %v1012 = vxor.u32 %v1011, 2147483648
    %v1013 = vmul.f32 %v1012, 1.442695
    %v1014 = vpow.pop %v1013
    %v1015 = vadd.f32 %v1014, 1.0
    %v1016 = vrcp.pop %v1015
    %v1017 = vmul.f32 %v1015, %v1016
    %v1018 = vsub.f32 1.0, %v1017
    %v1019 = vmul.f32 %v1016, %v1018
    %v1020 = vadd.f32 %v1016, %v1019
    %vm1021 = vweird.f32 %v1015
    %vm1022 = vweird.f32 %v1016
    %vm1023 = vmor %vm1021, %vm1022
    %v1024 = vsel %vm1023, %v1016, %v1020
    %v1025 = vand.u32 2147483647, %v1015
    %vm1026 = vcmp.eq.f32.partialorder %v1025, 8.507059e+37
    %v1027 = vand.u32 %v1015, 2147483648
    %v1028 = vor.u32 1.1754944e-38, %v1027
    %v1029 = vsel %vm1026, %v1028, %v1024
    %v1030 = vmul.f32 1.0, %v1029
    %v1031 = vadd.f32 %v949, %v989
    %v1032 = vxor.u32 %v1031, 2147483648
    %v1033 = vmul.f32 %v1032, 1.442695
    %v1034 = vpow.pop %v1033
    %v1035 = vadd.f32 %v1034, 1.0
    %v1036 = vrcp.pop %v1035
    %v1037 = vmul.f32 %v1035, %v1036
    %v1038 = vsub.f32 1.0, %v1037
    %v1039 = vmul.f32 %v1036, %v1038
    %v1040 = vadd.f32 %v1036, %v1039
    %vm1041 = vweird.f32 %v1035
    %vm1042 = vweird.f32 %v1036
    %vm1043 = vmor %vm1041, %vm1042
    %v1044 = vsel %vm1043, %v1036, %v1040
    %v1045 = vand.u32 2147483647, %v1035
    %vm1046 = vcmp.eq.f32.partialorder %v1045, 8.507059e+37
    %v1047 = vand.u32 %v1035, 2147483648
    %v1048 = vor.u32 1.1754944e-38, %v1047
    %v1049 = vsel %vm1046, %v1048, %v1044
    %v1050 = vmul.f32 1.0, %v1049
    %v1051 = vadd.f32 %v1009, %v441
    %v1052 = vmul.f32 %v1030, %v1051
    %v1053 = vadd.f32 %v950, %v1052
    %v1054 = vtanh.pop %v1053
    %v1055 = vsub.f32 %v944, %v1054
    %v1056 = vmul.f32 %v1050, %v1055
    %v1057 = vadd.f32 %v1054, %v1056
    %s1058 = scalar_lea.vmem %s1, 40
    %v1059 = vld [vmem:[%s1058] sm:$0xff]
    %vm1060 = vcmp.ne.f32.partialorder %v1059, 0.0
    %v1061 = vsel %vm1060, 1, 0
    %1062 = vset.pattern.permute.xlu0 0
    %1063 = vperm.xlu0 %1062, %v1061
    %v1064 = vpop.permute.xlu0 %1063
    %vm1065 = vcmp.eq.s32.totalorder %v1064, 1
    %v1066 = vsel %vm1065, %v1057, %v944
    %s1067 = scalar_lea.vmem [#allocation9], 40
    %1068 = vst [vmem:[%s1067] sm:$0xff] %v1066
    %s1069 = scalar_lea.vmem [#allocation2], 144
    %v1070 = vld [vmem:[%s1069] sm:$0xff]
    %v1071 = vld [vmem:[%s1069 + $0x8] sm:$0xff]
    %v1072 = vld [vmem:[%s1069 + $0x10] sm:$0xff]
    %1073 = vmatpush.msra.mxu0 %v170
    %1074 = vmatpush.msra.mxu0 %v167
    %1075 = vmatpush.msra.mxu0 %v164
    %1076 = vmatpush.msra.mxu0 %v161
    %1077 = vmatpush.msra.mxu0 %v158
    %1078 = vmatpush.msra.mxu0 %v155
    %1079 = vmatpush.msra.mxu0 %v152
    %1080 = vmatpush.msra.mxu0 %v149
    %1081 = vmatpush.msra.mxu0 %v146
    %1082 = vmatpush.msra.mxu0 %v143
    %1083 = vmatpush.msra.mxu0 %v140
    %1084 = vmatpush.msra.mxu0 %v137
    %1085 = vmatpush.msra.mxu0 %v134
    %1086 = vmatpush.msra.mxu0 %v131
    %1087 = vmatpush.msra.mxu0 %v128
    %1088 = vmatpush.msra.mxu0 %v125
    %1089 = vmatmul.f32.gmra.mxu0 %v1066
    %v1090 = vpop.f32.mrf.mxu0
    %v1091 = vadd.f32 0.0, %v1090
    %1092 = vdwg.mxu0
    %1093 = vmatpush.msra.mxu0 %v171
    %1094 = vmatpush.msra.mxu0 %v168
    %1095 = vmatpush.msra.mxu0 %v165
    %1096 = vmatpush.msra.mxu0 %v162
    %1097 = vmatpush.msra.mxu0 %v159
    %1098 = vmatpush.msra.mxu0 %v156
    %1099 = vmatpush.msra.mxu0 %v153
    %1100 = vmatpush.msra.mxu0 %v150
    %1101 = vmatpush.msra.mxu0 %v147
    %1102 = vmatpush.msra.mxu0 %v144
    %1103 = vmatpush.msra.mxu0 %v141
    %1104 = vmatpush.msra.mxu0 %v138
    %1105 = vmatpush.msra.mxu0 %v135
    %1106 = vmatpush.msra.mxu0 %v132
    %1107 = vmatpush.msra.mxu0 %v129
    %1108 = vmatpush.msra.mxu0 %v126
    %1109 = vmatmul.f32.gmra.mxu0 %v1066
    %v1110 = vpop.f32.mrf.mxu0
    %v1111 = vadd.f32 0.0, %v1110
    %1112 = vdwg.mxu0
    %1113 = vmatpush.msra.mxu0 %v172
    %1114 = vmatpush.msra.mxu0 %v169
    %1115 = vmatpush.msra.mxu0 %v166
    %1116 = vmatpush.msra.mxu0 %v163
    %1117 = vmatpush.msra.mxu0 %v160
    %1118 = vmatpush.msra.mxu0 %v157
    %1119 = vmatpush.msra.mxu0 %v154
    %1120 = vmatpush.msra.mxu0 %v151
    %1121 = vmatpush.msra.mxu0 %v148
    %1122 = vmatpush.msra.mxu0 %v145
    %1123 = vmatpush.msra.mxu0 %v142
    %1124 = vmatpush.msra.mxu0 %v139
    %1125 = vmatpush.msra.mxu0 %v136
    %1126 = vmatpush.msra.mxu0 %v133
    %1127 = vmatpush.msra.mxu0 %v130
    %1128 = vmatpush.msra.mxu0 %v127
    %1129 = vmatmul.f32.gmra.mxu0 %v1066
    %v1130 = vpop.f32.mrf.mxu0
    %v1131 = vadd.f32 0.0, %v1130
    %1132 = vdwg.mxu0
    %v1133 = vadd.f32 %v1070, %v1091
    %v1134 = vxor.u32 %v1133, 2147483648
    %v1135 = vmul.f32 %v1134, 1.442695
    %v1136 = vpow.pop %v1135
    %v1137 = vadd.f32 %v1136, 1.0
    %v1138 = vrcp.pop %v1137
    %v1139 = vmul.f32 %v1137, %v1138
    %v1140 = vsub.f32 1.0, %v1139
    %v1141 = vmul.f32 %v1138, %v1140
    %v1142 = vadd.f32 %v1138, %v1141
    %vm1143 = vweird.f32 %v1137
    %vm1144 = vweird.f32 %v1138
    %vm1145 = vmor %vm1143, %vm1144
    %v1146 = vsel %vm1145, %v1138, %v1142
    %v1147 = vand.u32 2147483647, %v1137
    %vm1148 = vcmp.eq.f32.partialorder %v1147, 8.507059e+37
    %v1149 = vand.u32 %v1137, 2147483648
    %v1150 = vor.u32 1.1754944e-38, %v1149
    %v1151 = vsel %vm1148, %v1150, %v1146
    %v1152 = vmul.f32 1.0, %v1151
    %v1153 = vadd.f32 %v1071, %v1111
    %v1154 = vxor.u32 %v1153, 2147483648
    %v1155 = vmul.f32 %v1154, 1.442695
    %v1156 = vpow.pop %v1155
    %v1157 = vadd.f32 %v1156, 1.0
    %v1158 = vrcp.pop %v1157
    %v1159 = vmul.f32 %v1157, %v1158
    %v1160 = vsub.f32 1.0, %v1159
    %v1161 = vmul.f32 %v1158, %v1160
    %v1162 = vadd.f32 %v1158, %v1161
    %vm1163 = vweird.f32 %v1157
    %vm1164 = vweird.f32 %v1158
    %vm1165 = vmor %vm1163, %vm1164
    %v1166 = vsel %vm1165, %v1158, %v1162
    %v1167 = vand.u32 2147483647, %v1157
    %vm1168 = vcmp.eq.f32.partialorder %v1167, 8.507059e+37
    %v1169 = vand.u32 %v1157, 2147483648
    %v1170 = vor.u32 1.1754944e-38, %v1169
    %v1171 = vsel %vm1168, %v1170, %v1166
    %v1172 = vmul.f32 1.0, %v1171
    %v1173 = vadd.f32 %v1131, %v441
    %v1174 = vmul.f32 %v1152, %v1173
    %v1175 = vadd.f32 %v1072, %v1174
    %v1176 = vtanh.pop %v1175
    %v1177 = vsub.f32 %v1066, %v1176
    %v1178 = vmul.f32 %v1172, %v1177
    %v1179 = vadd.f32 %v1176, %v1178
    %s1180 = scalar_lea.vmem %s1, 48
    %v1181 = vld [vmem:[%s1180] sm:$0xff]
    %vm1182 = vcmp.ne.f32.partialorder %v1181, 0.0
    %v1183 = vsel %vm1182, 1, 0
    %1184 = vset.pattern.permute.xlu0 0
    %1185 = vperm.xlu0 %1184, %v1183
    %v1186 = vpop.permute.xlu0 %1185
    %vm1187 = vcmp.eq.s32.totalorder %v1186, 1
    %v1188 = vsel %vm1187, %v1179, %v1066
    %s1189 = scalar_lea.vmem [#allocation9], 48
    %1190 = vst [vmem:[%s1189] sm:$0xff] %v1188
    %s1191 = scalar_lea.vmem [#allocation2], 168
    %v1192 = vld [vmem:[%s1191] sm:$0xff]
    %v1193 = vld [vmem:[%s1191 + $0x8] sm:$0xff]
    %v1194 = vld [vmem:[%s1191 + $0x10] sm:$0xff]
    %1195 = vmatpush.msra.mxu0 %v170
    %1196 = vmatpush.msra.mxu0 %v167
    %1197 = vmatpush.msra.mxu0 %v164
    %1198 = vmatpush.msra.mxu0 %v161
    %1199 = vmatpush.msra.mxu0 %v158
    %1200 = vmatpush.msra.mxu0 %v155
    %1201 = vmatpush.msra.mxu0 %v152
    %1202 = vmatpush.msra.mxu0 %v149
    %1203 = vmatpush.msra.mxu0 %v146
    %1204 = vmatpush.msra.mxu0 %v143
    %1205 = vmatpush.msra.mxu0 %v140
    %1206 = vmatpush.msra.mxu0 %v137
    %1207 = vmatpush.msra.mxu0 %v134
    %1208 = vmatpush.msra.mxu0 %v131
    %1209 = vmatpush.msra.mxu0 %v128
    %1210 = vmatpush.msra.mxu0 %v125
    %1211 = vmatmul.f32.gmra.mxu0 %v1188
    %v1212 = vpop.f32.mrf.mxu0
    %v1213 = vadd.f32 0.0, %v1212
    %1214 = vdwg.mxu0
    %1215 = vmatpush.msra.mxu0 %v171
    %1216 = vmatpush.msra.mxu0 %v168
    %1217 = vmatpush.msra.mxu0 %v165
    %1218 = vmatpush.msra.mxu0 %v162
    %1219 = vmatpush.msra.mxu0 %v159
    %1220 = vmatpush.msra.mxu0 %v156
    %1221 = vmatpush.msra.mxu0 %v153
    %1222 = vmatpush.msra.mxu0 %v150
    %1223 = vmatpush.msra.mxu0 %v147
    %1224 = vmatpush.msra.mxu0 %v144
    %1225 = vmatpush.msra.mxu0 %v141
    %1226 = vmatpush.msra.mxu0 %v138
    %1227 = vmatpush.msra.mxu0 %v135
    %1228 = vmatpush.msra.mxu0 %v132
    %1229 = vmatpush.msra.mxu0 %v129
    %1230 = vmatpush.msra.mxu0 %v126
    %1231 = vmatmul.f32.gmra.mxu0 %v1188
    %v1232 = vpop.f32.mrf.mxu0
    %v1233 = vadd.f32 0.0, %v1232
    %1234 = vdwg.mxu0
    %1235 = vmatpush.msra.mxu0 %v172
    %1236 = vmatpush.msra.mxu0 %v169
    %1237 = vmatpush.msra.mxu0 %v166
    %1238 = vmatpush.msra.mxu0 %v163
    %1239 = vmatpush.msra.mxu0 %v160
    %1240 = vmatpush.msra.mxu0 %v157
    %1241 = vmatpush.msra.mxu0 %v154
    %1242 = vmatpush.msra.mxu0 %v151
    %1243 = vmatpush.msra.mxu0 %v148
    %1244 = vmatpush.msra.mxu0 %v145
    %1245 = vmatpush.msra.mxu0 %v142
    %1246 = vmatpush.msra.mxu0 %v139
    %1247 = vmatpush.msra.mxu0 %v136
    %1248 = vmatpush.msra.mxu0 %v133
    %1249 = vmatpush.msra.mxu0 %v130
    %1250 = vmatpush.msra.mxu0 %v127
    %1251 = vmatmul.f32.gmra.mxu0 %v1188
    %v1252 = vpop.f32.mrf.mxu0
    %v1253 = vadd.f32 0.0, %v1252
    %1254 = vdwg.mxu0
    %v1255 = vadd.f32 %v1192, %v1213
    %v1256 = vxor.u32 %v1255, 2147483648
    %v1257 = vmul.f32 %v1256, 1.442695
    %v1258 = vpow.pop %v1257
    %v1259 = vadd.f32 %v1258, 1.0
    %v1260 = vrcp.pop %v1259
    %v1261 = vmul.f32 %v1259, %v1260
    %v1262 = vsub.f32 1.0, %v1261
    %v1263 = vmul.f32 %v1260, %v1262
    %v1264 = vadd.f32 %v1260, %v1263
    %vm1265 = vweird.f32 %v1259
    %vm1266 = vweird.f32 %v1260
    %vm1267 = vmor %vm1265, %vm1266
    %v1268 = vsel %vm1267, %v1260, %v1264
    %v1269 = vand.u32 2147483647, %v1259
    %vm1270 = vcmp.eq.f32.partialorder %v1269, 8.507059e+37
    %v1271 = vand.u32 %v1259, 2147483648
    %v1272 = vor.u32 1.1754944e-38, %v1271
    %v1273 = vsel %vm1270, %v1272, %v1268
    %v1274 = vmul.f32 1.0, %v1273
    %v1275 = vadd.f32 %v1193, %v1233
    %v1276 = vxor.u32 %v1275, 2147483648
    %v1277 = vmul.f32 %v1276, 1.442695
    %v1278 = vpow.pop %v1277
    %v1279 = vadd.f32 %v1278, 1.0
    %v1280 = vrcp.pop %v1279
    %v1281 = vmul.f32 %v1279, %v1280
    %v1282 = vsub.f32 1.0, %v1281
    %v1283 = vmul.f32 %v1280, %v1282
    %v1284 = vadd.f32 %v1280, %v1283
    %vm1285 = vweird.f32 %v1279
    %vm1286 = vweird.f32 %v1280
    %vm1287 = vmor %vm1285, %vm1286
    %v1288 = vsel %vm1287, %v1280, %v1284
    %v1289 = vand.u32 2147483647, %v1279
    %vm1290 = vcmp.eq.f32.partialorder %v1289, 8.507059e+37
    %v1291 = vand.u32 %v1279, 2147483648
    %v1292 = vor.u32 1.1754944e-38, %v1291
    %v1293 = vsel %vm1290, %v1292, %v1288
    %v1294 = vmul.f32 1.0, %v1293
    %v1295 = vadd.f32 %v1253, %v441
    %v1296 = vmul.f32 %v1274, %v1295
    %v1297 = vadd.f32 %v1194, %v1296
    %v1298 = vtanh.pop %v1297
    %v1299 = vsub.f32 %v1188, %v1298
    %v1300 = vmul.f32 %v1294, %v1299
    %v1301 = vadd.f32 %v1298, %v1300
    %s1302 = scalar_lea.vmem %s1, 56
    %v1303 = vld [vmem:[%s1302] sm:$0xff]
    %vm1304 = vcmp.ne.f32.partialorder %v1303, 0.0
    %v1305 = vsel %vm1304, 1, 0
    %1306 = vset.pattern.permute.xlu0 0
    %1307 = vperm.xlu0 %1306, %v1305
    %v1308 = vpop.permute.xlu0 %1307
    %vm1309 = vcmp.eq.s32.totalorder %v1308, 1
    %v1310 = vsel %vm1309, %v1301, %v1188
    %s1311 = scalar_lea.vmem [#allocation9], 56
    %1312 = vst [vmem:[%s1311] sm:$0xff] %v1310
    %s1313 = scalar_lea.vmem [#allocation3], 384
    %v1314 = vld [vmem:[%s1313] sm:$0xff]
    %v1315 = vld [vmem:[%s1313 + $0x8] sm:$0xff]
    %v1316 = vld [vmem:[%s1313 + $0x10] sm:$0xff]
    %v1317 = vld [vmem:[%s1313 + $0x18] sm:$0xff]
    %v1318 = vld [vmem:[%s1313 + $0x20] sm:$0xff]
    %v1319 = vld [vmem:[%s1313 + $0x28] sm:$0xff]
    %v1320 = vld [vmem:[%s1313 + $0x30] sm:$0xff]
    %v1321 = vld [vmem:[%s1313 + $0x38] sm:$0xff]
    %v1322 = vld [vmem:[%s1313 + $0x40] sm:$0xff]
    %v1323 = vld [vmem:[%s1313 + $0x48] sm:$0xff]
    %v1324 = vld [vmem:[%s1313 + $0x50] sm:$0xff]
    %v1325 = vld [vmem:[%s1313 + $0x58] sm:$0xff]
    %v1326 = vld [vmem:[%s1313 + $0x60] sm:$0xff]
    %v1327 = vld [vmem:[%s1313 + $0x68] sm:$0xff]
    %v1328 = vld [vmem:[%s1313 + $0x70] sm:$0xff]
    %v1329 = vld [vmem:[%s1313 + $0x78] sm:$0xff]
    %v1330 = vld [vmem:[%s1313 + $0x80] sm:$0xff]
    %v1331 = vld [vmem:[%s1313 + $0x88] sm:$0xff]
    %v1332 = vld [vmem:[%s1313 + $0x90] sm:$0xff]
    %v1333 = vld [vmem:[%s1313 + $0x98] sm:$0xff]
    %v1334 = vld [vmem:[%s1313 + $0xa0] sm:$0xff]
    %v1335 = vld [vmem:[%s1313 + $0xa8] sm:$0xff]
    %v1336 = vld [vmem:[%s1313 + $0xb0] sm:$0xff]
    %v1337 = vld [vmem:[%s1313 + $0xb8] sm:$0xff]
    %v1338 = vld [vmem:[%s1313 + $0xc0] sm:$0xff]
    %v1339 = vld [vmem:[%s1313 + $0xc8] sm:$0xff]
    %v1340 = vld [vmem:[%s1313 + $0xd0] sm:$0xff]
    %v1341 = vld [vmem:[%s1313 + $0xd8] sm:$0xff]
    %v1342 = vld [vmem:[%s1313 + $0xe0] sm:$0xff]
    %v1343 = vld [vmem:[%s1313 + $0xe8] sm:$0xff]
    %v1344 = vld [vmem:[%s1313 + $0xf0] sm:$0xff]
    %v1345 = vld [vmem:[%s1313 + $0xf8] sm:$0xff]
    %v1346 = vld [vmem:[%s1313 + $0x100] sm:$0xff]
    %v1347 = vld [vmem:[%s1313 + $0x108] sm:$0xff]
    %v1348 = vld [vmem:[%s1313 + $0x110] sm:$0xff]
    %v1349 = vld [vmem:[%s1313 + $0x118] sm:$0xff]
    %v1350 = vld [vmem:[%s1313 + $0x120] sm:$0xff]
    %v1351 = vld [vmem:[%s1313 + $0x128] sm:$0xff]
    %v1352 = vld [vmem:[%s1313 + $0x130] sm:$0xff]
    %v1353 = vld [vmem:[%s1313 + $0x138] sm:$0xff]
    %v1354 = vld [vmem:[%s1313 + $0x140] sm:$0xff]
    %v1355 = vld [vmem:[%s1313 + $0x148] sm:$0xff]
    %v1356 = vld [vmem:[%s1313 + $0x150] sm:$0xff]
    %v1357 = vld [vmem:[%s1313 + $0x158] sm:$0xff]
    %v1358 = vld [vmem:[%s1313 + $0x160] sm:$0xff]
    %v1359 = vld [vmem:[%s1313 + $0x168] sm:$0xff]
    %v1360 = vld [vmem:[%s1313 + $0x170] sm:$0xff]
    %v1361 = vld [vmem:[%s1313 + $0x178] sm:$0xff]
    %s1362 = scalar_lea.vmem [#allocation6], 384
    %v1363 = vld [vmem:[%s1362] sm:$0xff]
    %v1364 = vld [vmem:[%s1362 + $0x8] sm:$0xff]
    %v1365 = vld [vmem:[%s1362 + $0x10] sm:$0xff]
    %v1366 = vld [vmem:[%s1362 + $0x18] sm:$0xff]
    %v1367 = vld [vmem:[%s1362 + $0x20] sm:$0xff]
    %v1368 = vld [vmem:[%s1362 + $0x28] sm:$0xff]
    %v1369 = vld [vmem:[%s1362 + $0x30] sm:$0xff]
    %v1370 = vld [vmem:[%s1362 + $0x38] sm:$0xff]
    %v1371 = vld [vmem:[%s1362 + $0x40] sm:$0xff]
    %v1372 = vld [vmem:[%s1362 + $0x48] sm:$0xff]
    %v1373 = vld [vmem:[%s1362 + $0x50] sm:$0xff]
    %v1374 = vld [vmem:[%s1362 + $0x58] sm:$0xff]
    %v1375 = vld [vmem:[%s1362 + $0x60] sm:$0xff]
    %v1376 = vld [vmem:[%s1362 + $0x68] sm:$0xff]
    %v1377 = vld [vmem:[%s1362 + $0x70] sm:$0xff]
    %v1378 = vld [vmem:[%s1362 + $0x78] sm:$0xff]
    %v1379 = vld [vmem:[%s1362 + $0x80] sm:$0xff]
    %v1380 = vld [vmem:[%s1362 + $0x88] sm:$0xff]
    %v1381 = vld [vmem:[%s1362 + $0x90] sm:$0xff]
    %v1382 = vld [vmem:[%s1362 + $0x98] sm:$0xff]
    %v1383 = vld [vmem:[%s1362 + $0xa0] sm:$0xff]
    %v1384 = vld [vmem:[%s1362 + $0xa8] sm:$0xff]
    %v1385 = vld [vmem:[%s1362 + $0xb0] sm:$0xff]
    %v1386 = vld [vmem:[%s1362 + $0xb8] sm:$0xff]
    %v1387 = vld [vmem:[%s1362 + $0xc0] sm:$0xff]
    %v1388 = vld [vmem:[%s1362 + $0xc8] sm:$0xff]
    %v1389 = vld [vmem:[%s1362 + $0xd0] sm:$0xff]
    %v1390 = vld [vmem:[%s1362 + $0xd8] sm:$0xff]
    %v1391 = vld [vmem:[%s1362 + $0xe0] sm:$0xff]
    %v1392 = vld [vmem:[%s1362 + $0xe8] sm:$0xff]
    %v1393 = vld [vmem:[%s1362 + $0xf0] sm:$0xff]
    %v1394 = vld [vmem:[%s1362 + $0xf8] sm:$0xff]
    %v1395 = vld [vmem:[%s1362 + $0x100] sm:$0xff]
    %v1396 = vld [vmem:[%s1362 + $0x108] sm:$0xff]
    %v1397 = vld [vmem:[%s1362 + $0x110] sm:$0xff]
    %v1398 = vld [vmem:[%s1362 + $0x118] sm:$0xff]
    %v1399 = vld [vmem:[%s1362 + $0x120] sm:$0xff]
    %v1400 = vld [vmem:[%s1362 + $0x128] sm:$0xff]
    %v1401 = vld [vmem:[%s1362 + $0x130] sm:$0xff]
    %v1402 = vld [vmem:[%s1362 + $0x138] sm:$0xff]
    %v1403 = vld [vmem:[%s1362 + $0x140] sm:$0xff]
    %v1404 = vld [vmem:[%s1362 + $0x148] sm:$0xff]
    %v1405 = vld [vmem:[%s1362 + $0x150] sm:$0xff]
    %v1406 = vld [vmem:[%s1362 + $0x158] sm:$0xff]
    %v1407 = vld [vmem:[%s1362 + $0x160] sm:$0xff]
    %v1408 = vld [vmem:[%s1362 + $0x168] sm:$0xff]
    %v1409 = vld [vmem:[%s1362 + $0x170] sm:$0xff]
    %v1410 = vld [vmem:[%s1362 + $0x178] sm:$0xff]
    %s1411 = scalar_lea.vmem %s4, 3
    %v1412 = vld [vmem:[%s1411] sm:$0x7]
    %s1413 = scalar_lea.vmem %s5, 1
    %v1414 = vld [vmem:[%s1413] sm:$0x1]
    %v1415 = vld [vmem:[#allocation9] sm:$0xff]
    %v1416 = vld [vmem:[#allocation9 + $0x8] sm:$0xff]
    %v1417 = vld [vmem:[#allocation9 + $0x10] sm:$0xff]
    %v1418 = vld [vmem:[#allocation9 + $0x18] sm:$0xff]
    %v1419 = vld [vmem:[#allocation9 + $0x20] sm:$0xff]
    %v1420 = vld [vmem:[#allocation9 + $0x28] sm:$0xff]
    %v1421 = vld [vmem:[#allocation9 + $0x30] sm:$0xff]
    %v1422 = vld [vmem:[#allocation9 + $0x38] sm:$0xff]
    %v1424 = vperm.slane %v1412, 0
    %v1425 = vperm.slane %v1412, 1
    %v1426 = vperm.slane %v1412, 2
    %1430 = vmatpush.msra.mxu0 %v1359
    %1431 = vmatpush.msra.mxu0 %v1356
    %1432 = vmatpush.msra.mxu0 %v1353
    %1433 = vmatpush.msra.mxu0 %v1350
    %1434 = vmatpush.msra.mxu0 %v1347
    %1435 = vmatpush.msra.mxu0 %v1344
    %1436 = vmatpush.msra.mxu0 %v1341
    %1437 = vmatpush.msra.mxu0 %v1338
    %1438 = vmatpush.msra.mxu0 %v1335
    %1439 = vmatpush.msra.mxu0 %v1332
    %1440 = vmatpush.msra.mxu0 %v1329
    %1441 = vmatpush.msra.mxu0 %v1326
    %1442 = vmatpush.msra.mxu0 %v1323
    %1443 = vmatpush.msra.mxu0 %v1320
    %1444 = vmatpush.msra.mxu0 %v1317
    %1445 = vmatpush.msra.mxu0 %v1314
    %1446 = vmatmul.f32.gmra.mxu0 %v1415
    %v1447 = vpop.f32.mrf.mxu0
    %v1448 = vadd.f32 %v1424, %v1447
    %1449 = vmatmul.f32.gmra.mxu0 %v1416
    %v1450 = vpop.f32.mrf.mxu0
    %v1451 = vadd.f32 %v1424, %v1450
    %1452 = vmatmul.f32.gmra.mxu0 %v1417
    %v1453 = vpop.f32.mrf.mxu0
    %v1454 = vadd.f32 %v1424, %v1453
    %1455 = vmatmul.f32.gmra.mxu0 %v1418
    %v1456 = vpop.f32.mrf.mxu0
    %v1457 = vadd.f32 %v1424, %v1456
    %1458 = vmatmul.f32.gmra.mxu0 %v1419
    %v1459 = vpop.f32.mrf.mxu0
    %v1460 = vadd.f32 %v1424, %v1459
    %1461 = vmatmul.f32.gmra.mxu0 %v1420
    %v1462 = vpop.f32.mrf.mxu0
    %v1463 = vadd.f32 %v1424, %v1462
    %1464 = vmatmul.f32.gmra.mxu0 %v1421
    %v1465 = vpop.f32.mrf.mxu0
    %v1466 = vadd.f32 %v1424, %v1465
    %1467 = vmatmul.f32.gmra.mxu0 %v1422
    %v1468 = vpop.f32.mrf.mxu0
    %v1469 = vadd.f32 %v1424, %v1468
    %1470 = vdwg.mxu0
    %1471 = vmatpush.msra.mxu0 %v1360
    %1472 = vmatpush.msra.mxu0 %v1357
    %1473 = vmatpush.msra.mxu0 %v1354
    %1474 = vmatpush.msra.mxu0 %v1351
    %1475 = vmatpush.msra.mxu0 %v1348
    %1476 = vmatpush.msra.mxu0 %v1345
    %1477 = vmatpush.msra.mxu0 %v1342
    %1478 = vmatpush.msra.mxu0 %v1339
    %1479 = vmatpush.msra.mxu0 %v1336
    %1480 = vmatpush.msra.mxu0 %v1333
    %1481 = vmatpush.msra.mxu0 %v1330
    %1482 = vmatpush.msra.mxu0 %v1327
    %1483 = vmatpush.msra.mxu0 %v1324
    %1484 = vmatpush.msra.mxu0 %v1321
    %1485 = vmatpush.msra.mxu0 %v1318
    %1486 = vmatpush.msra.mxu0 %v1315
    %1487 = vmatmul.f32.gmra.mxu0 %v1415
    %v1488 = vpop.f32.mrf.mxu0
    %v1489 = vadd.f32 %v1425, %v1488
    %1490 = vmatmul.f32.gmra.mxu0 %v1416
    %v1491 = vpop.f32.mrf.mxu0
    %v1492 = vadd.f32 %v1425, %v1491
    %1493 = vmatmul.f32.gmra.mxu0 %v1417
    %v1494 = vpop.f32.mrf.mxu0
    %v1495 = vadd.f32 %v1425, %v1494
    %1496 = vmatmul.f32.gmra.mxu0 %v1418
    %v1497 = vpop.f32.mrf.mxu0
    %v1498 = vadd.f32 %v1425, %v1497
    %1499 = vmatmul.f32.gmra.mxu0 %v1419
    %v1500 = vpop.f32.mrf.mxu0
    %v1501 = vadd.f32 %v1425, %v1500
    %1502 = vmatmul.f32.gmra.mxu0 %v1420
    %v1503 = vpop.f32.mrf.mxu0
    %v1504 = vadd.f32 %v1425, %v1503
    %1505 = vmatmul.f32.gmra.mxu0 %v1421
    %v1506 = vpop.f32.mrf.mxu0
    %v1507 = vadd.f32 %v1425, %v1506
    %1508 = vmatmul.f32.gmra.mxu0 %v1422
    %v1509 = vpop.f32.mrf.mxu0
    %v1510 = vadd.f32 %v1425, %v1509
    %1511 = vdwg.mxu0
    %1512 = vmatpush.msra.mxu0 %v1361
    %1513 = vmatpush.msra.mxu0 %v1358
    %1514 = vmatpush.msra.mxu0 %v1355
    %1515 = vmatpush.msra.mxu0 %v1352
    %1516 = vmatpush.msra.mxu0 %v1349
    %1517 = vmatpush.msra.mxu0 %v1346
    %1518 = vmatpush.msra.mxu0 %v1343
    %1519 = vmatpush.msra.mxu0 %v1340
    %1520 = vmatpush.msra.mxu0 %v1337
    %1521 = vmatpush.msra.mxu0 %v1334
    %1522 = vmatpush.msra.mxu0 %v1331
    %1523 = vmatpush.msra.mxu0 %v1328
    %1524 = vmatpush.msra.mxu0 %v1325
    %1525 = vmatpush.msra.mxu0 %v1322
    %1526 = vmatpush.msra.mxu0 %v1319
    %1527 = vmatpush.msra.mxu0 %v1316
    %1528 = vmatmul.f32.gmra.mxu0 %v1415
    %v1529 = vpop.f32.mrf.mxu0
    %v1530 = vadd.f32 %v1426, %v1529
    %1531 = vmatmul.f32.gmra.mxu0 %v1416
    %v1532 = vpop.f32.mrf.mxu0
    %v1533 = vadd.f32 %v1426, %v1532
    %1534 = vmatmul.f32.gmra.mxu0 %v1417
    %v1535 = vpop.f32.mrf.mxu0
    %v1536 = vadd.f32 %v1426, %v1535
    %1537 = vmatmul.f32.gmra.mxu0 %v1418
    %v1538 = vpop.f32.mrf.mxu0
    %v1539 = vadd.f32 %v1426, %v1538
    %1540 = vmatmul.f32.gmra.mxu0 %v1419
    %v1541 = vpop.f32.mrf.mxu0
    %v1542 = vadd.f32 %v1426, %v1541
    %1543 = vmatmul.f32.gmra.mxu0 %v1420
    %v1544 = vpop.f32.mrf.mxu0
    %v1545 = vadd.f32 %v1426, %v1544
    %1546 = vmatmul.f32.gmra.mxu0 %v1421
    %v1547 = vpop.f32.mrf.mxu0
    %v1548 = vadd.f32 %v1426, %v1547
    %1549 = vmatmul.f32.gmra.mxu0 %v1422
    %v1550 = vpop.f32.mrf.mxu0
    %v1551 = vadd.f32 %v1426, %v1550
    %1552 = vdwg.mxu0
    %1553 = vst [vmem:[#allocation2] sm:$0xff] %v1448
    %1554 = vst [vmem:[#allocation2 + $0x8] sm:$0xff] %v1489
    %1555 = vst [vmem:[#allocation2 + $0x10] sm:$0xff] %v1530
    %1556 = vst [vmem:[#allocation2 + $0x18] sm:$0xff] %v1451
    %1557 = vst [vmem:[#allocation2 + $0x20] sm:$0xff] %v1492
    %1558 = vst [vmem:[#allocation2 + $0x28] sm:$0xff] %v1533
    %1559 = vst [vmem:[#allocation2 + $0x30] sm:$0xff] %v1454
    %1560 = vst [vmem:[#allocation2 + $0x38] sm:$0xff] %v1495
    %1561 = vst [vmem:[#allocation2 + $0x40] sm:$0xff] %v1536
    %1562 = vst [vmem:[#allocation2 + $0x48] sm:$0xff] %v1457
    %1563 = vst [vmem:[#allocation2 + $0x50] sm:$0xff] %v1498
    %1564 = vst [vmem:[#allocation2 + $0x58] sm:$0xff] %v1539
    %1565 = vst [vmem:[#allocation2 + $0x60] sm:$0xff] %v1460
    %1566 = vst [vmem:[#allocation2 + $0x68] sm:$0xff] %v1501
    %1567 = vst [vmem:[#allocation2 + $0x70] sm:$0xff] %v1542
    %1568 = vst [vmem:[#allocation2 + $0x78] sm:$0xff] %v1463
    %1569 = vst [vmem:[#allocation2 + $0x80] sm:$0xff] %v1504
    %1570 = vst [vmem:[#allocation2 + $0x88] sm:$0xff] %v1545
    %1571 = vst [vmem:[#allocation2 + $0x90] sm:$0xff] %v1466
    %1572 = vst [vmem:[#allocation2 + $0x98] sm:$0xff] %v1507
    %1573 = vst [vmem:[#allocation2 + $0xa0] sm:$0xff] %v1548
    %1574 = vst [vmem:[#allocation2 + $0xa8] sm:$0xff] %v1469
    %1575 = vst [vmem:[#allocation2 + $0xb0] sm:$0xff] %v1510
    %1576 = vst [vmem:[#allocation2 + $0xb8] sm:$0xff] %v1551
    %v1577 = vld [vmem:[#allocation2] sm:$0xff]
    %v1578 = vld [vmem:[#allocation2 + $0x8] sm:$0xff]
    %v1579 = vld [vmem:[#allocation2 + $0x10] sm:$0xff]
    %1580 = vmatpush.msra.mxu0 %v1408
    %1581 = vmatpush.msra.mxu0 %v1405
    %1582 = vmatpush.msra.mxu0 %v1402
    %1583 = vmatpush.msra.mxu0 %v1399
    %1584 = vmatpush.msra.mxu0 %v1396
    %1585 = vmatpush.msra.mxu0 %v1393
    %1586 = vmatpush.msra.mxu0 %v1390
    %1587 = vmatpush.msra.mxu0 %v1387
    %1588 = vmatpush.msra.mxu0 %v1384
    %1589 = vmatpush.msra.mxu0 %v1381
    %1590 = vmatpush.msra.mxu0 %v1378
    %1591 = vmatpush.msra.mxu0 %v1375
    %1592 = vmatpush.msra.mxu0 %v1372
    %1593 = vmatpush.msra.mxu0 %v1369
    %1594 = vmatpush.msra.mxu0 %v1366
    %1595 = vmatpush.msra.mxu0 %v1363
    %1596 = vmatmul.f32.gmra.mxu0 0.0
    %v1597 = vpop.f32.mrf.mxu0
    %v1598 = vadd.f32 0.0, %v1597
    %1599 = vdwg.mxu0
    %1600 = vmatpush.msra.mxu0 %v1409
    %1601 = vmatpush.msra.mxu0 %v1406
    %1602 = vmatpush.msra.mxu0 %v1403
    %1603 = vmatpush.msra.mxu0 %v1400
    %1604 = vmatpush.msra.mxu0 %v1397
    %1605 = vmatpush.msra.mxu0 %v1394
    %1606 = vmatpush.msra.mxu0 %v1391
    %1607 = vmatpush.msra.mxu0 %v1388
    %1608 = vmatpush.msra.mxu0 %v1385
    %1609 = vmatpush.msra.mxu0 %v1382
    %1610 = vmatpush.msra.mxu0 %v1379
    %1611 = vmatpush.msra.mxu0 %v1376
    %1612 = vmatpush.msra.mxu0 %v1373
    %1613 = vmatpush.msra.mxu0 %v1370
    %1614 = vmatpush.msra.mxu0 %v1367
    %1615 = vmatpush.msra.mxu0 %v1364
    %1616 = vmatmul.f32.gmra.mxu0 0.0
    %v1617 = vpop.f32.mrf.mxu0
    %v1618 = vadd.f32 0.0, %v1617
    %1619 = vdwg.mxu0
    %1620 = vmatpush.msra.mxu0 %v1410
    %1621 = vmatpush.msra.mxu0 %v1407
    %1622 = vmatpush.msra.mxu0 %v1404
    %1623 = vmatpush.msra.mxu0 %v1401
    %1624 = vmatpush.msra.mxu0 %v1398
    %1625 = vmatpush.msra.mxu0 %v1395
    %1626 = vmatpush.msra.mxu0 %v1392
    %1627 = vmatpush.msra.mxu0 %v1389
    %1628 = vmatpush.msra.mxu0 %v1386
    %1629 = vmatpush.msra.mxu0 %v1383
    %1630 = vmatpush.msra.mxu0 %v1380
    %1631 = vmatpush.msra.mxu0 %v1377
    %1632 = vmatpush.msra.mxu0 %v1374
    %1633 = vmatpush.msra.mxu0 %v1371
    %1634 = vmatpush.msra.mxu0 %v1368
    %1635 = vmatpush.msra.mxu0 %v1365
    %1636 = vmatmul.f32.gmra.mxu0 0.0
    %v1637 = vpop.f32.mrf.mxu0
    %v1638 = vadd.f32 0.0, %v1637
    %1639 = vdwg.mxu0
    %v1640 = vadd.f32 %v1577, %v1598
    %v1641 = vxor.u32 %v1640, 2147483648
    %v1642 = vmul.f32 %v1641, 1.442695
    %v1643 = vpow.pop %v1642
    %v1644 = vadd.f32 %v1643, 1.0
    %v1645 = vrcp.pop %v1644
    %v1646 = vmul.f32 %v1644, %v1645
    %v1647 = vsub.f32 1.0, %v1646
    %v1648 = vmul.f32 %v1645, %v1647
    %v1649 = vadd.f32 %v1645, %v1648
    %vm1650 = vweird.f32 %v1644
    %vm1651 = vweird.f32 %v1645
    %vm1652 = vmor %vm1650, %vm1651
    %v1653 = vsel %vm1652, %v1645, %v1649
    %v1654 = vand.u32 2147483647, %v1644
    %vm1655 = vcmp.eq.f32.partialorder %v1654, 8.507059e+37
    %v1656 = vand.u32 %v1644, 2147483648
    %v1657 = vor.u32 1.1754944e-38, %v1656
    %v1658 = vsel %vm1655, %v1657, %v1653
    %v1659 = vmul.f32 1.0, %v1658
    %v1660 = vadd.f32 %v1578, %v1618
    %v1661 = vxor.u32 %v1660, 2147483648
    %v1662 = vmul.f32 %v1661, 1.442695
    %v1663 = vpow.pop %v1662
    %v1664 = vadd.f32 %v1663, 1.0
    %v1665 = vrcp.pop %v1664
    %v1666 = vmul.f32 %v1664, %v1665
    %v1667 = vsub.f32 1.0, %v1666
    %v1668 = vmul.f32 %v1665, %v1667
    %v1669 = vadd.f32 %v1665, %v1668
    %vm1670 = vweird.f32 %v1664
    %vm1671 = vweird.f32 %v1665
    %vm1672 = vmor %vm1670, %vm1671
    %v1673 = vsel %vm1672, %v1665, %v1669
    %v1674 = vand.u32 2147483647, %v1664
    %vm1675 = vcmp.eq.f32.partialorder %v1674, 8.507059e+37
    %v1676 = vand.u32 %v1664, 2147483648
    %v1677 = vor.u32 1.1754944e-38, %v1676
    %v1678 = vsel %vm1675, %v1677, %v1673
    %v1679 = vmul.f32 1.0, %v1678
    %v1681 = vperm.slane %v1414, 0
    %v1683 = vadd.f32 %v1638, %v1681
    %v1684 = vmul.f32 %v1659, %v1683
    %v1685 = vadd.f32 %v1579, %v1684
    %v1686 = vtanh.pop %v1685
    %v1687 = vsub.f32 0.0, %v1686
    %v1688 = vmul.f32 %v1679, %v1687
    %v1689 = vadd.f32 %v1686, %v1688
    %v1690 = vld [vmem:[%s1] sm:$0xff]
    %vm1691 = vcmp.ne.f32.partialorder %v1690, 0.0
    %v1692 = vsel %vm1691, 1, 0
    %1693 = vset.pattern.permute.xlu0 0
    %1694 = vperm.xlu0 %1693, %v1692
    %v1695 = vpop.permute.xlu0 %1694
    %vm1696 = vcmp.eq.s32.totalorder %v1695, 1
    %v1697 = vsel %vm1696, %v1689, 0.0
    %v1698 = vsel %vm1696, %v1689, -1.0
    %1699 = vst [vmem:[#allocation9] sm:$0xff] %v1698
    %v1700 = vld [vmem:[%s459] sm:$0xff]
    %v1701 = vld [vmem:[%s459 + $0x8] sm:$0xff]
    %v1702 = vld [vmem:[%s459 + $0x10] sm:$0xff]
    %1703 = vmatpush.msra.mxu0 %v1408
    %1704 = vmatpush.msra.mxu0 %v1405
    %1705 = vmatpush.msra.mxu0 %v1402
    %1706 = vmatpush.msra.mxu0 %v1399
    %1707 = vmatpush.msra.mxu0 %v1396
    %1708 = vmatpush.msra.mxu0 %v1393
    %1709 = vmatpush.msra.mxu0 %v1390
    %1710 = vmatpush.msra.mxu0 %v1387
    %1711 = vmatpush.msra.mxu0 %v1384
    %1712 = vmatpush.msra.mxu0 %v1381
    %1713 = vmatpush.msra.mxu0 %v1378
    %1714 = vmatpush.msra.mxu0 %v1375
    %1715 = vmatpush.msra.mxu0 %v1372
    %1716 = vmatpush.msra.mxu0 %v1369
    %1717 = vmatpush.msra.mxu0 %v1366
    %1718 = vmatpush.msra.mxu0 %v1363
    %1719 = vmatmul.f32.gmra.mxu0 %v1697
    %v1720 = vpop.f32.mrf.mxu0
    %v1721 = vadd.f32 0.0, %v1720
    %1722 = vdwg.mxu0
    %1723 = vmatpush.msra.mxu0 %v1409
    %1724 = vmatpush.msra.mxu0 %v1406
    %1725 = vmatpush.msra.mxu0 %v1403
    %1726 = vmatpush.msra.mxu0 %v1400
    %1727 = vmatpush.msra.mxu0 %v1397
    %1728 = vmatpush.msra.mxu0 %v1394
    %1729 = vmatpush.msra.mxu0 %v1391
    %1730 = vmatpush.msra.mxu0 %v1388
    %1731 = vmatpush.msra.mxu0 %v1385
    %1732 = vmatpush.msra.mxu0 %v1382
    %1733 = vmatpush.msra.mxu0 %v1379
    %1734 = vmatpush.msra.mxu0 %v1376
    %1735 = vmatpush.msra.mxu0 %v1373
    %1736 = vmatpush.msra.mxu0 %v1370
    %1737 = vmatpush.msra.mxu0 %v1367
    %1738 = vmatpush.msra.mxu0 %v1364
    %1739 = vmatmul.f32.gmra.mxu0 %v1697
    %v1740 = vpop.f32.mrf.mxu0
    %v1741 = vadd.f32 0.0, %v1740
    %1742 = vdwg.mxu0
    %1743 = vmatpush.msra.mxu0 %v1410
    %1744 = vmatpush.msra.mxu0 %v1407
    %1745 = vmatpush.msra.mxu0 %v1404
    %1746 = vmatpush.msra.mxu0 %v1401
    %1747 = vmatpush.msra.mxu0 %v1398
    %1748 = vmatpush.msra.mxu0 %v1395
    %1749 = vmatpush.msra.mxu0 %v1392
    %1750 = vmatpush.msra.mxu0 %v1389
    %1751 = vmatpush.msra.mxu0 %v1386
    %1752 = vmatpush.msra.mxu0 %v1383
    %1753 = vmatpush.msra.mxu0 %v1380
    %1754 = vmatpush.msra.mxu0 %v1377
    %1755 = vmatpush.msra.mxu0 %v1374
    %1756 = vmatpush.msra.mxu0 %v1371
    %1757 = vmatpush.msra.mxu0 %v1368
    %1758 = vmatpush.msra.mxu0 %v1365
    %1759 = vmatmul.f32.gmra.mxu0 %v1697
    %v1760 = vpop.f32.mrf.mxu0
    %v1761 = vadd.f32 0.0, %v1760
    %1762 = vdwg.mxu0
    %v1763 = vadd.f32 %v1700, %v1721
    %v1764 = vxor.u32 %v1763, 2147483648
    %v1765 = vmul.f32 %v1764, 1.442695
    %v1766 = vpow.pop %v1765
    %v1767 = vadd.f32 %v1766, 1.0
    %v1768 = vrcp.pop %v1767
    %v1769 = vmul.f32 %v1767, %v1768
    %v1770 = vsub.f32 1.0, %v1769
    %v1771 = vmul.f32 %v1768, %v1770
    %v1772 = vadd.f32 %v1768, %v1771
    %vm1773 = vweird.f32 %v1767
    %vm1774 = vweird.f32 %v1768
    %vm1775 = vmor %vm1773, %vm1774
    %v1776 = vsel %vm1775, %v1768, %v1772
    %v1777 = vand.u32 2147483647, %v1767
    %vm1778 = vcmp.eq.f32.partialorder %v1777, 8.507059e+37
    %v1779 = vand.u32 %v1767, 2147483648
    %v1780 = vor.u32 1.1754944e-38, %v1779
    %v1781 = vsel %vm1778, %v1780, %v1776
    %v1782 = vmul.f32 1.0, %v1781
    %v1783 = vadd.f32 %v1701, %v1741
    %v1784 = vxor.u32 %v1783, 2147483648
    %v1785 = vmul.f32 %v1784, 1.442695
    %v1786 = vpow.pop %v1785
    %v1787 = vadd.f32 %v1786, 1.0
    %v1788 = vrcp.pop %v1787
    %v1789 = vmul.f32 %v1787, %v1788
    %v1790 = vsub.f32 1.0, %v1789
    %v1791 = vmul.f32 %v1788, %v1790
    %v1792 = vadd.f32 %v1788, %v1791
    %vm1793 = vweird.f32 %v1787
    %vm1794 = vweird.f32 %v1788
    %vm1795 = vmor %vm1793, %vm1794
    %v1796 = vsel %vm1795, %v1788, %v1792
    %v1797 = vand.u32 2147483647, %v1787
    %vm1798 = vcmp.eq.f32.partialorder %v1797, 8.507059e+37
    %v1799 = vand.u32 %v1787, 2147483648
    %v1800 = vor.u32 1.1754944e-38, %v1799
    %v1801 = vsel %vm1798, %v1800, %v1796
    %v1802 = vmul.f32 1.0, %v1801
    %v1803 = vadd.f32 %v1761, %v1681
    %v1804 = vmul.f32 %v1782, %v1803
    %v1805 = vadd.f32 %v1702, %v1804
    %v1806 = vtanh.pop %v1805
    %v1807 = vsub.f32 %v1697, %v1806
    %v1808 = vmul.f32 %v1802, %v1807
    %v1809 = vadd.f32 %v1806, %v1808
    %v1810 = vld [vmem:[%s570] sm:$0xff]
    %vm1811 = vcmp.ne.f32.partialorder %v1810, 0.0
    %v1812 = vsel %vm1811, 1, 0
    %1813 = vset.pattern.permute.xlu0 0
    %1814 = vperm.xlu0 %1813, %v1812
    %v1815 = vpop.permute.xlu0 %1814
    %vm1816 = vcmp.eq.s32.totalorder %v1815, 1
    %v1817 = vsel %vm1816, %v1809, %v1697
    %v1818 = vsel %vm1816, %v1809, -1.0
    %1819 = vst [vmem:[%s579] sm:$0xff] %v1818
    %v1820 = vld [vmem:[%s581] sm:$0xff]
    %v1821 = vld [vmem:[%s581 + $0x8] sm:$0xff]
    %v1822 = vld [vmem:[%s581 + $0x10] sm:$0xff]
    %1823 = vmatpush.msra.mxu0 %v1408
    %1824 = vmatpush.msra.mxu0 %v1405
    %1825 = vmatpush.msra.mxu0 %v1402
    %1826 = vmatpush.msra.mxu0 %v1399
    %1827 = vmatpush.msra.mxu0 %v1396
    %1828 = vmatpush.msra.mxu0 %v1393
    %1829 = vmatpush.msra.mxu0 %v1390
    %1830 = vmatpush.msra.mxu0 %v1387
    %1831 = vmatpush.msra.mxu0 %v1384
    %1832 = vmatpush.msra.mxu0 %v1381
    %1833 = vmatpush.msra.mxu0 %v1378
    %1834 = vmatpush.msra.mxu0 %v1375
    %1835 = vmatpush.msra.mxu0 %v1372
    %1836 = vmatpush.msra.mxu0 %v1369
    %1837 = vmatpush.msra.mxu0 %v1366
    %1838 = vmatpush.msra.mxu0 %v1363
    %1839 = vmatmul.f32.gmra.mxu0 %v1817
    %v1840 = vpop.f32.mrf.mxu0
    %v1841 = vadd.f32 0.0, %v1840
    %1842 = vdwg.mxu0
    %1843 = vmatpush.msra.mxu0 %v1409
    %1844 = vmatpush.msra.mxu0 %v1406
    %1845 = vmatpush.msra.mxu0 %v1403
    %1846 = vmatpush.msra.mxu0 %v1400
    %1847 = vmatpush.msra.mxu0 %v1397
    %1848 = vmatpush.msra.mxu0 %v1394
    %1849 = vmatpush.msra.mxu0 %v1391
    %1850 = vmatpush.msra.mxu0 %v1388
    %1851 = vmatpush.msra.mxu0 %v1385
    %1852 = vmatpush.msra.mxu0 %v1382
    %1853 = vmatpush.msra.mxu0 %v1379
    %1854 = vmatpush.msra.mxu0 %v1376
    %1855 = vmatpush.msra.mxu0 %v1373
    %1856 = vmatpush.msra.mxu0 %v1370
    %1857 = vmatpush.msra.mxu0 %v1367
    %1858 = vmatpush.msra.mxu0 %v1364
    %1859 = vmatmul.f32.gmra.mxu0 %v1817
    %v1860 = vpop.f32.mrf.mxu0
    %v1861 = vadd.f32 0.0, %v1860
    %1862 = vdwg.mxu0
    %1863 = vmatpush.msra.mxu0 %v1410
    %1864 = vmatpush.msra.mxu0 %v1407
    %1865 = vmatpush.msra.mxu0 %v1404
    %1866 = vmatpush.msra.mxu0 %v1401
    %1867 = vmatpush.msra.mxu0 %v1398
    %1868 = vmatpush.msra.mxu0 %v1395
    %1869 = vmatpush.msra.mxu0 %v1392
    %1870 = vmatpush.msra.mxu0 %v1389
    %1871 = vmatpush.msra.mxu0 %v1386
    %1872 = vmatpush.msra.mxu0 %v1383
    %1873 = vmatpush.msra.mxu0 %v1380
    %1874 = vmatpush.msra.mxu0 %v1377
    %1875 = vmatpush.msra.mxu0 %v1374
    %1876 = vmatpush.msra.mxu0 %v1371
    %1877 = vmatpush.msra.mxu0 %v1368
    %1878 = vmatpush.msra.mxu0 %v1365
    %1879 = vmatmul.f32.gmra.mxu0 %v1817
    %v1880 = vpop.f32.mrf.mxu0
    %v1881 = vadd.f32 0.0, %v1880
    %1882 = vdwg.mxu0
    %v1883 = vadd.f32 %v1820, %v1841
    %v1884 = vxor.u32 %v1883, 2147483648
    %v1885 = vmul.f32 %v1884, 1.442695
    %v1886 = vpow.pop %v1885
    %v1887 = vadd.f32 %v1886, 1.0
    %v1888 = vrcp.pop %v1887
    %v1889 = vmul.f32 %v1887, %v1888
    %v1890 = vsub.f32 1.0, %v1889
    %v1891 = vmul.f32 %v1888, %v1890
    %v1892 = vadd.f32 %v1888, %v1891
    %vm1893 = vweird.f32 %v1887
    %vm1894 = vweird.f32 %v1888
    %vm1895 = vmor %vm1893, %vm1894
    %v1896 = vsel %vm1895, %v1888, %v1892
    %v1897 = vand.u32 2147483647, %v1887
    %vm1898 = vcmp.eq.f32.partialorder %v1897, 8.507059e+37
    %v1899 = vand.u32 %v1887, 2147483648
    %v1900 = vor.u32 1.1754944e-38, %v1899
    %v1901 = vsel %vm1898, %v1900, %v1896
    %v1902 = vmul.f32 1.0, %v1901
    %v1903 = vadd.f32 %v1821, %v1861
    %v1904 = vxor.u32 %v1903, 2147483648
    %v1905 = vmul.f32 %v1904, 1.442695
    %v1906 = vpow.pop %v1905
    %v1907 = vadd.f32 %v1906, 1.0
    %v1908 = vrcp.pop %v1907
    %v1909 = vmul.f32 %v1907, %v1908
    %v1910 = vsub.f32 1.0, %v1909
    %v1911 = vmul.f32 %v1908, %v1910
    %v1912 = vadd.f32 %v1908, %v1911
    %vm1913 = vweird.f32 %v1907
    %vm1914 = vweird.f32 %v1908
    %vm1915 = vmor %vm1913, %vm1914
    %v1916 = vsel %vm1915, %v1908, %v1912
    %v1917 = vand.u32 2147483647, %v1907
    %vm1918 = vcmp.eq.f32.partialorder %v1917, 8.507059e+37
    %v1919 = vand.u32 %v1907, 2147483648
    %v1920 = vor.u32 1.1754944e-38, %v1919
    %v1921 = vsel %vm1918, %v1920, %v1916
    %v1922 = vmul.f32 1.0, %v1921
    %v1923 = vadd.f32 %v1881, %v1681
    %v1924 = vmul.f32 %v1902, %v1923
    %v1925 = vadd.f32 %v1822, %v1924
    %v1926 = vtanh.pop %v1925
    %v1927 = vsub.f32 %v1817, %v1926
    %v1928 = vmul.f32 %v1922, %v1927
    %v1929 = vadd.f32 %v1926, %v1928
    %v1930 = vld [vmem:[%s692] sm:$0xff]
    %vm1931 = vcmp.ne.f32.partialorder %v1930, 0.0
    %v1932 = vsel %vm1931, 1, 0
    %1933 = vset.pattern.permute.xlu0 0
    %1934 = vperm.xlu0 %1933, %v1932
    %v1935 = vpop.permute.xlu0 %1934
    %vm1936 = vcmp.eq.s32.totalorder %v1935, 1
    %v1937 = vsel %vm1936, %v1929, %v1817
    %v1938 = vsel %vm1936, %v1929, -1.0
    %1939 = vst [vmem:[%s701] sm:$0xff] %v1938
    %v1940 = vld [vmem:[%s703] sm:$0xff]
    %v1941 = vld [vmem:[%s703 + $0x8] sm:$0xff]
    %v1942 = vld [vmem:[%s703 + $0x10] sm:$0xff]
    %1943 = vmatpush.msra.mxu0 %v1408
    %1944 = vmatpush.msra.mxu0 %v1405
    %1945 = vmatpush.msra.mxu0 %v1402
    %1946 = vmatpush.msra.mxu0 %v1399
    %1947 = vmatpush.msra.mxu0 %v1396
    %1948 = vmatpush.msra.mxu0 %v1393
    %1949 = vmatpush.msra.mxu0 %v1390
    %1950 = vmatpush.msra.mxu0 %v1387
    %1951 = vmatpush.msra.mxu0 %v1384
    %1952 = vmatpush.msra.mxu0 %v1381
    %1953 = vmatpush.msra.mxu0 %v1378
    %1954 = vmatpush.msra.mxu0 %v1375
    %1955 = vmatpush.msra.mxu0 %v1372
    %1956 = vmatpush.msra.mxu0 %v1369
    %1957 = vmatpush.msra.mxu0 %v1366
    %1958 = vmatpush.msra.mxu0 %v1363
    %1959 = vmatmul.f32.gmra.mxu0 %v1937
    %v1960 = vpop.f32.mrf.mxu0
    %v1961 = vadd.f32 0.0, %v1960
    %1962 = vdwg.mxu0
    %1963 = vmatpush.msra.mxu0 %v1409
    %1964 = vmatpush.msra.mxu0 %v1406
    %1965 = vmatpush.msra.mxu0 %v1403
    %1966 = vmatpush.msra.mxu0 %v1400
    %1967 = vmatpush.msra.mxu0 %v1397
    %1968 = vmatpush.msra.mxu0 %v1394
    %1969 = vmatpush.msra.mxu0 %v1391
    %1970 = vmatpush.msra.mxu0 %v1388
    %1971 = vmatpush.msra.mxu0 %v1385
    %1972 = vmatpush.msra.mxu0 %v1382
    %1973 = vmatpush.msra.mxu0 %v1379
    %1974 = vmatpush.msra.mxu0 %v1376
    %1975 = vmatpush.msra.mxu0 %v1373
    %1976 = vmatpush.msra.mxu0 %v1370
    %1977 = vmatpush.msra.mxu0 %v1367
    %1978 = vmatpush.msra.mxu0 %v1364
    %1979 = vmatmul.f32.gmra.mxu0 %v1937
    %v1980 = vpop.f32.mrf.mxu0
    %v1981 = vadd.f32 0.0, %v1980
    %1982 = vdwg.mxu0
    %1983 = vmatpush.msra.mxu0 %v1410
    %1984 = vmatpush.msra.mxu0 %v1407
    %1985 = vmatpush.msra.mxu0 %v1404
    %1986 = vmatpush.msra.mxu0 %v1401
    %1987 = vmatpush.msra.mxu0 %v1398
    %1988 = vmatpush.msra.mxu0 %v1395
    %1989 = vmatpush.msra.mxu0 %v1392
    %1990 = vmatpush.msra.mxu0 %v1389
    %1991 = vmatpush.msra.mxu0 %v1386
    %1992 = vmatpush.msra.mxu0 %v1383
    %1993 = vmatpush.msra.mxu0 %v1380
    %1994 = vmatpush.msra.mxu0 %v1377
    %1995 = vmatpush.msra.mxu0 %v1374
    %1996 = vmatpush.msra.mxu0 %v1371
    %1997 = vmatpush.msra.mxu0 %v1368
    %1998 = vmatpush.msra.mxu0 %v1365
    %1999 = vmatmul.f32.gmra.mxu0 %v1937
    %v2000 = vpop.f32.mrf.mxu0
    %v2001 = vadd.f32 0.0, %v2000
    %2002 = vdwg.mxu0
    %v2003 = vadd.f32 %v1940, %v1961
    %v2004 = vxor.u32 %v2003, 2147483648
    %v2005 = vmul.f32 %v2004, 1.442695
    %v2006 = vpow.pop %v2005
    %v2007 = vadd.f32 %v2006, 1.0
    %v2008 = vrcp.pop %v2007
    %v2009 = vmul.f32 %v2007, %v2008
    %v2010 = vsub.f32 1.0, %v2009
    %v2011 = vmul.f32 %v2008, %v2010
    %v2012 = vadd.f32 %v2008, %v2011
    %vm2013 = vweird.f32 %v2007
    %vm2014 = vweird.f32 %v2008
    %vm2015 = vmor %vm2013, %vm2014
    %v2016 = vsel %vm2015, %v2008, %v2012
    %v2017 = vand.u32 2147483647, %v2007
    %vm2018 = vcmp.eq.f32.partialorder %v2017, 8.507059e+37
    %v2019 = vand.u32 %v2007, 2147483648
    %v2020 = vor.u32 1.1754944e-38, %v2019
    %v2021 = vsel %vm2018, %v2020, %v2016
    %v2022 = vmul.f32 1.0, %v2021
    %v2023 = vadd.f32 %v1941, %v1981
    %v2024 = vxor.u32 %v2023, 2147483648
    %v2025 = vmul.f32 %v2024, 1.442695
    %v2026 = vpow.pop %v2025
    %v2027 = vadd.f32 %v2026, 1.0
    %v2028 = vrcp.pop %v2027
    %v2029 = vmul.f32 %v2027, %v2028
    %v2030 = vsub.f32 1.0, %v2029
    %v2031 = vmul.f32 %v2028, %v2030
    %v2032 = vadd.f32 %v2028, %v2031
    %vm2033 = vweird.f32 %v2027
    %vm2034 = vweird.f32 %v2028
    %vm2035 = vmor %vm2033, %vm2034
    %v2036 = vsel %vm2035, %v2028, %v2032
    %v2037 = vand.u32 2147483647, %v2027
    %vm2038 = vcmp.eq.f32.partialorder %v2037, 8.507059e+37
    %v2039 = vand.u32 %v2027, 2147483648
    %v2040 = vor.u32 1.1754944e-38, %v2039
    %v2041 = vsel %vm2038, %v2040, %v2036
    %v2042 = vmul.f32 1.0, %v2041
    %v2043 = vadd.f32 %v2001, %v1681
    %v2044 = vmul.f32 %v2022, %v2043
    %v2045 = vadd.f32 %v1942, %v2044
    %v2046 = vtanh.pop %v2045
    %v2047 = vsub.f32 %v1937, %v2046
    %v2048 = vmul.f32 %v2042, %v2047
    %v2049 = vadd.f32 %v2046, %v2048
    %v2050 = vld [vmem:[%s814] sm:$0xff]
    %vm2051 = vcmp.ne.f32.partialorder %v2050, 0.0
    %v2052 = vsel %vm2051, 1, 0
    %2053 = vset.pattern.permute.xlu0 0
    %2054 = vperm.xlu0 %2053, %v2052
    %v2055 = vpop.permute.xlu0 %2054
    %vm2056 = vcmp.eq.s32.totalorder %v2055, 1
    %v2057 = vsel %vm2056, %v2049, %v1937
    %v2058 = vsel %vm2056, %v2049, -1.0
    %2059 = vst [vmem:[%s823] sm:$0xff] %v2058
    %v2060 = vld [vmem:[%s825] sm:$0xff]
    %v2061 = vld [vmem:[%s825 + $0x8] sm:$0xff]
    %v2062 = vld [vmem:[%s825 + $0x10] sm:$0xff]
    %2063 = vmatpush.msra.mxu0 %v1408
    %2064 = vmatpush.msra.mxu0 %v1405
    %2065 = vmatpush.msra.mxu0 %v1402
    %2066 = vmatpush.msra.mxu0 %v1399
    %2067 = vmatpush.msra.mxu0 %v1396
    %2068 = vmatpush.msra.mxu0 %v1393
    %2069 = vmatpush.msra.mxu0 %v1390
    %2070 = vmatpush.msra.mxu0 %v1387
    %2071 = vmatpush.msra.mxu0 %v1384
    %2072 = vmatpush.msra.mxu0 %v1381
    %2073 = vmatpush.msra.mxu0 %v1378
    %2074 = vmatpush.msra.mxu0 %v1375
    %2075 = vmatpush.msra.mxu0 %v1372
    %2076 = vmatpush.msra.mxu0 %v1369
    %2077 = vmatpush.msra.mxu0 %v1366
    %2078 = vmatpush.msra.mxu0 %v1363
    %2079 = vmatmul.f32.gmra.mxu0 %v2057
    %v2080 = vpop.f32.mrf.mxu0
    %v2081 = vadd.f32 0.0, %v2080
    %2082 = vdwg.mxu0
    %2083 = vmatpush.msra.mxu0 %v1409
    %2084 = vmatpush.msra.mxu0 %v1406
    %2085 = vmatpush.msra.mxu0 %v1403
    %2086 = vmatpush.msra.mxu0 %v1400
    %2087 = vmatpush.msra.mxu0 %v1397
    %2088 = vmatpush.msra.mxu0 %v1394
    %2089 = vmatpush.msra.mxu0 %v1391
    %2090 = vmatpush.msra.mxu0 %v1388
    %2091 = vmatpush.msra.mxu0 %v1385
    %2092 = vmatpush.msra.mxu0 %v1382
    %2093 = vmatpush.msra.mxu0 %v1379
    %2094 = vmatpush.msra.mxu0 %v1376
    %2095 = vmatpush.msra.mxu0 %v1373
    %2096 = vmatpush.msra.mxu0 %v1370
    %2097 = vmatpush.msra.mxu0 %v1367
    %2098 = vmatpush.msra.mxu0 %v1364
    %2099 = vmatmul.f32.gmra.mxu0 %v2057
    %v2100 = vpop.f32.mrf.mxu0
    %v2101 = vadd.f32 0.0, %v2100
    %2102 = vdwg.mxu0
    %2103 = vmatpush.msra.mxu0 %v1410
    %2104 = vmatpush.msra.mxu0 %v1407
    %2105 = vmatpush.msra.mxu0 %v1404
    %2106 = vmatpush.msra.mxu0 %v1401
    %2107 = vmatpush.msra.mxu0 %v1398
    %2108 = vmatpush.msra.mxu0 %v1395
    %2109 = vmatpush.msra.mxu0 %v1392
    %2110 = vmatpush.msra.mxu0 %v1389
    %2111 = vmatpush.msra.mxu0 %v1386
    %2112 = vmatpush.msra.mxu0 %v1383
    %2113 = vmatpush.msra.mxu0 %v1380
    %2114 = vmatpush.msra.mxu0 %v1377
    %2115 = vmatpush.msra.mxu0 %v1374
    %2116 = vmatpush.msra.mxu0 %v1371
    %2117 = vmatpush.msra.mxu0 %v1368
    %2118 = vmatpush.msra.mxu0 %v1365
    %2119 = vmatmul.f32.gmra.mxu0 %v2057
    %v2120 = vpop.f32.mrf.mxu0
    %v2121 = vadd.f32 0.0, %v2120
    %2122 = vdwg.mxu0
    %v2123 = vadd.f32 %v2060, %v2081
    %v2124 = vxor.u32 %v2123, 2147483648
    %v2125 = vmul.f32 %v2124, 1.442695
    %v2126 = vpow.pop %v2125
    %v2127 = vadd.f32 %v2126, 1.0
    %v2128 = vrcp.pop %v2127
    %v2129 = vmul.f32 %v2127, %v2128
    %v2130 = vsub.f32 1.0, %v2129
    %v2131 = vmul.f32 %v2128, %v2130
    %v2132 = vadd.f32 %v2128, %v2131
    %vm2133 = vweird.f32 %v2127
    %vm2134 = vweird.f32 %v2128
    %vm2135 = vmor %vm2133, %vm2134
    %v2136 = vsel %vm2135, %v2128, %v2132
    %v2137 = vand.u32 2147483647, %v2127
    %vm2138 = vcmp.eq.f32.partialorder %v2137, 8.507059e+37
    %v2139 = vand.u32 %v2127, 2147483648
    %v2140 = vor.u32 1.1754944e-38, %v2139
    %v2141 = vsel %vm2138, %v2140, %v2136
    %v2142 = vmul.f32 1.0, %v2141
    %v2143 = vadd.f32 %v2061, %v2101
    %v2144 = vxor.u32 %v2143, 2147483648
    %v2145 = vmul.f32 %v2144, 1.442695
    %v2146 = vpow.pop %v2145
    %v2147 = vadd.f32 %v2146, 1.0
    %v2148 = vrcp.pop %v2147
    %v2149 = vmul.f32 %v2147, %v2148
    %v2150 = vsub.f32 1.0, %v2149
    %v2151 = vmul.f32 %v2148, %v2150
    %v2152 = vadd.f32 %v2148, %v2151
    %vm2153 = vweird.f32 %v2147
    %vm2154 = vweird.f32 %v2148
    %vm2155 = vmor %vm2153, %vm2154
    %v2156 = vsel %vm2155, %v2148, %v2152
    %v2157 = vand.u32 2147483647, %v2147
    %vm2158 = vcmp.eq.f32.partialorder %v2157, 8.507059e+37
    %v2159 = vand.u32 %v2147, 2147483648
    %v2160 = vor.u32 1.1754944e-38, %v2159
    %v2161 = vsel %vm2158, %v2160, %v2156
    %v2162 = vmul.f32 1.0, %v2161
    %v2163 = vadd.f32 %v2121, %v1681
    %v2164 = vmul.f32 %v2142, %v2163
    %v2165 = vadd.f32 %v2062, %v2164
    %v2166 = vtanh.pop %v2165
    %v2167 = vsub.f32 %v2057, %v2166
    %v2168 = vmul.f32 %v2162, %v2167
    %v2169 = vadd.f32 %v2166, %v2168
    %v2170 = vld [vmem:[%s936] sm:$0xff]
    %vm2171 = vcmp.ne.f32.partialorder %v2170, 0.0
    %v2172 = vsel %vm2171, 1, 0
    %2173 = vset.pattern.permute.xlu0 0
    %2174 = vperm.xlu0 %2173, %v2172
    %v2175 = vpop.permute.xlu0 %2174
    %vm2176 = vcmp.eq.s32.totalorder %v2175, 1
    %v2177 = vsel %vm2176, %v2169, %v2057
    %v2178 = vsel %vm2176, %v2169, -1.0
    %2179 = vst [vmem:[%s945] sm:$0xff] %v2178
    %v2180 = vld [vmem:[%s947] sm:$0xff]
    %v2181 = vld [vmem:[%s947 + $0x8] sm:$0xff]
    %v2182 = vld [vmem:[%s947 + $0x10] sm:$0xff]
    %2183 = vmatpush.msra.mxu0 %v1408
    %2184 = vmatpush.msra.mxu0 %v1405
    %2185 = vmatpush.msra.mxu0 %v1402
    %2186 = vmatpush.msra.mxu0 %v1399
    %2187 = vmatpush.msra.mxu0 %v1396
    %2188 = vmatpush.msra.mxu0 %v1393
    %2189 = vmatpush.msra.mxu0 %v1390
    %2190 = vmatpush.msra.mxu0 %v1387
    %2191 = vmatpush.msra.mxu0 %v1384
    %2192 = vmatpush.msra.mxu0 %v1381
    %2193 = vmatpush.msra.mxu0 %v1378
    %2194 = vmatpush.msra.mxu0 %v1375
    %2195 = vmatpush.msra.mxu0 %v1372
    %2196 = vmatpush.msra.mxu0 %v1369
    %2197 = vmatpush.msra.mxu0 %v1366
    %2198 = vmatpush.msra.mxu0 %v1363
    %2199 = vmatmul.f32.gmra.mxu0 %v2177
    %v2200 = vpop.f32.mrf.mxu0
    %v2201 = vadd.f32 0.0, %v2200
    %2202 = vdwg.mxu0
    %2203 = vmatpush.msra.mxu0 %v1409
    %2204 = vmatpush.msra.mxu0 %v1406
    %2205 = vmatpush.msra.mxu0 %v1403
    %2206 = vmatpush.msra.mxu0 %v1400
    %2207 = vmatpush.msra.mxu0 %v1397
    %2208 = vmatpush.msra.mxu0 %v1394
    %2209 = vmatpush.msra.mxu0 %v1391
    %2210 = vmatpush.msra.mxu0 %v1388
    %2211 = vmatpush.msra.mxu0 %v1385
    %2212 = vmatpush.msra.mxu0 %v1382
    %2213 = vmatpush.msra.mxu0 %v1379
    %2214 = vmatpush.msra.mxu0 %v1376
    %2215 = vmatpush.msra.mxu0 %v1373
    %2216 = vmatpush.msra.mxu0 %v1370
    %2217 = vmatpush.msra.mxu0 %v1367
    %2218 = vmatpush.msra.mxu0 %v1364
    %2219 = vmatmul.f32.gmra.mxu0 %v2177
    %v2220 = vpop.f32.mrf.mxu0
    %v2221 = vadd.f32 0.0, %v2220
    %2222 = vdwg.mxu0
    %2223 = vmatpush.msra.mxu0 %v1410
    %2224 = vmatpush.msra.mxu0 %v1407
    %2225 = vmatpush.msra.mxu0 %v1404
    %2226 = vmatpush.msra.mxu0 %v1401
    %2227 = vmatpush.msra.mxu0 %v1398
    %2228 = vmatpush.msra.mxu0 %v1395
    %2229 = vmatpush.msra.mxu0 %v1392
    %2230 = vmatpush.msra.mxu0 %v1389
    %2231 = vmatpush.msra.mxu0 %v1386
    %2232 = vmatpush.msra.mxu0 %v1383
    %2233 = vmatpush.msra.mxu0 %v1380
    %2234 = vmatpush.msra.mxu0 %v1377
    %2235 = vmatpush.msra.mxu0 %v1374
    %2236 = vmatpush.msra.mxu0 %v1371
    %2237 = vmatpush.msra.mxu0 %v1368
    %2238 = vmatpush.msra.mxu0 %v1365
    %2239 = vmatmul.f32.gmra.mxu0 %v2177
    %v2240 = vpop.f32.mrf.mxu0
    %v2241 = vadd.f32 0.0, %v2240
    %2242 = vdwg.mxu0
    %v2243 = vadd.f32 %v2180, %v2201
    %v2244 = vxor.u32 %v2243, 2147483648
    %v2245 = vmul.f32 %v2244, 1.442695
    %v2246 = vpow.pop %v2245
    %v2247 = vadd.f32 %v2246, 1.0
    %v2248 = vrcp.pop %v2247
    %v2249 = vmul.f32 %v2247, %v2248
    %v2250 = vsub.f32 1.0, %v2249
    %v2251 = vmul.f32 %v2248, %v2250
    %v2252 = vadd.f32 %v2248, %v2251
    %vm2253 = vweird.f32 %v2247
    %vm2254 = vweird.f32 %v2248
    %vm2255 = vmor %vm2253, %vm2254
    %v2256 = vsel %vm2255, %v2248, %v2252
    %v2257 = vand.u32 2147483647, %v2247
    %vm2258 = vcmp.eq.f32.partialorder %v2257, 8.507059e+37
    %v2259 = vand.u32 %v2247, 2147483648
    %v2260 = vor.u32 1.1754944e-38, %v2259
    %v2261 = vsel %vm2258, %v2260, %v2256
    %v2262 = vmul.f32 1.0, %v2261
    %v2263 = vadd.f32 %v2181, %v2221
    %v2264 = vxor.u32 %v2263, 2147483648
    %v2265 = vmul.f32 %v2264, 1.442695
    %v2266 = vpow.pop %v2265
    %v2267 = vadd.f32 %v2266, 1.0
    %v2268 = vrcp.pop %v2267
    %v2269 = vmul.f32 %v2267, %v2268
    %v2270 = vsub.f32 1.0, %v2269
    %v2271 = vmul.f32 %v2268, %v2270
    %v2272 = vadd.f32 %v2268, %v2271
    %vm2273 = vweird.f32 %v2267
    %vm2274 = vweird.f32 %v2268
    %vm2275 = vmor %vm2273, %vm2274
    %v2276 = vsel %vm2275, %v2268, %v2272
    %v2277 = vand.u32 2147483647, %v2267
    %vm2278 = vcmp.eq.f32.partialorder %v2277, 8.507059e+37
    %v2279 = vand.u32 %v2267, 2147483648
    %v2280 = vor.u32 1.1754944e-38, %v2279
    %v2281 = vsel %vm2278, %v2280, %v2276
    %v2282 = vmul.f32 1.0, %v2281
    %v2283 = vadd.f32 %v2241, %v1681
    %v2284 = vmul.f32 %v2262, %v2283
    %v2285 = vadd.f32 %v2182, %v2284
    %v2286 = vtanh.pop %v2285
    %v2287 = vsub.f32 %v2177, %v2286
    %v2288 = vmul.f32 %v2282, %v2287
    %v2289 = vadd.f32 %v2286, %v2288
    %v2290 = vld [vmem:[%s1058] sm:$0xff]
    %vm2291 = vcmp.ne.f32.partialorder %v2290, 0.0
    %v2292 = vsel %vm2291, 1, 0
    %2293 = vset.pattern.permute.xlu0 0
    %2294 = vperm.xlu0 %2293, %v2292
    %v2295 = vpop.permute.xlu0 %2294
    %vm2296 = vcmp.eq.s32.totalorder %v2295, 1
    %v2297 = vsel %vm2296, %v2289, %v2177
    %v2298 = vsel %vm2296, %v2289, -1.0
    %2299 = vst [vmem:[%s1067] sm:$0xff] %v2298
    %v2300 = vld [vmem:[%s1069] sm:$0xff]
    %v2301 = vld [vmem:[%s1069 + $0x8] sm:$0xff]
    %v2302 = vld [vmem:[%s1069 + $0x10] sm:$0xff]
    %2303 = vmatpush.msra.mxu0 %v1408
    %2304 = vmatpush.msra.mxu0 %v1405
    %2305 = vmatpush.msra.mxu0 %v1402
    %2306 = vmatpush.msra.mxu0 %v1399
    %2307 = vmatpush.msra.mxu0 %v1396
    %2308 = vmatpush.msra.mxu0 %v1393
    %2309 = vmatpush.msra.mxu0 %v1390
    %2310 = vmatpush.msra.mxu0 %v1387
    %2311 = vmatpush.msra.mxu0 %v1384
    %2312 = vmatpush.msra.mxu0 %v1381
    %2313 = vmatpush.msra.mxu0 %v1378
    %2314 = vmatpush.msra.mxu0 %v1375
    %2315 = vmatpush.msra.mxu0 %v1372
    %2316 = vmatpush.msra.mxu0 %v1369
    %2317 = vmatpush.msra.mxu0 %v1366
    %2318 = vmatpush.msra.mxu0 %v1363
    %2319 = vmatmul.f32.gmra.mxu0 %v2297
    %v2320 = vpop.f32.mrf.mxu0
    %v2321 = vadd.f32 0.0, %v2320
    %2322 = vdwg.mxu0
    %2323 = vmatpush.msra.mxu0 %v1409
    %2324 = vmatpush.msra.mxu0 %v1406
    %2325 = vmatpush.msra.mxu0 %v1403
    %2326 = vmatpush.msra.mxu0 %v1400
    %2327 = vmatpush.msra.mxu0 %v1397
    %2328 = vmatpush.msra.mxu0 %v1394
    %2329 = vmatpush.msra.mxu0 %v1391
    %2330 = vmatpush.msra.mxu0 %v1388
    %2331 = vmatpush.msra.mxu0 %v1385
    %2332 = vmatpush.msra.mxu0 %v1382
    %2333 = vmatpush.msra.mxu0 %v1379
    %2334 = vmatpush.msra.mxu0 %v1376
    %2335 = vmatpush.msra.mxu0 %v1373
    %2336 = vmatpush.msra.mxu0 %v1370
    %2337 = vmatpush.msra.mxu0 %v1367
    %2338 = vmatpush.msra.mxu0 %v1364
    %2339 = vmatmul.f32.gmra.mxu0 %v2297
    %v2340 = vpop.f32.mrf.mxu0
    %v2341 = vadd.f32 0.0, %v2340
    %2342 = vdwg.mxu0
    %2343 = vmatpush.msra.mxu0 %v1410
    %2344 = vmatpush.msra.mxu0 %v1407
    %2345 = vmatpush.msra.mxu0 %v1404
    %2346 = vmatpush.msra.mxu0 %v1401
    %2347 = vmatpush.msra.mxu0 %v1398
    %2348 = vmatpush.msra.mxu0 %v1395
    %2349 = vmatpush.msra.mxu0 %v1392
    %2350 = vmatpush.msra.mxu0 %v1389
    %2351 = vmatpush.msra.mxu0 %v1386
    %2352 = vmatpush.msra.mxu0 %v1383
    %2353 = vmatpush.msra.mxu0 %v1380
    %2354 = vmatpush.msra.mxu0 %v1377
    %2355 = vmatpush.msra.mxu0 %v1374
    %2356 = vmatpush.msra.mxu0 %v1371
    %2357 = vmatpush.msra.mxu0 %v1368
    %2358 = vmatpush.msra.mxu0 %v1365
    %2359 = vmatmul.f32.gmra.mxu0 %v2297
    %v2360 = vpop.f32.mrf.mxu0
    %v2361 = vadd.f32 0.0, %v2360
    %2362 = vdwg.mxu0
    %v2363 = vadd.f32 %v2300, %v2321
    %v2364 = vxor.u32 %v2363, 2147483648
    %v2365 = vmul.f32 %v2364, 1.442695
    %v2366 = vpow.pop %v2365
    %v2367 = vadd.f32 %v2366, 1.0
    %v2368 = vrcp.pop %v2367
    %v2369 = vmul.f32 %v2367, %v2368
    %v2370 = vsub.f32 1.0, %v2369
    %v2371 = vmul.f32 %v2368, %v2370
    %v2372 = vadd.f32 %v2368, %v2371
    %vm2373 = vweird.f32 %v2367
    %vm2374 = vweird.f32 %v2368
    %vm2375 = vmor %vm2373, %vm2374
    %v2376 = vsel %vm2375, %v2368, %v2372
    %v2377 = vand.u32 2147483647, %v2367
    %vm2378 = vcmp.eq.f32.partialorder %v2377, 8.507059e+37
    %v2379 = vand.u32 %v2367, 2147483648
    %v2380 = vor.u32 1.1754944e-38, %v2379
    %v2381 = vsel %vm2378, %v2380, %v2376
    %v2382 = vmul.f32 1.0, %v2381
    %v2383 = vadd.f32 %v2301, %v2341
    %v2384 = vxor.u32 %v2383, 2147483648
    %v2385 = vmul.f32 %v2384, 1.442695
    %v2386 = vpow.pop %v2385
    %v2387 = vadd.f32 %v2386, 1.0
    %v2388 = vrcp.pop %v2387
    %v2389 = vmul.f32 %v2387, %v2388
    %v2390 = vsub.f32 1.0, %v2389
    %v2391 = vmul.f32 %v2388, %v2390
    %v2392 = vadd.f32 %v2388, %v2391
    %vm2393 = vweird.f32 %v2387
    %vm2394 = vweird.f32 %v2388
    %vm2395 = vmor %vm2393, %vm2394
    %v2396 = vsel %vm2395, %v2388, %v2392
    %v2397 = vand.u32 2147483647, %v2387
    %vm2398 = vcmp.eq.f32.partialorder %v2397, 8.507059e+37
    %v2399 = vand.u32 %v2387, 2147483648
    %v2400 = vor.u32 1.1754944e-38, %v2399
    %v2401 = vsel %vm2398, %v2400, %v2396
    %v2402 = vmul.f32 1.0, %v2401
    %v2403 = vadd.f32 %v2361, %v1681
    %v2404 = vmul.f32 %v2382, %v2403
    %v2405 = vadd.f32 %v2302, %v2404
    %v2406 = vtanh.pop %v2405
    %v2407 = vsub.f32 %v2297, %v2406
    %v2408 = vmul.f32 %v2402, %v2407
    %v2409 = vadd.f32 %v2406, %v2408
    %v2410 = vld [vmem:[%s1180] sm:$0xff]
    %vm2411 = vcmp.ne.f32.partialorder %v2410, 0.0
    %v2412 = vsel %vm2411, 1, 0
    %2413 = vset.pattern.permute.xlu0 0
    %2414 = vperm.xlu0 %2413, %v2412
    %v2415 = vpop.permute.xlu0 %2414
    %vm2416 = vcmp.eq.s32.totalorder %v2415, 1
    %v2417 = vsel %vm2416, %v2409, %v2297
    %v2418 = vsel %vm2416, %v2409, -1.0
    %2419 = vst [vmem:[%s1189] sm:$0xff] %v2418
    %v2420 = vld [vmem:[%s1191] sm:$0xff]
    %v2421 = vld [vmem:[%s1191 + $0x8] sm:$0xff]
    %v2422 = vld [vmem:[%s1191 + $0x10] sm:$0xff]
    %2423 = vmatpush.msra.mxu0 %v1408
    %2424 = vmatpush.msra.mxu0 %v1405
    %2425 = vmatpush.msra.mxu0 %v1402
    %2426 = vmatpush.msra.mxu0 %v1399
    %2427 = vmatpush.msra.mxu0 %v1396
    %2428 = vmatpush.msra.mxu0 %v1393
    %2429 = vmatpush.msra.mxu0 %v1390
    %2430 = vmatpush.msra.mxu0 %v1387
    %2431 = vmatpush.msra.mxu0 %v1384
    %2432 = vmatpush.msra.mxu0 %v1381
    %2433 = vmatpush.msra.mxu0 %v1378
    %2434 = vmatpush.msra.mxu0 %v1375
    %2435 = vmatpush.msra.mxu0 %v1372
    %2436 = vmatpush.msra.mxu0 %v1369
    %2437 = vmatpush.msra.mxu0 %v1366
    %2438 = vmatpush.msra.mxu0 %v1363
    %2439 = vmatmul.f32.gmra.mxu0 %v2417
    %v2440 = vpop.f32.mrf.mxu0
    %v2441 = vadd.f32 0.0, %v2440
    %2442 = vdwg.mxu0
    %2443 = vmatpush.msra.mxu0 %v1409
    %2444 = vmatpush.msra.mxu0 %v1406
    %2445 = vmatpush.msra.mxu0 %v1403
    %2446 = vmatpush.msra.mxu0 %v1400
    %2447 = vmatpush.msra.mxu0 %v1397
    %2448 = vmatpush.msra.mxu0 %v1394
    %2449 = vmatpush.msra.mxu0 %v1391
    %2450 = vmatpush.msra.mxu0 %v1388
    %2451 = vmatpush.msra.mxu0 %v1385
    %2452 = vmatpush.msra.mxu0 %v1382
    %2453 = vmatpush.msra.mxu0 %v1379
    %2454 = vmatpush.msra.mxu0 %v1376
    %2455 = vmatpush.msra.mxu0 %v1373
    %2456 = vmatpush.msra.mxu0 %v1370
    %2457 = vmatpush.msra.mxu0 %v1367
    %2458 = vmatpush.msra.mxu0 %v1364
    %2459 = vmatmul.f32.gmra.mxu0 %v2417
    %v2460 = vpop.f32.mrf.mxu0
    %v2461 = vadd.f32 0.0, %v2460
    %2462 = vdwg.mxu0
    %2463 = vmatpush.msra.mxu0 %v1410
    %2464 = vmatpush.msra.mxu0 %v1407
    %2465 = vmatpush.msra.mxu0 %v1404
    %2466 = vmatpush.msra.mxu0 %v1401
    %2467 = vmatpush.msra.mxu0 %v1398
    %2468 = vmatpush.msra.mxu0 %v1395
    %2469 = vmatpush.msra.mxu0 %v1392
    %2470 = vmatpush.msra.mxu0 %v1389
    %2471 = vmatpush.msra.mxu0 %v1386
    %2472 = vmatpush.msra.mxu0 %v1383
    %2473 = vmatpush.msra.mxu0 %v1380
    %2474 = vmatpush.msra.mxu0 %v1377
    %2475 = vmatpush.msra.mxu0 %v1374
    %2476 = vmatpush.msra.mxu0 %v1371
    %2477 = vmatpush.msra.mxu0 %v1368
    %2478 = vmatpush.msra.mxu0 %v1365
    %2479 = vmatmul.f32.gmra.mxu0 %v2417
    %v2480 = vpop.f32.mrf.mxu0
    %v2481 = vadd.f32 0.0, %v2480
    %2482 = vdwg.mxu0
    %v2483 = vadd.f32 %v2420, %v2441
    %v2484 = vxor.u32 %v2483, 2147483648
    %v2485 = vmul.f32 %v2484, 1.442695
    %v2486 = vpow.pop %v2485
    %v2487 = vadd.f32 %v2486, 1.0
    %v2488 = vrcp.pop %v2487
    %v2489 = vmul.f32 %v2487, %v2488
    %v2490 = vsub.f32 1.0, %v2489
    %v2491 = vmul.f32 %v2488, %v2490
    %v2492 = vadd.f32 %v2488, %v2491
    %vm2493 = vweird.f32 %v2487
    %vm2494 = vweird.f32 %v2488
    %vm2495 = vmor %vm2493, %vm2494
    %v2496 = vsel %vm2495, %v2488, %v2492
    %v2497 = vand.u32 2147483647, %v2487
    %vm2498 = vcmp.eq.f32.partialorder %v2497, 8.507059e+37
    %v2499 = vand.u32 %v2487, 2147483648
    %v2500 = vor.u32 1.1754944e-38, %v2499
    %v2501 = vsel %vm2498, %v2500, %v2496
    %v2502 = vmul.f32 1.0, %v2501
    %v2503 = vadd.f32 %v2421, %v2461
    %v2504 = vxor.u32 %v2503, 2147483648
    %v2505 = vmul.f32 %v2504, 1.442695
    %v2506 = vpow.pop %v2505
    %v2507 = vadd.f32 %v2506, 1.0
    %v2508 = vrcp.pop %v2507
    %v2509 = vmul.f32 %v2507, %v2508
    %v2510 = vsub.f32 1.0, %v2509
    %v2511 = vmul.f32 %v2508, %v2510
    %v2512 = vadd.f32 %v2508, %v2511
    %vm2513 = vweird.f32 %v2507
    %vm2514 = vweird.f32 %v2508
    %vm2515 = vmor %vm2513, %vm2514
    %v2516 = vsel %vm2515, %v2508, %v2512
    %v2517 = vand.u32 2147483647, %v2507
    %vm2518 = vcmp.eq.f32.partialorder %v2517, 8.507059e+37
    %v2519 = vand.u32 %v2507, 2147483648
    %v2520 = vor.u32 1.1754944e-38, %v2519
    %v2521 = vsel %vm2518, %v2520, %v2516
    %v2522 = vmul.f32 1.0, %v2521
    %v2523 = vadd.f32 %v2481, %v1681
    %v2524 = vmul.f32 %v2502, %v2523
    %v2525 = vadd.f32 %v2422, %v2524
    %v2526 = vtanh.pop %v2525
    %v2527 = vsub.f32 %v2417, %v2526
    %v2528 = vmul.f32 %v2522, %v2527
    %v2529 = vadd.f32 %v2526, %v2528
    %v2530 = vld [vmem:[%s1302] sm:$0xff]
    %vm2531 = vcmp.ne.f32.partialorder %v2530, 0.0
    %v2532 = vsel %vm2531, 1, 0
    %2533 = vset.pattern.permute.xlu0 0
    %2534 = vperm.xlu0 %2533, %v2532
    %v2535 = vpop.permute.xlu0 %2534
    %vm2536 = vcmp.eq.s32.totalorder %v2535, 1
    %v2537 = vsel %vm2536, %v2529, -1.0
    %2538 = vst [vmem:[%s1311] sm:$0xff] %v2537
    %v2539 = vld [vmem:[#allocation9] sm:$0xff]
    %v2540 = vld [vmem:[#allocation9 + $0x8] sm:$0xff]
    %v2541 = vld [vmem:[#allocation9 + $0x10] sm:$0xff]
    %v2542 = vld [vmem:[#allocation9 + $0x18] sm:$0xff]
    %v2543 = vld [vmem:[#allocation9 + $0x20] sm:$0xff]
    %v2544 = vld [vmem:[#allocation9 + $0x28] sm:$0xff]
    %v2545 = vld [vmem:[#allocation9 + $0x30] sm:$0xff]
    %v2546 = vld [vmem:[#allocation9 + $0x38] sm:$0xff]
    %v2547 = vld [vmem:[#allocation8] sm:$0xff]
    %v2548 = vld [vmem:[#allocation8 + $0x8] sm:$0xff]
    %v2549 = vld [vmem:[#allocation8 + $0x10] sm:$0xff]
    %v2550 = vld [vmem:[#allocation8 + $0x18] sm:$0xff]
    %v2551 = vld [vmem:[#allocation8 + $0x20] sm:$0xff]
    %v2552 = vld [vmem:[#allocation8 + $0x28] sm:$0xff]
    %v2553 = vld [vmem:[#allocation8 + $0x30] sm:$0xff]
    %v2554 = vld [vmem:[#allocation8 + $0x38] sm:$0xff]
    %v2555 = vld [vmem:[#allocation8 + $0x40] sm:$0xff]
    %v2556 = vld [vmem:[#allocation8 + $0x48] sm:$0xff]
    %v2557 = vld [vmem:[#allocation8 + $0x50] sm:$0xff]
    %v2558 = vld [vmem:[#allocation8 + $0x58] sm:$0xff]
    %v2559 = vld [vmem:[#allocation8 + $0x60] sm:$0xff]
    %v2560 = vld [vmem:[#allocation8 + $0x68] sm:$0xff]
    %v2561 = vld [vmem:[#allocation8 + $0x70] sm:$0xff]
    %v2562 = vld [vmem:[#allocation8 + $0x78] sm:$0xff]
    %v2563 = vld [vmem:[%s7] sm:$0x1]
    %v2565 = vperm.slane %v2563, 0
    %2567 = vmatpush.msra.mxu0 %v2562
    %2568 = vmatpush.msra.mxu0 %v2561
    %2569 = vmatpush.msra.mxu0 %v2560
    %2570 = vmatpush.msra.mxu0 %v2559
    %2571 = vmatpush.msra.mxu0 %v2558
    %2572 = vmatpush.msra.mxu0 %v2557
    %2573 = vmatpush.msra.mxu0 %v2556
    %2574 = vmatpush.msra.mxu0 %v2555
    %2575 = vmatpush.msra.mxu0 %v2554
    %2576 = vmatpush.msra.mxu0 %v2553
    %2577 = vmatpush.msra.mxu0 %v2552
    %2578 = vmatpush.msra.mxu0 %v2551
    %2579 = vmatpush.msra.mxu0 %v2550
    %2580 = vmatpush.msra.mxu0 %v2549
    %2581 = vmatpush.msra.mxu0 %v2548
    %2582 = vmatpush.msra.mxu0 %v2547
    %2583 = vmatmul.f32.gmra.mxu0 %v2539
    %v2584 = vpop.f32.mrf.mxu0
    %v2585 = vadd.f32 %v2565, %v2584
    %2586 = vmatmul.f32.gmra.mxu0 %v2540
    %v2587 = vpop.f32.mrf.mxu0
    %v2588 = vadd.f32 %v2565, %v2587
    %2589 = vmatmul.f32.gmra.mxu0 %v2541
    %v2590 = vpop.f32.mrf.mxu0
    %v2591 = vadd.f32 %v2565, %v2590
    %2592 = vmatmul.f32.gmra.mxu0 %v2542
    %v2593 = vpop.f32.mrf.mxu0
    %v2594 = vadd.f32 %v2565, %v2593
    %2595 = vmatmul.f32.gmra.mxu0 %v2543
    %v2596 = vpop.f32.mrf.mxu0
    %v2597 = vadd.f32 %v2565, %v2596
    %2598 = vmatmul.f32.gmra.mxu0 %v2544
    %v2599 = vpop.f32.mrf.mxu0
    %v2600 = vadd.f32 %v2565, %v2599
    %2601 = vmatmul.f32.gmra.mxu0 %v2545
    %v2602 = vpop.f32.mrf.mxu0
    %v2603 = vadd.f32 %v2565, %v2602
    %2604 = vmatmul.f32.gmra.mxu0 %v2546
    %v2605 = vpop.f32.mrf.mxu0
    %v2606 = vadd.f32 %v2565, %v2605
    %2607 = vdwg.mxu0
    %v2608 = vxor.u32 %v2585, 2147483648
    %v2609 = vxor.u32 %v2588, 2147483648
    %v2610 = vxor.u32 %v2591, 2147483648
    %v2611 = vxor.u32 %v2594, 2147483648
    %v2612 = vxor.u32 %v2597, 2147483648
    %v2613 = vxor.u32 %v2600, 2147483648
    %v2614 = vxor.u32 %v2603, 2147483648
    %v2615 = vxor.u32 %v2606, 2147483648
    %v2616 = vmul.f32 %v2608, 1.442695
    %v2617 = vpow.pop %v2616
    %v2618 = vmul.f32 %v2609, 1.442695
    %v2619 = vpow.pop %v2618
    %v2620 = vmul.f32 %v2610, 1.442695
    %v2621 = vpow.pop %v2620
    %v2622 = vmul.f32 %v2611, 1.442695
    %v2623 = vpow.pop %v2622
    %v2624 = vmul.f32 %v2612, 1.442695
    %v2625 = vpow.pop %v2624
    %v2626 = vmul.f32 %v2613, 1.442695
    %v2627 = vpow.pop %v2626
    %v2628 = vmul.f32 %v2614, 1.442695
    %v2629 = vpow.pop %v2628
    %v2630 = vmul.f32 %v2615, 1.442695
    %v2631 = vpow.pop %v2630
    %v2632 = vadd.f32 %v2617, 1.0
    %v2633 = vadd.f32 %v2619, 1.0
    %v2634 = vadd.f32 %v2621, 1.0
    %v2635 = vadd.f32 %v2623, 1.0
    %v2636 = vadd.f32 %v2625, 1.0
    %v2637 = vadd.f32 %v2627, 1.0
    %v2638 = vadd.f32 %v2629, 1.0
    %v2639 = vadd.f32 %v2631, 1.0
    %v2640 = vrcp.pop %v2632
    %v2641 = vmul.f32 %v2632, %v2640
    %v2642 = vsub.f32 1.0, %v2641
    %v2643 = vmul.f32 %v2640, %v2642
    %v2644 = vadd.f32 %v2640, %v2643
    %vm2645 = vweird.f32 %v2632
    %vm2646 = vweird.f32 %v2640
    %vm2647 = vmor %vm2645, %vm2646
    %v2648 = vsel %vm2647, %v2640, %v2644
    %v2649 = vand.u32 2147483647, %v2632
    %vm2650 = vcmp.eq.f32.partialorder %v2649, 8.507059e+37
    %v2651 = vand.u32 %v2632, 2147483648
    %v2652 = vor.u32 1.1754944e-38, %v2651
    %v2653 = vsel %vm2650, %v2652, %v2648
    %v2654 = vmul.f32 1.0, %v2653
    %v2655 = vrcp.pop %v2633
    %v2656 = vmul.f32 %v2633, %v2655
    %v2657 = vsub.f32 1.0, %v2656
    %v2658 = vmul.f32 %v2655, %v2657
    %v2659 = vadd.f32 %v2655, %v2658
    %vm2660 = vweird.f32 %v2633
    %vm2661 = vweird.f32 %v2655
    %vm2662 = vmor %vm2660, %vm2661
    %v2663 = vsel %vm2662, %v2655, %v2659
    %v2664 = vand.u32 2147483647, %v2633
    %vm2665 = vcmp.eq.f32.partialorder %v2664, 8.507059e+37
    %v2666 = vand.u32 %v2633, 2147483648
    %v2667 = vor.u32 1.1754944e-38, %v2666
    %v2668 = vsel %vm2665, %v2667, %v2663
    %v2669 = vmul.f32 1.0, %v2668
    %v2670 = vrcp.pop %v2634
    %v2671 = vmul.f32 %v2634, %v2670
    %v2672 = vsub.f32 1.0, %v2671
    %v2673 = vmul.f32 %v2670, %v2672
    %v2674 = vadd.f32 %v2670, %v2673
    %vm2675 = vweird.f32 %v2634
    %vm2676 = vweird.f32 %v2670
    %vm2677 = vmor %vm2675, %vm2676
    %v2678 = vsel %vm2677, %v2670, %v2674
    %v2679 = vand.u32 2147483647, %v2634
    %vm2680 = vcmp.eq.f32.partialorder %v2679, 8.507059e+37
    %v2681 = vand.u32 %v2634, 2147483648
    %v2682 = vor.u32 1.1754944e-38, %v2681
    %v2683 = vsel %vm2680, %v2682, %v2678
    %v2684 = vmul.f32 1.0, %v2683
    %v2685 = vrcp.pop %v2635
    %v2686 = vmul.f32 %v2635, %v2685
    %v2687 = vsub.f32 1.0, %v2686
    %v2688 = vmul.f32 %v2685, %v2687
    %v2689 = vadd.f32 %v2685, %v2688
    %vm2690 = vweird.f32 %v2635
    %vm2691 = vweird.f32 %v2685
    %vm2692 = vmor %vm2690, %vm2691
    %v2693 = vsel %vm2692, %v2685, %v2689
    %v2694 = vand.u32 2147483647, %v2635
    %vm2695 = vcmp.eq.f32.partialorder %v2694, 8.507059e+37
    %v2696 = vand.u32 %v2635, 2147483648
    %v2697 = vor.u32 1.1754944e-38, %v2696
    %v2698 = vsel %vm2695, %v2697, %v2693
    %v2699 = vmul.f32 1.0, %v2698
    %v2700 = vrcp.pop %v2636
    %v2701 = vmul.f32 %v2636, %v2700
    %v2702 = vsub.f32 1.0, %v2701
    %v2703 = vmul.f32 %v2700, %v2702
    %v2704 = vadd.f32 %v2700, %v2703
    %vm2705 = vweird.f32 %v2636
    %vm2706 = vweird.f32 %v2700
    %vm2707 = vmor %vm2705, %vm2706
    %v2708 = vsel %vm2707, %v2700, %v2704
    %v2709 = vand.u32 2147483647, %v2636
    %vm2710 = vcmp.eq.f32.partialorder %v2709, 8.507059e+37
    %v2711 = vand.u32 %v2636, 2147483648
    %v2712 = vor.u32 1.1754944e-38, %v2711
    %v2713 = vsel %vm2710, %v2712, %v2708
    %v2714 = vmul.f32 1.0, %v2713
    %v2715 = vrcp.pop %v2637
    %v2716 = vmul.f32 %v2637, %v2715
    %v2717 = vsub.f32 1.0, %v2716
    %v2718 = vmul.f32 %v2715, %v2717
    %v2719 = vadd.f32 %v2715, %v2718
    %vm2720 = vweird.f32 %v2637
    %vm2721 = vweird.f32 %v2715
    %vm2722 = vmor %vm2720, %vm2721
    %v2723 = vsel %vm2722, %v2715, %v2719
    %v2724 = vand.u32 2147483647, %v2637
    %vm2725 = vcmp.eq.f32.partialorder %v2724, 8.507059e+37
    %v2726 = vand.u32 %v2637, 2147483648
    %v2727 = vor.u32 1.1754944e-38, %v2726
    %v2728 = vsel %vm2725, %v2727, %v2723
    %v2729 = vmul.f32 1.0, %v2728
    %v2730 = vrcp.pop %v2638
    %v2731 = vmul.f32 %v2638, %v2730
    %v2732 = vsub.f32 1.0, %v2731
    %v2733 = vmul.f32 %v2730, %v2732
    %v2734 = vadd.f32 %v2730, %v2733
    %vm2735 = vweird.f32 %v2638
    %vm2736 = vweird.f32 %v2730
    %vm2737 = vmor %vm2735, %vm2736
    %v2738 = vsel %vm2737, %v2730, %v2734
    %v2739 = vand.u32 2147483647, %v2638
    %vm2740 = vcmp.eq.f32.partialorder %v2739, 8.507059e+37
    %v2741 = vand.u32 %v2638, 2147483648
    %v2742 = vor.u32 1.1754944e-38, %v2741
    %v2743 = vsel %vm2740, %v2742, %v2738
    %v2744 = vmul.f32 1.0, %v2743
    %v2745 = vrcp.pop %v2639
    %v2746 = vmul.f32 %v2639, %v2745
    %v2747 = vsub.f32 1.0, %v2746
    %v2748 = vmul.f32 %v2745, %v2747
    %v2749 = vadd.f32 %v2745, %v2748
    %vm2750 = vweird.f32 %v2639
    %vm2751 = vweird.f32 %v2745
    %vm2752 = vmor %vm2750, %vm2751
    %v2753 = vsel %vm2752, %v2745, %v2749
    %v2754 = vand.u32 2147483647, %v2639
    %vm2755 = vcmp.eq.f32.partialorder %v2754, 8.507059e+37
    %v2756 = vand.u32 %v2639, 2147483648
    %v2757 = vor.u32 1.1754944e-38, %v2756
    %v2758 = vsel %vm2755, %v2757, %v2753
    %v2759 = vmul.f32 1.0, %v2758
    %2760 = vst [vmem:[#allocation9] sm:$0xff] %v2654
    %2761 = vst [vmem:[#allocation9 + $0x8] sm:$0xff] %v2669
    %2762 = vst [vmem:[#allocation9 + $0x10] sm:$0xff] %v2684
    %2763 = vst [vmem:[#allocation9 + $0x18] sm:$0xff] %v2699
    %2764 = vst [vmem:[#allocation9 + $0x20] sm:$0xff] %v2714
    %2765 = vst [vmem:[#allocation9 + $0x28] sm:$0xff] %v2729
    %2766 = vst [vmem:[#allocation9 + $0x30] sm:$0xff] %v2744
    %2767 = vst [vmem:[#allocation9 + $0x38] sm:$0xff] %v2759
    // Predicated region
    $region46: #{tpu_custom_call.1} parent=1 // pred_check
      _
    $region47: #{tpu_custom_call.1} parent=1 // pred_check_branch
      %2769 = sbr.rel (0) target = $region49
    $region48: #{tpu_custom_call.1} parent=1 // pred_region
      %2771 = vsyncadd [#allocation5], 0
      %s2772 = sshll.u32 [#allocation9], 4
      %s2773 = int_to_ptr.vmem [resolvable:$true] %s2772
      %s2774 = sshll.u32 %s8, 4
      %s2775 = int_to_ptr.hbm [resolvable:$true] %s2774
      %2780 = dma.vmem_to_hbm [thread:$0]  %s2773, 1024, %s2775, [#allocation5], 128, 128, 8
    $region49: #{tpu_custom_call.1} parent=1 // pred_fallthru
      _
    // Predicated region
    $region50: #{tpu_custom_call.1} parent=1 // pred_check
      _
    $region51: #{tpu_custom_call.1} parent=1 // pred_check_branch
      %2782 = sbr.rel (0) target = $region53
    $region52: #{tpu_custom_call.1} parent=1 // pred_region
      %2784 = dma.done [#allocation5], 1024
    $region53: #{tpu_custom_call.1} parent=1 // pred_fallthru
      _
    %2785 = vsyncpa [#allocation4], 1
    %2786 = vsyncpa [#allocation7], 1
    %2787 = vsyncpa [#allocation5], 1

</llo_original>
